<compile_context>
chip_gen: v6e
topology: v6e:2x2x1
jax: 0.10.0
libtpu: 0.0.40
codegen_flags: <defaults>
</compile_context>

<pallas_src>
import jax
import jax.numpy as jnp
import numpy as np
from jax.experimental import pallas as pl
from jax.experimental.pallas import tpu as pltpu


_FEAT = 2048
_G_PAD = 256                    # grapheme output: cols [0, 168), padded slab of 256 lanes
_V_PAD = 128                    # vowel output:    cols [256, 267), padded slab of 128 lanes
_C_PAD = 128                    # consonant:       cols [384, 391), padded slab of 128 lanes
_NOUT = _G_PAD + _V_PAD + _C_PAD   # 512 packed output lanes
_V_OFF = _G_PAD
_C_OFF = _G_PAD + _V_PAD


def _round_up(x, m):
    return (x + m - 1) // m * m


def multihead_kernel(x_ref,       # (TB, HW)    f32  batch tile of flattened input
                     w_eff_ref,   # (1, 2048)   f32  folded conv->GAP->backbone scale
                     b_eff_ref,   # (1, 2048)   f32  folded bias
                     wh_ref,      # (2048, 512) bf16 packed heads [g(fused) | vowel | cons]
                     bh_ref,      # (1, 512)    f32  packed bias
                     out_ref):    # (TB, 512)   f32  packed output slab
    # conv(1x1) -> GAP -> stand-in backbone, folded to a rank-1 affine map of
    # the per-image spatial mean: single XLU reduction + broadcast FMA (VPU).
    m = jnp.mean(x_ref[...], axis=1, keepdims=True)                 # (TB, 1)
    feat = m * w_eff_ref[...] + b_eff_ref[...]                       # (TB, 2048) f32

    # Every head in one lane-dense MXU pass (bf16 in, f32 acc); single
    # unmasked 512-lane store.
    out_ref[...] = jnp.dot(feat.astype(jnp.bfloat16), wh_ref[...],
                           preferred_element_type=jnp.float32) + bh_ref[...]


def multihead_resnext_forward(x_nchw, p):
    B, C, H, W = x_nchw.shape
    assert C == 1, "conv_3ch expects a single input channel"
    HW = H * W
    x2d = x_nchw.reshape(B, HW).astype(jnp.float32)

    # --- fold conv(1x1) -> GAP -> stand-in backbone linear (exact, by linearity) ---
    w_eff = (p["conv_w"] @ p["bb_w"]).reshape(1, _FEAT)               # (1, 2048)
    b_eff = (p["conv_b"] @ p["bb_w"]).reshape(1, _FEAT) + p["bb_b"]   # (1, 2048)

    # --- fold grapheme1 -> grapheme2 (no activation between them -> exact, f32) ---
    g_w = p["g1_w"] @ p["g2_w"]                                       # (2048, 168)
    g_b = p["g1_b"] @ p["g2_w"] + p["g2_b"]                           # (1, 168)

    # --- pack all heads into one lane-dense (2048, 512) bf16 weight ---
    wh = jnp.zeros((_FEAT, _NOUT), jnp.float32)
    wh = wh.at[:, :168].set(g_w)
    wh = wh.at[:, _V_OFF:_V_OFF + 11].set(p["v_w"])
    wh = wh.at[:, _C_OFF:_C_OFF + 7].set(p["c_w"])
    wh = wh.astype(jnp.bfloat16)

    bh = jnp.zeros((1, _NOUT), jnp.float32)
    bh = bh.at[:, :168].set(g_b)
    bh = bh.at[:, _V_OFF:_V_OFF + 11].set(p["v_b"])
    bh = bh.at[:, _C_OFF:_C_OFF + 7].set(p["c_b"])

    # --- batch tiling: TB multiple of 8, double-buffered x tile kept <= ~24 MiB ---
    max_tb = max(8, ((3 << 20) // HW) // 8 * 8)        # 2 * TB * HW * 4B <= 24 MiB
    TB = 128 if B >= 128 else _round_up(B, 8)
    TB = max(8, min(TB, max_tb, 128))
    B_pad = _round_up(B, TB)
    if B_pad != B:
        x2d = jnp.pad(x2d, ((0, B_pad - B), (0, 0)))
    grid = (pl.cdiv(B_pad, TB),)

    resident = lambda i: (0, 0)        # weights: single VMEM-resident block
    batched = lambda i: (i, 0)

    in_specs = [
        pl.BlockSpec((TB, HW), batched),
        pl.BlockSpec((1, _FEAT), resident),
        pl.BlockSpec((1, _FEAT), resident),
        pl.BlockSpec((_FEAT, _NOUT), resident),
        pl.BlockSpec((1, _NOUT), resident),
    ]
    out_specs = pl.BlockSpec((TB, _NOUT), batched)
    out_shape = jax.ShapeDtypeStruct((B_pad, _NOUT), jnp.float32)

    # VMEM budget: double-buffered x/out tiles + weights + headroom; capped at the
    # v7x 64 MiB physical VMEM so the same limit is valid on every chip.
    weight_bytes = wh.size * 2 + (w_eff.size + b_eff.size + bh.size) * 4
    io_bytes = TB * HW * 4 + TB * _NOUT * 4
    vmem_limit = min(int(2 * (weight_bytes + io_bytes) + (8 << 20)), 64 << 20)

    flops = 2 * B_pad * _FEAT * _NOUT + B_pad * (HW + 3 * _FEAT)
    bytes_accessed = int(B_pad * HW * 4 + weight_bytes + B_pad * _NOUT * 4)

    fn = pl.pallas_call(
        multihead_kernel,
        out_shape=out_shape,
        grid=grid,
        in_specs=in_specs,
        out_specs=out_specs,
        compiler_params=pltpu.CompilerParams(
            dimension_semantics=("parallel",),
            vmem_limit_bytes=vmem_limit),
        cost_estimate=pl.CostEstimate(flops=flops, transcendentals=0,
                                      bytes_accessed=bytes_accessed),
    )
    out = fn(x2d, w_eff, b_eff, wh, bh)

    g = out[:B, :168]
    v = out[:B, _V_OFF:_V_OFF + 11]
    c = out[:B, _C_OFF:_C_OFF + 7]
    return g, v, c


def init_params(key):
    ks = jax.random.split(key, 12)

    def linear(kw, kb, fan_in, fan_out):
        bound = 1.0 / np.sqrt(fan_in)
        w = jax.random.uniform(kw, (fan_in, fan_out), jnp.float32, -bound, bound)
        b = jax.random.uniform(kb, (1, fan_out), jnp.float32, -bound, bound)
        return w, b

    # Conv2d(1, 3, 1): weight (3, 1, 1, 1) -> stored as (3,), bias (3,)
    conv_w = jax.random.uniform(ks[0], (3,), jnp.float32, -1.0, 1.0)
    conv_b = jax.random.uniform(ks[1], (3,), jnp.float32, -1.0, 1.0)
    bb_w, bb_b = linear(ks[2], ks[3], 3, 2048)        # stand-in backbone proj
    g1_w, g1_b = linear(ks[4], ks[5], 2048, 1024)     # grapheme1
    g2_w, g2_b = linear(ks[6], ks[7], 1024, 168)      # grapheme2
    v_w, v_b = linear(ks[8], ks[9], 2048, 11)         # vowel
    c_w, c_b = linear(ks[10], ks[11], 2048, 7)        # consonant
    return dict(conv_w=conv_w, conv_b=conv_b, bb_w=bb_w, bb_b=bb_b,
                g1_w=g1_w, g1_b=g1_b, g2_w=g2_w, g2_b=g2_b,
                v_w=v_w, v_b=v_b, c_w=c_w, c_b=c_b)


def reference_forward(x_nchw, p):
    B, _, H, W = x_nchw.shape
    x = x_nchw.reshape(B, H * W)
    y = x[:, None, :] * p["conv_w"][None, :, None] + p["conv_b"][None, :, None]
    feat3 = y.mean(axis=2)                            # (B, 3)
    feat = feat3 @ p["bb_w"] + p["bb_b"]              # (B, 2048)
    g = (feat @ p["g1_w"] + p["g1_b"]) @ p["g2_w"] + p["g2_b"]
    v = feat @ p["v_w"] + p["v_b"]
    c = feat @ p["c_w"] + p["c_b"]
    return g, v, c


if __name__ == "__main__":
    key = jax.random.PRNGKey(0)
    k_x, k_p = jax.random.split(key)

    B, C, H, W = 2, 1, 16, 16
    x = jax.random.normal(k_x, (B, C, H, W), dtype=jnp.float32)
    params = init_params(k_p)

    g_out, v_out, c_out = multihead_resnext_forward(x, params)
    jax.block_until_ready((g_out, v_out, c_out))

    g_ref, v_ref, c_ref = reference_forward(x, params)
    assert g_out.shape == (B, 168) and v_out.shape == (B, 11) and c_out.shape == (B, 7)
    # bf16 weights + f32 accumulation -> ~1e-2 relative error budget.
    assert np.allclose(np.asarray(g_out), np.asarray(g_ref), rtol=2e-2, atol=2e-2)
    assert np.allclose(np.asarray(v_out), np.asarray(v_ref), rtol=2e-2, atol=2e-2)
    assert np.allclose(np.asarray(c_out), np.asarray(c_ref), rtol=2e-2, atol=2e-2)

    print("KERNEL_OK")
</pallas_src>

<mosaic_0001>
module attributes {stable_mosaic.version = 11 : i64} {
  func.func @multihead_kernel(%arg0: i32, %arg1: memref<8x256xf32, #tpu.memory_space<vmem>>, %arg2: memref<1x2048xf32, #tpu.memory_space<vmem>>, %arg3: memref<1x2048xf32, #tpu.memory_space<vmem>>, %arg4: memref<2048x512xbf16, #tpu.memory_space<vmem>>, %arg5: memref<1x512xf32, #tpu.memory_space<vmem>>, %arg6: memref<8x512xf32, #tpu.memory_space<vmem>>) attributes {dimension_semantics = [#tpu.dimension_semantics<parallel>], iteration_bounds = array<i64: 1>, scalar_prefetch = 0 : i64, scratch_operands = 0 : i64, tpu.core_type = #tpu.core_type<tc>, window_params = [{transform_indices = @transform_0, window_bounds = array<i64: 8, 256>}, {pipeline_mode = #tpu.pipeline_mode<synchronous>, transform_indices = @transform_1, window_bounds = array<i64: 1, 2048>}, {pipeline_mode = #tpu.pipeline_mode<synchronous>, transform_indices = @transform_2, window_bounds = array<i64: 1, 2048>}, {pipeline_mode = #tpu.pipeline_mode<synchronous>, transform_indices = @transform_3, window_bounds = array<i64: 2048, 512>}, {pipeline_mode = #tpu.pipeline_mode<synchronous>, transform_indices = @transform_4, window_bounds = array<i64: 1, 512>}, {transform_indices = @transform_5, window_bounds = array<i64: 8, 512>}]} {
    %c0 = arith.constant 0 : index
    %c0_0 = arith.constant 0 : index
    %0 = vector.load %arg1[%c0, %c0_0] : memref<8x256xf32, #tpu.memory_space<vmem>>, vector<8x256xf32>
    %cst = arith.constant dense<0.000000e+00> : vector<8xf32>
    %1 = vector.multi_reduction <add>, %0, %cst [1] : vector<8x256xf32> to vector<8xf32>
    %2 = vector.shape_cast %1 : vector<8xf32> to vector<8x1xf32>
    %cst_1 = arith.constant 2.560000e+02 : f32
    %3 = vector.broadcast %cst_1 : f32 to vector<8x1xf32>
    %4 = arith.divf %2, %3 : vector<8x1xf32>
    %c0_2 = arith.constant 0 : index
    %c0_3 = arith.constant 0 : index
    %5 = vector.load %arg2[%c0_2, %c0_3] : memref<1x2048xf32, #tpu.memory_space<vmem>>, vector<1x2048xf32>
    %6 = vector.broadcast %4 : vector<8x1xf32> to vector<8x2048xf32>
    %7 = vector.broadcast %5 : vector<1x2048xf32> to vector<8x2048xf32>
    %8 = arith.mulf %6, %7 : vector<8x2048xf32>
    %c0_4 = arith.constant 0 : index
    %c0_5 = arith.constant 0 : index
    %9 = vector.load %arg3[%c0_4, %c0_5] : memref<1x2048xf32, #tpu.memory_space<vmem>>, vector<1x2048xf32>
    %10 = vector.broadcast %9 : vector<1x2048xf32> to vector<8x2048xf32>
    %11 = arith.addf %8, %10 : vector<8x2048xf32>
    %12 = arith.truncf %11 : vector<8x2048xf32> to vector<8x2048xbf16>
    %c0_6 = arith.constant 0 : index
    %c0_7 = arith.constant 0 : index
    %13 = vector.load %arg4[%c0_6, %c0_7] : memref<2048x512xbf16, #tpu.memory_space<vmem>>, vector<2048x512xbf16>
    %cst_8 = arith.constant dense<0.000000e+00> : vector<8x512xf32>
    %14 = tpu.matmul %12, %13, %cst_8 {dimension_numbers = #tpu.dot_dimension_numbers<[1], [0], [0], [1], [0, 0, 1, 1], [], []>} : vector<8x2048xbf16>, vector<2048x512xbf16>, vector<8x512xf32> -> vector<8x512xf32>
    %c0_9 = arith.constant 0 : index
    %c0_10 = arith.constant 0 : index
    %15 = vector.load %arg5[%c0_9, %c0_10] : memref<1x512xf32, #tpu.memory_space<vmem>>, vector<1x512xf32>
    %16 = vector.broadcast %15 : vector<1x512xf32> to vector<8x512xf32>
    %17 = arith.addf %14, %16 : vector<8x512xf32>
    %c0_11 = arith.constant 0 : index
    %c0_12 = arith.constant 0 : index
    %18 = vector.load %arg6[%c0_11, %c0_12] : memref<8x512xf32, #tpu.memory_space<vmem>>, vector<8x512xf32>
    tpu.vector_store %arg6[%c0_11, %c0_12], %17 {strides = array<i32>} : memref<8x512xf32, #tpu.memory_space<vmem>>, vector<8x512xf32>,
    return
  }
  func.func @transform_0(%arg0: i32) -> (i32, i32) {
    %c0_i32 = arith.constant 0 : i32
    %c0_i32_0 = arith.constant 0 : i32
    return %arg0, %c0_i32 : i32, i32
  }
  func.func @transform_1(%arg0: i32) -> (i32, i32) {
    %c0_i32 = arith.constant 0 : i32
    %c0_i32_0 = arith.constant 0 : i32
    %c0_i32_1 = arith.constant 0 : i32
    return %c0_i32, %c0_i32_0 : i32, i32
  }
  func.func @transform_2(%arg0: i32) -> (i32, i32) {
    %c0_i32 = arith.constant 0 : i32
    %c0_i32_0 = arith.constant 0 : i32
    %c0_i32_1 = arith.constant 0 : i32
    return %c0_i32, %c0_i32_0 : i32, i32
  }
  func.func @transform_3(%arg0: i32) -> (i32, i32) {
    %c0_i32 = arith.constant 0 : i32
    %c0_i32_0 = arith.constant 0 : i32
    %c0_i32_1 = arith.constant 0 : i32
    return %c0_i32, %c0_i32_0 : i32, i32
  }
  func.func @transform_4(%arg0: i32) -> (i32, i32) {
    %c0_i32 = arith.constant 0 : i32
    %c0_i32_0 = arith.constant 0 : i32
    %c0_i32_1 = arith.constant 0 : i32
    return %c0_i32, %c0_i32_0 : i32, i32
  }
  func.func @transform_5(%arg0: i32) -> (i32, i32) {
    %c0_i32 = arith.constant 0 : i32
    %c0_i32_0 = arith.constant 0 : i32
    return %arg0, %c0_i32 : i32, i32
  }
}

</mosaic_0001>

<llo_original>
// kernel: tpu_custom_call.1
$region0: #{tpu_custom_call.1}
  #allocation0 [shape = 'u32[]', space=smem, size = 0x4, offset = 0x4, fixed_abs, tag = 'smem constant byte address 0x4 - core index']
  #allocation1 [shape = 'u32[144,128]{1,0:T(1,128)}', space=vmem, size = 0x12000, scoped, tag = 'internal scratch']
  %s0 = inlined_call_operand.hbm [shape: f32[8,256], index: 0, kind: input, shape index: {}]
  %s1 = inlined_call_operand.hbm [shape: f32[1,2048], index: 1, kind: input, shape index: {}]
  %s2 = inlined_call_operand.hbm [shape: f32[1,2048], index: 2, kind: input, shape index: {}]
  %s3 = inlined_call_operand.hbm [shape: bf16[2048,512], index: 3, kind: input, shape index: {}]
  %s4 = inlined_call_operand.hbm [shape: f32[1,512], index: 4, kind: input, shape index: {}]
  %s5 = inlined_call_operand.hbm [shape: f32[8,512], index: 5, kind: output, shape index: {}]
  %s6 = sld [smem:[#allocation0]]
  $region50: #{tpu_custom_call.1} parent=0
    _
  %s8 = ssub.s32 1, %s6
  %s9 = scalar_select 0, %s8, %s6
  $region1: #{tpu_custom_call.1} parent=0
    #allocation2 [shape = 'u8[8192]{0}', space=vmem, size = 0x2000, scoped, tag = 'input window, operand 0, single buffered']
    #allocation3 [shape = 's32[1]{0}', space=sflag, size = 0x4, scoped, tag = 'scoped memory for tpu_custom_call.1']
    #allocation4 [shape = 's32[1]{0}', space=sflag, size = 0x4, scoped, tag = 'scoped memory for tpu_custom_call.1']
    #allocation5 [shape = 'u8[8192]{0}', space=vmem, size = 0x2000, scoped, tag = 'input window, operand 1, single buffered']
    #allocation6 [shape = 's32[1]{0}', space=sflag, size = 0x4, scoped, tag = 'scoped memory for tpu_custom_call.1']
    #allocation7 [shape = 'u8[8192]{0}', space=vmem, size = 0x2000, scoped, tag = 'input window, operand 2, single buffered']
    #allocation8 [shape = 'u8[2097152]{0}', space=vmem, size = 0x200000, scoped, tag = 'input window, operand 3, single buffered']
    #allocation9 [shape = 's32[1]{0}', space=sflag, size = 0x4, scoped, tag = 'scoped memory for tpu_custom_call.1']
    #allocation10 [shape = 'u8[2048]{0}', space=vmem, size = 0x800, scoped, tag = 'input window, operand 4, single buffered']
    #allocation11 [shape = 'u8[16384]{0}', space=vmem, size = 0x4000, scoped, tag = 'output window, operand 0, single buffered']
    %10 = vsyncpa [#allocation3], 0
    %11 = vsyncpa [#allocation6], 0
    %12 = vsyncpa [#allocation9], 0
    %13 = vsyncpa [#allocation4], 0
    // Predicated region
    $region2: #{tpu_custom_call.1} parent=1 // pred_check
      _
    $region3: #{tpu_custom_call.1} parent=1 // pred_check_branch
      %15 = sbr.rel (0) target = $region5
    $region4: #{tpu_custom_call.1} parent=1 // pred_region
      %s17 = ssub.s32 256, 256
      %18 = vsyncadd [#allocation3], %s17
      %s20 = sshll.u32 [#allocation2], 4
      %s21 = int_to_ptr.vmem [resolvable:$true] %s20
      %23 = dma.hbm_to_vmem [thread:$0]  %s0, 256, %s21, [#allocation3]
    $region5: #{tpu_custom_call.1} parent=1 // pred_fallthru
      _
    // Predicated region
    $region6: #{tpu_custom_call.1} parent=1 // pred_check
      _
    $region7: #{tpu_custom_call.1} parent=1 // pred_check_branch
      %25 = sbr.rel (0) target = $region9
    $region8: #{tpu_custom_call.1} parent=1 // pred_region
      %s27 = ssub.s32 256, 256
      %28 = vsyncadd [#allocation6], %s27
      %s30 = sshll.u32 [#allocation5], 4
      %s31 = int_to_ptr.vmem [resolvable:$true] %s30
      %33 = dma.hbm_to_vmem [thread:$0]  %s1, 256, %s31, [#allocation6]
    $region9: #{tpu_custom_call.1} parent=1 // pred_fallthru
      _
    // Predicated region
    $region10: #{tpu_custom_call.1} parent=1 // pred_check
      _
    $region11: #{tpu_custom_call.1} parent=1 // pred_check_branch
      %35 = sbr.rel (0) target = $region13
    $region12: #{tpu_custom_call.1} parent=1 // pred_region
      %s37 = ssub.s32 256, 256
      %38 = vsyncadd [#allocation6], %s37
      %s40 = sshll.u32 [#allocation7], 4
      %s41 = int_to_ptr.vmem [resolvable:$true] %s40
      %43 = dma.hbm_to_vmem [thread:$0]  %s2, 256, %s41, [#allocation6]
    $region13: #{tpu_custom_call.1} parent=1 // pred_fallthru
      _
    // Predicated region
    $region14: #{tpu_custom_call.1} parent=1 // pred_check
      _
    $region15: #{tpu_custom_call.1} parent=1 // pred_check_branch
      %45 = sbr.rel (0) target = $region17
    $region16: #{tpu_custom_call.1} parent=1 // pred_region
      %s47 = ssub.s32 65536, 65536
      %48 = vsyncadd [#allocation9], %s47
      %s49 = sshll.u32 [#allocation8], 4
      %s50 = int_to_ptr.vmem [resolvable:$true] %s49
      %55 = dma.hbm_to_vmem [thread:$0]  %s3, 65536, %s50, [#allocation9], 256, 256, 16
    $region17: #{tpu_custom_call.1} parent=1 // pred_fallthru
      _
    // Predicated region
    $region18: #{tpu_custom_call.1} parent=1 // pred_check
      _
    $region19: #{tpu_custom_call.1} parent=1 // pred_check_branch
      %57 = sbr.rel (0) target = $region21
    $region20: #{tpu_custom_call.1} parent=1 // pred_region
      %s59 = ssub.s32 64, 64
      %60 = vsyncadd [#allocation9], %s59
      %s62 = sshll.u32 [#allocation10], 4
      %s63 = int_to_ptr.vmem [resolvable:$true] %s62
      %65 = dma.hbm_to_vmem [thread:$0]  %s4, 64, %s63, [#allocation9]
    $region21: #{tpu_custom_call.1} parent=1 // pred_fallthru
      _
    // Predicated region
    $region22: #{tpu_custom_call.1} parent=1 // pred_check
      _
    $region23: #{tpu_custom_call.1} parent=1 // pred_check_branch
      %67 = sbr.rel (0) target = $region25
    $region24: #{tpu_custom_call.1} parent=1 // pred_region
      %68 = dma.done [#allocation3], 256
    $region25: #{tpu_custom_call.1} parent=1 // pred_fallthru
      _
    // Predicated region
    $region26: #{tpu_custom_call.1} parent=1 // pred_check
      _
    $region27: #{tpu_custom_call.1} parent=1 // pred_check_branch
      %70 = sbr.rel (0) target = $region29
    $region28: #{tpu_custom_call.1} parent=1 // pred_region
      %71 = dma.done [#allocation6], 256
    $region29: #{tpu_custom_call.1} parent=1 // pred_fallthru
      _
    // Predicated region
    $region30: #{tpu_custom_call.1} parent=1 // pred_check
      _
    $region31: #{tpu_custom_call.1} parent=1 // pred_check_branch
      %73 = sbr.rel (0) target = $region33
    $region32: #{tpu_custom_call.1} parent=1 // pred_region
      %74 = dma.done [#allocation6], 256
    $region33: #{tpu_custom_call.1} parent=1 // pred_fallthru
      _
    // Predicated region
    $region34: #{tpu_custom_call.1} parent=1 // pred_check
      _
    $region35: #{tpu_custom_call.1} parent=1 // pred_check_branch
      %76 = sbr.rel (0) target = $region37
    $region36: #{tpu_custom_call.1} parent=1 // pred_region
      %77 = dma.done [#allocation9], 65536
    $region37: #{tpu_custom_call.1} parent=1 // pred_fallthru
      _
    // Predicated region
    $region38: #{tpu_custom_call.1} parent=1 // pred_check
      _
    $region39: #{tpu_custom_call.1} parent=1 // pred_check_branch
      %79 = sbr.rel (0) target = $region41
    $region40: #{tpu_custom_call.1} parent=1 // pred_region
      %80 = dma.done [#allocation9], 64
    $region41: #{tpu_custom_call.1} parent=1 // pred_fallthru
      _
    %v81 = vld [vmem:[#allocation2] sm:$0xff]
    %v82 = vld [vmem:[#allocation2 + $0x8] sm:$0xff]
    %v83 = vadd.f32 %v81, %v82
    %84 = vadd.xlane.f32.xlu0 %v83
    %v85 = vpop.xlane.xlu0 %84
    %v86 = vrcp.pop 256.0
    %v87 = vmul.f32 %v85, %v86
    %v88 = vld [vmem:[#allocation5] sm:$0xff]
    %v89 = vld [vmem:[#allocation5 + $0x8] sm:$0xff]
    %v92 = vlaneseq
    %v93 = vshrl.u32 %v92, 7
    %v94 = vsub.s32 0, %v93
    %v95 = vrot.slane %v88, %v94
    %v96 = vlaneseq
    %v97 = vshrl.u32 %v96, 7
    %v98 = vsub.s32 1, %v97
    %v99 = vrot.slane %v88, %v98
    %v100 = vlaneseq
    %v101 = vshrl.u32 %v100, 7
    %v102 = vsub.s32 2, %v101
    %v103 = vrot.slane %v88, %v102
    %v104 = vlaneseq
    %v105 = vshrl.u32 %v104, 7
    %v106 = vsub.s32 3, %v105
    %v107 = vrot.slane %v88, %v106
    %v108 = vlaneseq
    %v109 = vshrl.u32 %v108, 7
    %v110 = vsub.s32 4, %v109
    %v111 = vrot.slane %v88, %v110
    %v112 = vlaneseq
    %v113 = vshrl.u32 %v112, 7
    %v114 = vsub.s32 5, %v113
    %v115 = vrot.slane %v88, %v114
    %v116 = vlaneseq
    %v117 = vshrl.u32 %v116, 7
    %v118 = vsub.s32 6, %v117
    %v119 = vrot.slane %v88, %v118
    %v120 = vlaneseq
    %v121 = vshrl.u32 %v120, 7
    %v122 = vsub.s32 7, %v121
    %v123 = vrot.slane %v88, %v122
    %v124 = vlaneseq
    %v125 = vshrl.u32 %v124, 7
    %v126 = vsub.s32 0, %v125
    %v127 = vrot.slane %v89, %v126
    %v128 = vlaneseq
    %v129 = vshrl.u32 %v128, 7
    %v130 = vsub.s32 1, %v129
    %v131 = vrot.slane %v89, %v130
    %v132 = vlaneseq
    %v133 = vshrl.u32 %v132, 7
    %v134 = vsub.s32 2, %v133
    %v135 = vrot.slane %v89, %v134
    %v136 = vlaneseq
    %v137 = vshrl.u32 %v136, 7
    %v138 = vsub.s32 3, %v137
    %v139 = vrot.slane %v89, %v138
    %v140 = vlaneseq
    %v141 = vshrl.u32 %v140, 7
    %v142 = vsub.s32 4, %v141
    %v143 = vrot.slane %v89, %v142
    %v144 = vlaneseq
    %v145 = vshrl.u32 %v144, 7
    %v146 = vsub.s32 5, %v145
    %v147 = vrot.slane %v89, %v146
    %v148 = vlaneseq
    %v149 = vshrl.u32 %v148, 7
    %v150 = vsub.s32 6, %v149
    %v151 = vrot.slane %v89, %v150
    %v152 = vlaneseq
    %v153 = vshrl.u32 %v152, 7
    %v154 = vsub.s32 7, %v153
    %v155 = vrot.slane %v89, %v154
    %v172 = vmul.f32 %v87, %v95
    %v173 = vmul.f32 %v87, %v99
    %v174 = vmul.f32 %v87, %v103
    %v175 = vmul.f32 %v87, %v107
    %v176 = vmul.f32 %v87, %v111
    %v177 = vmul.f32 %v87, %v115
    %v178 = vmul.f32 %v87, %v119
    %v179 = vmul.f32 %v87, %v123
    %v180 = vmul.f32 %v87, %v127
    %v181 = vmul.f32 %v87, %v131
    %v182 = vmul.f32 %v87, %v135
    %v183 = vmul.f32 %v87, %v139
    %v184 = vmul.f32 %v87, %v143
    %v185 = vmul.f32 %v87, %v147
    %v186 = vmul.f32 %v87, %v151
    %v187 = vmul.f32 %v87, %v155
    %v188 = vld [vmem:[#allocation7] sm:$0xff]
    %v189 = vld [vmem:[#allocation7 + $0x8] sm:$0xff]
    %v192 = vlaneseq
    %v193 = vshrl.u32 %v192, 7
    %v194 = vsub.s32 0, %v193
    %v195 = vrot.slane %v188, %v194
    %v196 = vlaneseq
    %v197 = vshrl.u32 %v196, 7
    %v198 = vsub.s32 1, %v197
    %v199 = vrot.slane %v188, %v198
    %v200 = vlaneseq
    %v201 = vshrl.u32 %v200, 7
    %v202 = vsub.s32 2, %v201
    %v203 = vrot.slane %v188, %v202
    %v204 = vlaneseq
    %v205 = vshrl.u32 %v204, 7
    %v206 = vsub.s32 3, %v205
    %v207 = vrot.slane %v188, %v206
    %v208 = vlaneseq
    %v209 = vshrl.u32 %v208, 7
    %v210 = vsub.s32 4, %v209
    %v211 = vrot.slane %v188, %v210
    %v212 = vlaneseq
    %v213 = vshrl.u32 %v212, 7
    %v214 = vsub.s32 5, %v213
    %v215 = vrot.slane %v188, %v214
    %v216 = vlaneseq
    %v217 = vshrl.u32 %v216, 7
    %v218 = vsub.s32 6, %v217
    %v219 = vrot.slane %v188, %v218
    %v220 = vlaneseq
    %v221 = vshrl.u32 %v220, 7
    %v222 = vsub.s32 7, %v221
    %v223 = vrot.slane %v188, %v222
    %v224 = vlaneseq
    %v225 = vshrl.u32 %v224, 7
    %v226 = vsub.s32 0, %v225
    %v227 = vrot.slane %v189, %v226
    %v228 = vlaneseq
    %v229 = vshrl.u32 %v228, 7
    %v230 = vsub.s32 1, %v229
    %v231 = vrot.slane %v189, %v230
    %v232 = vlaneseq
    %v233 = vshrl.u32 %v232, 7
    %v234 = vsub.s32 2, %v233
    %v235 = vrot.slane %v189, %v234
    %v236 = vlaneseq
    %v237 = vshrl.u32 %v236, 7
    %v238 = vsub.s32 3, %v237
    %v239 = vrot.slane %v189, %v238
    %v240 = vlaneseq
    %v241 = vshrl.u32 %v240, 7
    %v242 = vsub.s32 4, %v241
    %v243 = vrot.slane %v189, %v242
    %v244 = vlaneseq
    %v245 = vshrl.u32 %v244, 7
    %v246 = vsub.s32 5, %v245
    %v247 = vrot.slane %v189, %v246
    %v248 = vlaneseq
    %v249 = vshrl.u32 %v248, 7
    %v250 = vsub.s32 6, %v249
    %v251 = vrot.slane %v189, %v250
    %v252 = vlaneseq
    %v253 = vshrl.u32 %v252, 7
    %v254 = vsub.s32 7, %v253
    %v255 = vrot.slane %v189, %v254
    %v272 = vadd.f32 %v172, %v195
    %v273 = vadd.f32 %v173, %v199
    %v274 = vadd.f32 %v174, %v203
    %v275 = vadd.f32 %v175, %v207
    %v276 = vadd.f32 %v176, %v211
    %v277 = vadd.f32 %v177, %v215
    %v278 = vadd.f32 %v178, %v219
    %v279 = vadd.f32 %v179, %v223
    %v280 = vadd.f32 %v180, %v227
    %v281 = vadd.f32 %v181, %v231
    %v282 = vadd.f32 %v182, %v235
    %v283 = vadd.f32 %v183, %v239
    %v284 = vadd.f32 %v184, %v243
    %v285 = vadd.f32 %v185, %v247
    %v286 = vadd.f32 %v186, %v251
    %v287 = vadd.f32 %v187, %v255
    %v288 = vpack.c.bf16 %v272, %v272
    %v289 = vpack.c.bf16 %v273, %v273
    %v290 = vpack.c.bf16 %v274, %v274
    %v291 = vpack.c.bf16 %v275, %v275
    %v292 = vpack.c.bf16 %v276, %v276
    %v293 = vpack.c.bf16 %v277, %v277
    %v294 = vpack.c.bf16 %v278, %v278
    %v295 = vpack.c.bf16 %v279, %v279
    %v296 = vpack.c.bf16 %v280, %v280
    %v297 = vpack.c.bf16 %v281, %v281
    %v298 = vpack.c.bf16 %v282, %v282
    %v299 = vpack.c.bf16 %v283, %v283
    %v300 = vpack.c.bf16 %v284, %v284
    %v301 = vpack.c.bf16 %v285, %v285
    %v302 = vpack.c.bf16 %v286, %v286
    %v303 = vpack.c.bf16 %v287, %v287
    %v304 = vld [vmem:[#allocation8] sm:$0xff]
    %v305 = vld [vmem:[#allocation8 + $0x8] sm:$0xff]
    %v306 = vld [vmem:[#allocation8 + $0x10] sm:$0xff]
    %v307 = vld [vmem:[#allocation8 + $0x18] sm:$0xff]
    %v308 = vld [vmem:[#allocation8 + $0x20] sm:$0xff]
    %v309 = vld [vmem:[#allocation8 + $0x28] sm:$0xff]
    %v310 = vld [vmem:[#allocation8 + $0x30] sm:$0xff]
    %v311 = vld [vmem:[#allocation8 + $0x38] sm:$0xff]
    %v312 = vld [vmem:[#allocation8 + $0x40] sm:$0xff]
    %v313 = vld [vmem:[#allocation8 + $0x48] sm:$0xff]
    %v314 = vld [vmem:[#allocation8 + $0x50] sm:$0xff]
    %v315 = vld [vmem:[#allocation8 + $0x58] sm:$0xff]
    %v316 = vld [vmem:[#allocation8 + $0x60] sm:$0xff]
    %v317 = vld [vmem:[#allocation8 + $0x68] sm:$0xff]
    %v318 = vld [vmem:[#allocation8 + $0x70] sm:$0xff]
    %v319 = vld [vmem:[#allocation8 + $0x78] sm:$0xff]
    %v320 = vld [vmem:[#allocation8 + $0x80] sm:$0xff]
    %v321 = vld [vmem:[#allocation8 + $0x88] sm:$0xff]
    %v322 = vld [vmem:[#allocation8 + $0x90] sm:$0xff]
    %v323 = vld [vmem:[#allocation8 + $0x98] sm:$0xff]
    %v324 = vld [vmem:[#allocation8 + $0xa0] sm:$0xff]
    %v325 = vld [vmem:[#allocation8 + $0xa8] sm:$0xff]
    %v326 = vld [vmem:[#allocation8 + $0xb0] sm:$0xff]
    %v327 = vld [vmem:[#allocation8 + $0xb8] sm:$0xff]
    %v328 = vld [vmem:[#allocation8 + $0xc0] sm:$0xff]
    %v329 = vld [vmem:[#allocation8 + $0xc8] sm:$0xff]
    %v330 = vld [vmem:[#allocation8 + $0xd0] sm:$0xff]
    %v331 = vld [vmem:[#allocation8 + $0xd8] sm:$0xff]
    %v332 = vld [vmem:[#allocation8 + $0xe0] sm:$0xff]
    %v333 = vld [vmem:[#allocation8 + $0xe8] sm:$0xff]
    %v334 = vld [vmem:[#allocation8 + $0xf0] sm:$0xff]
    %v335 = vld [vmem:[#allocation8 + $0xf8] sm:$0xff]
    %v336 = vld [vmem:[#allocation8 + $0x100] sm:$0xff]
    %v337 = vld [vmem:[#allocation8 + $0x108] sm:$0xff]
    %v338 = vld [vmem:[#allocation8 + $0x110] sm:$0xff]
    %v339 = vld [vmem:[#allocation8 + $0x118] sm:$0xff]
    %v340 = vld [vmem:[#allocation8 + $0x120] sm:$0xff]
    %v341 = vld [vmem:[#allocation8 + $0x128] sm:$0xff]
    %v342 = vld [vmem:[#allocation8 + $0x130] sm:$0xff]
    %v343 = vld [vmem:[#allocation8 + $0x138] sm:$0xff]
    %v344 = vld [vmem:[#allocation8 + $0x140] sm:$0xff]
    %v345 = vld [vmem:[#allocation8 + $0x148] sm:$0xff]
    %v346 = vld [vmem:[#allocation8 + $0x150] sm:$0xff]
    %v347 = vld [vmem:[#allocation8 + $0x158] sm:$0xff]
    %v348 = vld [vmem:[#allocation8 + $0x160] sm:$0xff]
    %v349 = vld [vmem:[#allocation8 + $0x168] sm:$0xff]
    %v350 = vld [vmem:[#allocation8 + $0x170] sm:$0xff]
    %v351 = vld [vmem:[#allocation8 + $0x178] sm:$0xff]
    %v352 = vld [vmem:[#allocation8 + $0x180] sm:$0xff]
    %v353 = vld [vmem:[#allocation8 + $0x188] sm:$0xff]
    %v354 = vld [vmem:[#allocation8 + $0x190] sm:$0xff]
    %v355 = vld [vmem:[#allocation8 + $0x198] sm:$0xff]
    %v356 = vld [vmem:[#allocation8 + $0x1a0] sm:$0xff]
    %v357 = vld [vmem:[#allocation8 + $0x1a8] sm:$0xff]
    %v358 = vld [vmem:[#allocation8 + $0x1b0] sm:$0xff]
    %v359 = vld [vmem:[#allocation8 + $0x1b8] sm:$0xff]
    %v360 = vld [vmem:[#allocation8 + $0x1c0] sm:$0xff]
    %v361 = vld [vmem:[#allocation8 + $0x1c8] sm:$0xff]
    %v362 = vld [vmem:[#allocation8 + $0x1d0] sm:$0xff]
    %v363 = vld [vmem:[#allocation8 + $0x1d8] sm:$0xff]
    %v364 = vld [vmem:[#allocation8 + $0x1e0] sm:$0xff]
    %v365 = vld [vmem:[#allocation8 + $0x1e8] sm:$0xff]
    %v366 = vld [vmem:[#allocation8 + $0x1f0] sm:$0xff]
    %v367 = vld [vmem:[#allocation8 + $0x1f8] sm:$0xff]
    %v368 = vld [vmem:[#allocation8 + $0x200] sm:$0xff]
    %v369 = vld [vmem:[#allocation8 + $0x208] sm:$0xff]
    %v370 = vld [vmem:[#allocation8 + $0x210] sm:$0xff]
    %v371 = vld [vmem:[#allocation8 + $0x218] sm:$0xff]
    %v372 = vld [vmem:[#allocation8 + $0x220] sm:$0xff]
    %v373 = vld [vmem:[#allocation8 + $0x228] sm:$0xff]
    %v374 = vld [vmem:[#allocation8 + $0x230] sm:$0xff]
    %v375 = vld [vmem:[#allocation8 + $0x238] sm:$0xff]
    %v376 = vld [vmem:[#allocation8 + $0x240] sm:$0xff]
    %v377 = vld [vmem:[#allocation8 + $0x248] sm:$0xff]
    %v378 = vld [vmem:[#allocation8 + $0x250] sm:$0xff]
    %v379 = vld [vmem:[#allocation8 + $0x258] sm:$0xff]
    %v380 = vld [vmem:[#allocation8 + $0x260] sm:$0xff]
    %v381 = vld [vmem:[#allocation8 + $0x268] sm:$0xff]
    %v382 = vld [vmem:[#allocation8 + $0x270] sm:$0xff]
    %v383 = vld [vmem:[#allocation8 + $0x278] sm:$0xff]
    %v384 = vld [vmem:[#allocation8 + $0x280] sm:$0xff]
    %v385 = vld [vmem:[#allocation8 + $0x288] sm:$0xff]
    %v386 = vld [vmem:[#allocation8 + $0x290] sm:$0xff]
    %v387 = vld [vmem:[#allocation8 + $0x298] sm:$0xff]
    %v388 = vld [vmem:[#allocation8 + $0x2a0] sm:$0xff]
    %v389 = vld [vmem:[#allocation8 + $0x2a8] sm:$0xff]
    %v390 = vld [vmem:[#allocation8 + $0x2b0] sm:$0xff]
    %v391 = vld [vmem:[#allocation8 + $0x2b8] sm:$0xff]
    %v392 = vld [vmem:[#allocation8 + $0x2c0] sm:$0xff]
    %v393 = vld [vmem:[#allocation8 + $0x2c8] sm:$0xff]
    %v394 = vld [vmem:[#allocation8 + $0x2d0] sm:$0xff]
    %v395 = vld [vmem:[#allocation8 + $0x2d8] sm:$0xff]
    %v396 = vld [vmem:[#allocation8 + $0x2e0] sm:$0xff]
    %v397 = vld [vmem:[#allocation8 + $0x2e8] sm:$0xff]
    %v398 = vld [vmem:[#allocation8 + $0x2f0] sm:$0xff]
    %v399 = vld [vmem:[#allocation8 + $0x2f8] sm:$0xff]
    %v400 = vld [vmem:[#allocation8 + $0x300] sm:$0xff]
    %v401 = vld [vmem:[#allocation8 + $0x308] sm:$0xff]
    %v402 = vld [vmem:[#allocation8 + $0x310] sm:$0xff]
    %v403 = vld [vmem:[#allocation8 + $0x318] sm:$0xff]
    %v404 = vld [vmem:[#allocation8 + $0x320] sm:$0xff]
    %v405 = vld [vmem:[#allocation8 + $0x328] sm:$0xff]
    %v406 = vld [vmem:[#allocation8 + $0x330] sm:$0xff]
    %v407 = vld [vmem:[#allocation8 + $0x338] sm:$0xff]
    %v408 = vld [vmem:[#allocation8 + $0x340] sm:$0xff]
    %v409 = vld [vmem:[#allocation8 + $0x348] sm:$0xff]
    %v410 = vld [vmem:[#allocation8 + $0x350] sm:$0xff]
    %v411 = vld [vmem:[#allocation8 + $0x358] sm:$0xff]
    %v412 = vld [vmem:[#allocation8 + $0x360] sm:$0xff]
    %v413 = vld [vmem:[#allocation8 + $0x368] sm:$0xff]
    %v414 = vld [vmem:[#allocation8 + $0x370] sm:$0xff]
    %v415 = vld [vmem:[#allocation8 + $0x378] sm:$0xff]
    %v416 = vld [vmem:[#allocation8 + $0x380] sm:$0xff]
    %v417 = vld [vmem:[#allocation8 + $0x388] sm:$0xff]
    %v418 = vld [vmem:[#allocation8 + $0x390] sm:$0xff]
    %v419 = vld [vmem:[#allocation8 + $0x398] sm:$0xff]
    %v420 = vld [vmem:[#allocation8 + $0x3a0] sm:$0xff]
    %v421 = vld [vmem:[#allocation8 + $0x3a8] sm:$0xff]
    %v422 = vld [vmem:[#allocation8 + $0x3b0] sm:$0xff]
    %v423 = vld [vmem:[#allocation8 + $0x3b8] sm:$0xff]
    %v424 = vld [vmem:[#allocation8 + $0x3c0] sm:$0xff]
    %v425 = vld [vmem:[#allocation8 + $0x3c8] sm:$0xff]
    %v426 = vld [vmem:[#allocation8 + $0x3d0] sm:$0xff]
    %v427 = vld [vmem:[#allocation8 + $0x3d8] sm:$0xff]
    %v428 = vld [vmem:[#allocation8 + $0x3e0] sm:$0xff]
    %v429 = vld [vmem:[#allocation8 + $0x3e8] sm:$0xff]
    %v430 = vld [vmem:[#allocation8 + $0x3f0] sm:$0xff]
    %v431 = vld [vmem:[#allocation8 + $0x3f8] sm:$0xff]
    %v432 = vld [vmem:[#allocation8 + $0x400] sm:$0xff]
    %v433 = vld [vmem:[#allocation8 + $0x408] sm:$0xff]
    %v434 = vld [vmem:[#allocation8 + $0x410] sm:$0xff]
    %v435 = vld [vmem:[#allocation8 + $0x418] sm:$0xff]
    %v436 = vld [vmem:[#allocation8 + $0x420] sm:$0xff]
    %v437 = vld [vmem:[#allocation8 + $0x428] sm:$0xff]
    %v438 = vld [vmem:[#allocation8 + $0x430] sm:$0xff]
    %v439 = vld [vmem:[#allocation8 + $0x438] sm:$0xff]
    %v440 = vld [vmem:[#allocation8 + $0x440] sm:$0xff]
    %v441 = vld [vmem:[#allocation8 + $0x448] sm:$0xff]
    %v442 = vld [vmem:[#allocation8 + $0x450] sm:$0xff]
    %v443 = vld [vmem:[#allocation8 + $0x458] sm:$0xff]
    %v444 = vld [vmem:[#allocation8 + $0x460] sm:$0xff]
    %v445 = vld [vmem:[#allocation8 + $0x468] sm:$0xff]
    %v446 = vld [vmem:[#allocation8 + $0x470] sm:$0xff]
    %v447 = vld [vmem:[#allocation8 + $0x478] sm:$0xff]
    %v448 = vld [vmem:[#allocation8 + $0x480] sm:$0xff]
    %v449 = vld [vmem:[#allocation8 + $0x488] sm:$0xff]
    %v450 = vld [vmem:[#allocation8 + $0x490] sm:$0xff]
    %v451 = vld [vmem:[#allocation8 + $0x498] sm:$0xff]
    %v452 = vld [vmem:[#allocation8 + $0x4a0] sm:$0xff]
    %v453 = vld [vmem:[#allocation8 + $0x4a8] sm:$0xff]
    %v454 = vld [vmem:[#allocation8 + $0x4b0] sm:$0xff]
    %v455 = vld [vmem:[#allocation8 + $0x4b8] sm:$0xff]
    %v456 = vld [vmem:[#allocation8 + $0x4c0] sm:$0xff]
    %v457 = vld [vmem:[#allocation8 + $0x4c8] sm:$0xff]
    %v458 = vld [vmem:[#allocation8 + $0x4d0] sm:$0xff]
    %v459 = vld [vmem:[#allocation8 + $0x4d8] sm:$0xff]
    %v460 = vld [vmem:[#allocation8 + $0x4e0] sm:$0xff]
    %v461 = vld [vmem:[#allocation8 + $0x4e8] sm:$0xff]
    %v462 = vld [vmem:[#allocation8 + $0x4f0] sm:$0xff]
    %v463 = vld [vmem:[#allocation8 + $0x4f8] sm:$0xff]
    %v464 = vld [vmem:[#allocation8 + $0x500] sm:$0xff]
    %v465 = vld [vmem:[#allocation8 + $0x508] sm:$0xff]
    %v466 = vld [vmem:[#allocation8 + $0x510] sm:$0xff]
    %v467 = vld [vmem:[#allocation8 + $0x518] sm:$0xff]
    %v468 = vld [vmem:[#allocation8 + $0x520] sm:$0xff]
    %v469 = vld [vmem:[#allocation8 + $0x528] sm:$0xff]
    %v470 = vld [vmem:[#allocation8 + $0x530] sm:$0xff]
    %v471 = vld [vmem:[#allocation8 + $0x538] sm:$0xff]
    %v472 = vld [vmem:[#allocation8 + $0x540] sm:$0xff]
    %v473 = vld [vmem:[#allocation8 + $0x548] sm:$0xff]
    %v474 = vld [vmem:[#allocation8 + $0x550] sm:$0xff]
    %v475 = vld [vmem:[#allocation8 + $0x558] sm:$0xff]
    %v476 = vld [vmem:[#allocation8 + $0x560] sm:$0xff]
    %v477 = vld [vmem:[#allocation8 + $0x568] sm:$0xff]
    %v478 = vld [vmem:[#allocation8 + $0x570] sm:$0xff]
    %v479 = vld [vmem:[#allocation8 + $0x578] sm:$0xff]
    %v480 = vld [vmem:[#allocation8 + $0x580] sm:$0xff]
    %v481 = vld [vmem:[#allocation8 + $0x588] sm:$0xff]
    %v482 = vld [vmem:[#allocation8 + $0x590] sm:$0xff]
    %v483 = vld [vmem:[#allocation8 + $0x598] sm:$0xff]
    %v484 = vld [vmem:[#allocation8 + $0x5a0] sm:$0xff]
    %v485 = vld [vmem:[#allocation8 + $0x5a8] sm:$0xff]
    %v486 = vld [vmem:[#allocation8 + $0x5b0] sm:$0xff]
    %v487 = vld [vmem:[#allocation8 + $0x5b8] sm:$0xff]
    %v488 = vld [vmem:[#allocation8 + $0x5c0] sm:$0xff]
    %v489 = vld [vmem:[#allocation8 + $0x5c8] sm:$0xff]
    %v490 = vld [vmem:[#allocation8 + $0x5d0] sm:$0xff]
    %v491 = vld [vmem:[#allocation8 + $0x5d8] sm:$0xff]
    %v492 = vld [vmem:[#allocation8 + $0x5e0] sm:$0xff]
    %v493 = vld [vmem:[#allocation8 + $0x5e8] sm:$0xff]
    %v494 = vld [vmem:[#allocation8 + $0x5f0] sm:$0xff]
    %v495 = vld [vmem:[#allocation8 + $0x5f8] sm:$0xff]
    %v496 = vld [vmem:[#allocation8 + $0x600] sm:$0xff]
    %v497 = vld [vmem:[#allocation8 + $0x608] sm:$0xff]
    %v498 = vld [vmem:[#allocation8 + $0x610] sm:$0xff]
    %v499 = vld [vmem:[#allocation8 + $0x618] sm:$0xff]
    %v500 = vld [vmem:[#allocation8 + $0x620] sm:$0xff]
    %v501 = vld [vmem:[#allocation8 + $0x628] sm:$0xff]
    %v502 = vld [vmem:[#allocation8 + $0x630] sm:$0xff]
    %v503 = vld [vmem:[#allocation8 + $0x638] sm:$0xff]
    %v504 = vld [vmem:[#allocation8 + $0x640] sm:$0xff]
    %v505 = vld [vmem:[#allocation8 + $0x648] sm:$0xff]
    %v506 = vld [vmem:[#allocation8 + $0x650] sm:$0xff]
    %v507 = vld [vmem:[#allocation8 + $0x658] sm:$0xff]
    %v508 = vld [vmem:[#allocation8 + $0x660] sm:$0xff]
    %v509 = vld [vmem:[#allocation8 + $0x668] sm:$0xff]
    %v510 = vld [vmem:[#allocation8 + $0x670] sm:$0xff]
    %v511 = vld [vmem:[#allocation8 + $0x678] sm:$0xff]
    %v512 = vld [vmem:[#allocation8 + $0x680] sm:$0xff]
    %v513 = vld [vmem:[#allocation8 + $0x688] sm:$0xff]
    %v514 = vld [vmem:[#allocation8 + $0x690] sm:$0xff]
    %v515 = vld [vmem:[#allocation8 + $0x698] sm:$0xff]
    %v516 = vld [vmem:[#allocation8 + $0x6a0] sm:$0xff]
    %v517 = vld [vmem:[#allocation8 + $0x6a8] sm:$0xff]
    %v518 = vld [vmem:[#allocation8 + $0x6b0] sm:$0xff]
    %v519 = vld [vmem:[#allocation8 + $0x6b8] sm:$0xff]
    %v520 = vld [vmem:[#allocation8 + $0x6c0] sm:$0xff]
    %v521 = vld [vmem:[#allocation8 + $0x6c8] sm:$0xff]
    %v522 = vld [vmem:[#allocation8 + $0x6d0] sm:$0xff]
    %v523 = vld [vmem:[#allocation8 + $0x6d8] sm:$0xff]
    %v524 = vld [vmem:[#allocation8 + $0x6e0] sm:$0xff]
    %v525 = vld [vmem:[#allocation8 + $0x6e8] sm:$0xff]
    %v526 = vld [vmem:[#allocation8 + $0x6f0] sm:$0xff]
    %v527 = vld [vmem:[#allocation8 + $0x6f8] sm:$0xff]
    %v528 = vld [vmem:[#allocation8 + $0x700] sm:$0xff]
    %v529 = vld [vmem:[#allocation8 + $0x708] sm:$0xff]
    %v530 = vld [vmem:[#allocation8 + $0x710] sm:$0xff]
    %v531 = vld [vmem:[#allocation8 + $0x718] sm:$0xff]
    %v532 = vld [vmem:[#allocation8 + $0x720] sm:$0xff]
    %v533 = vld [vmem:[#allocation8 + $0x728] sm:$0xff]
    %v534 = vld [vmem:[#allocation8 + $0x730] sm:$0xff]
    %v535 = vld [vmem:[#allocation8 + $0x738] sm:$0xff]
    %v536 = vld [vmem:[#allocation8 + $0x740] sm:$0xff]
    %v537 = vld [vmem:[#allocation8 + $0x748] sm:$0xff]
    %v538 = vld [vmem:[#allocation8 + $0x750] sm:$0xff]
    %v539 = vld [vmem:[#allocation8 + $0x758] sm:$0xff]
    %v540 = vld [vmem:[#allocation8 + $0x760] sm:$0xff]
    %v541 = vld [vmem:[#allocation8 + $0x768] sm:$0xff]
    %v542 = vld [vmem:[#allocation8 + $0x770] sm:$0xff]
    %v543 = vld [vmem:[#allocation8 + $0x778] sm:$0xff]
    %v544 = vld [vmem:[#allocation8 + $0x780] sm:$0xff]
    %v545 = vld [vmem:[#allocation8 + $0x788] sm:$0xff]
    %v546 = vld [vmem:[#allocation8 + $0x790] sm:$0xff]
    %v547 = vld [vmem:[#allocation8 + $0x798] sm:$0xff]
    %v548 = vld [vmem:[#allocation8 + $0x7a0] sm:$0xff]
    %v549 = vld [vmem:[#allocation8 + $0x7a8] sm:$0xff]
    %v550 = vld [vmem:[#allocation8 + $0x7b0] sm:$0xff]
    %v551 = vld [vmem:[#allocation8 + $0x7b8] sm:$0xff]
    %v552 = vld [vmem:[#allocation8 + $0x7c0] sm:$0xff]
    %v553 = vld [vmem:[#allocation8 + $0x7c8] sm:$0xff]
    %v554 = vld [vmem:[#allocation8 + $0x7d0] sm:$0xff]
    %v555 = vld [vmem:[#allocation8 + $0x7d8] sm:$0xff]
    %v556 = vld [vmem:[#allocation8 + $0x7e0] sm:$0xff]
    %v557 = vld [vmem:[#allocation8 + $0x7e8] sm:$0xff]
    %v558 = vld [vmem:[#allocation8 + $0x7f0] sm:$0xff]
    %v559 = vld [vmem:[#allocation8 + $0x7f8] sm:$0xff]
    %v560 = vld [vmem:[#allocation8 + $0x800] sm:$0xff]
    %v561 = vld [vmem:[#allocation8 + $0x808] sm:$0xff]
    %v562 = vld [vmem:[#allocation8 + $0x810] sm:$0xff]
    %v563 = vld [vmem:[#allocation8 + $0x818] sm:$0xff]
    %v564 = vld [vmem:[#allocation8 + $0x820] sm:$0xff]
    %v565 = vld [vmem:[#allocation8 + $0x828] sm:$0xff]
    %v566 = vld [vmem:[#allocation8 + $0x830] sm:$0xff]
    %v567 = vld [vmem:[#allocation8 + $0x838] sm:$0xff]
    %v568 = vld [vmem:[#allocation8 + $0x840] sm:$0xff]
    %v569 = vld [vmem:[#allocation8 + $0x848] sm:$0xff]
    %v570 = vld [vmem:[#allocation8 + $0x850] sm:$0xff]
    %v571 = vld [vmem:[#allocation8 + $0x858] sm:$0xff]
    %v572 = vld [vmem:[#allocation8 + $0x860] sm:$0xff]
    %v573 = vld [vmem:[#allocation8 + $0x868] sm:$0xff]
    %v574 = vld [vmem:[#allocation8 + $0x870] sm:$0xff]
    %v575 = vld [vmem:[#allocation8 + $0x878] sm:$0xff]
    %v576 = vld [vmem:[#allocation8 + $0x880] sm:$0xff]
    %v577 = vld [vmem:[#allocation8 + $0x888] sm:$0xff]
    %v578 = vld [vmem:[#allocation8 + $0x890] sm:$0xff]
    %v579 = vld [vmem:[#allocation8 + $0x898] sm:$0xff]
    %v580 = vld [vmem:[#allocation8 + $0x8a0] sm:$0xff]
    %v581 = vld [vmem:[#allocation8 + $0x8a8] sm:$0xff]
    %v582 = vld [vmem:[#allocation8 + $0x8b0] sm:$0xff]
    %v583 = vld [vmem:[#allocation8 + $0x8b8] sm:$0xff]
    %v584 = vld [vmem:[#allocation8 + $0x8c0] sm:$0xff]
    %v585 = vld [vmem:[#allocation8 + $0x8c8] sm:$0xff]
    %v586 = vld [vmem:[#allocation8 + $0x8d0] sm:$0xff]
    %v587 = vld [vmem:[#allocation8 + $0x8d8] sm:$0xff]
    %v588 = vld [vmem:[#allocation8 + $0x8e0] sm:$0xff]
    %v589 = vld [vmem:[#allocation8 + $0x8e8] sm:$0xff]
    %v590 = vld [vmem:[#allocation8 + $0x8f0] sm:$0xff]
    %v591 = vld [vmem:[#allocation8 + $0x8f8] sm:$0xff]
    %v592 = vld [vmem:[#allocation8 + $0x900] sm:$0xff]
    %v593 = vld [vmem:[#allocation8 + $0x908] sm:$0xff]
    %v594 = vld [vmem:[#allocation8 + $0x910] sm:$0xff]
    %v595 = vld [vmem:[#allocation8 + $0x918] sm:$0xff]
    %v596 = vld [vmem:[#allocation8 + $0x920] sm:$0xff]
    %v597 = vld [vmem:[#allocation8 + $0x928] sm:$0xff]
    %v598 = vld [vmem:[#allocation8 + $0x930] sm:$0xff]
    %v599 = vld [vmem:[#allocation8 + $0x938] sm:$0xff]
    %v600 = vld [vmem:[#allocation8 + $0x940] sm:$0xff]
    %v601 = vld [vmem:[#allocation8 + $0x948] sm:$0xff]
    %v602 = vld [vmem:[#allocation8 + $0x950] sm:$0xff]
    %v603 = vld [vmem:[#allocation8 + $0x958] sm:$0xff]
    %v604 = vld [vmem:[#allocation8 + $0x960] sm:$0xff]
    %v605 = vld [vmem:[#allocation8 + $0x968] sm:$0xff]
    %v606 = vld [vmem:[#allocation8 + $0x970] sm:$0xff]
    %v607 = vld [vmem:[#allocation8 + $0x978] sm:$0xff]
    %v608 = vld [vmem:[#allocation8 + $0x980] sm:$0xff]
    %v609 = vld [vmem:[#allocation8 + $0x988] sm:$0xff]
    %v610 = vld [vmem:[#allocation8 + $0x990] sm:$0xff]
    %v611 = vld [vmem:[#allocation8 + $0x998] sm:$0xff]
    %v612 = vld [vmem:[#allocation8 + $0x9a0] sm:$0xff]
    %v613 = vld [vmem:[#allocation8 + $0x9a8] sm:$0xff]
    %v614 = vld [vmem:[#allocation8 + $0x9b0] sm:$0xff]
    %v615 = vld [vmem:[#allocation8 + $0x9b8] sm:$0xff]
    %v616 = vld [vmem:[#allocation8 + $0x9c0] sm:$0xff]
    %v617 = vld [vmem:[#allocation8 + $0x9c8] sm:$0xff]
    %v618 = vld [vmem:[#allocation8 + $0x9d0] sm:$0xff]
    %v619 = vld [vmem:[#allocation8 + $0x9d8] sm:$0xff]
    %v620 = vld [vmem:[#allocation8 + $0x9e0] sm:$0xff]
    %v621 = vld [vmem:[#allocation8 + $0x9e8] sm:$0xff]
    %v622 = vld [vmem:[#allocation8 + $0x9f0] sm:$0xff]
    %v623 = vld [vmem:[#allocation8 + $0x9f8] sm:$0xff]
    %v624 = vld [vmem:[#allocation8 + $0xa00] sm:$0xff]
    %v625 = vld [vmem:[#allocation8 + $0xa08] sm:$0xff]
    %v626 = vld [vmem:[#allocation8 + $0xa10] sm:$0xff]
    %v627 = vld [vmem:[#allocation8 + $0xa18] sm:$0xff]
    %v628 = vld [vmem:[#allocation8 + $0xa20] sm:$0xff]
    %v629 = vld [vmem:[#allocation8 + $0xa28] sm:$0xff]
    %v630 = vld [vmem:[#allocation8 + $0xa30] sm:$0xff]
    %v631 = vld [vmem:[#allocation8 + $0xa38] sm:$0xff]
    %v632 = vld [vmem:[#allocation8 + $0xa40] sm:$0xff]
    %v633 = vld [vmem:[#allocation8 + $0xa48] sm:$0xff]
    %v634 = vld [vmem:[#allocation8 + $0xa50] sm:$0xff]
    %v635 = vld [vmem:[#allocation8 + $0xa58] sm:$0xff]
    %v636 = vld [vmem:[#allocation8 + $0xa60] sm:$0xff]
    %v637 = vld [vmem:[#allocation8 + $0xa68] sm:$0xff]
    %v638 = vld [vmem:[#allocation8 + $0xa70] sm:$0xff]
    %v639 = vld [vmem:[#allocation8 + $0xa78] sm:$0xff]
    %v640 = vld [vmem:[#allocation8 + $0xa80] sm:$0xff]
    %v641 = vld [vmem:[#allocation8 + $0xa88] sm:$0xff]
    %v642 = vld [vmem:[#allocation8 + $0xa90] sm:$0xff]
    %v643 = vld [vmem:[#allocation8 + $0xa98] sm:$0xff]
    %v644 = vld [vmem:[#allocation8 + $0xaa0] sm:$0xff]
    %v645 = vld [vmem:[#allocation8 + $0xaa8] sm:$0xff]
    %v646 = vld [vmem:[#allocation8 + $0xab0] sm:$0xff]
    %v647 = vld [vmem:[#allocation8 + $0xab8] sm:$0xff]
    %v648 = vld [vmem:[#allocation8 + $0xac0] sm:$0xff]
    %v649 = vld [vmem:[#allocation8 + $0xac8] sm:$0xff]
    %v650 = vld [vmem:[#allocation8 + $0xad0] sm:$0xff]
    %v651 = vld [vmem:[#allocation8 + $0xad8] sm:$0xff]
    %v652 = vld [vmem:[#allocation8 + $0xae0] sm:$0xff]
    %v653 = vld [vmem:[#allocation8 + $0xae8] sm:$0xff]
    %v654 = vld [vmem:[#allocation8 + $0xaf0] sm:$0xff]
    %v655 = vld [vmem:[#allocation8 + $0xaf8] sm:$0xff]
    %v656 = vld [vmem:[#allocation8 + $0xb00] sm:$0xff]
    %v657 = vld [vmem:[#allocation8 + $0xb08] sm:$0xff]
    %v658 = vld [vmem:[#allocation8 + $0xb10] sm:$0xff]
    %v659 = vld [vmem:[#allocation8 + $0xb18] sm:$0xff]
    %v660 = vld [vmem:[#allocation8 + $0xb20] sm:$0xff]
    %v661 = vld [vmem:[#allocation8 + $0xb28] sm:$0xff]
    %v662 = vld [vmem:[#allocation8 + $0xb30] sm:$0xff]
    %v663 = vld [vmem:[#allocation8 + $0xb38] sm:$0xff]
    %v664 = vld [vmem:[#allocation8 + $0xb40] sm:$0xff]
    %v665 = vld [vmem:[#allocation8 + $0xb48] sm:$0xff]
    %v666 = vld [vmem:[#allocation8 + $0xb50] sm:$0xff]
    %v667 = vld [vmem:[#allocation8 + $0xb58] sm:$0xff]
    %v668 = vld [vmem:[#allocation8 + $0xb60] sm:$0xff]
    %v669 = vld [vmem:[#allocation8 + $0xb68] sm:$0xff]
    %v670 = vld [vmem:[#allocation8 + $0xb70] sm:$0xff]
    %v671 = vld [vmem:[#allocation8 + $0xb78] sm:$0xff]
    %v672 = vld [vmem:[#allocation8 + $0xb80] sm:$0xff]
    %v673 = vld [vmem:[#allocation8 + $0xb88] sm:$0xff]
    %v674 = vld [vmem:[#allocation8 + $0xb90] sm:$0xff]
    %v675 = vld [vmem:[#allocation8 + $0xb98] sm:$0xff]
    %v676 = vld [vmem:[#allocation8 + $0xba0] sm:$0xff]
    %v677 = vld [vmem:[#allocation8 + $0xba8] sm:$0xff]
    %v678 = vld [vmem:[#allocation8 + $0xbb0] sm:$0xff]
    %v679 = vld [vmem:[#allocation8 + $0xbb8] sm:$0xff]
    %v680 = vld [vmem:[#allocation8 + $0xbc0] sm:$0xff]
    %v681 = vld [vmem:[#allocation8 + $0xbc8] sm:$0xff]
    %v682 = vld [vmem:[#allocation8 + $0xbd0] sm:$0xff]
    %v683 = vld [vmem:[#allocation8 + $0xbd8] sm:$0xff]
    %v684 = vld [vmem:[#allocation8 + $0xbe0] sm:$0xff]
    %v685 = vld [vmem:[#allocation8 + $0xbe8] sm:$0xff]
    %v686 = vld [vmem:[#allocation8 + $0xbf0] sm:$0xff]
    %v687 = vld [vmem:[#allocation8 + $0xbf8] sm:$0xff]
    %v688 = vld [vmem:[#allocation8 + $0xc00] sm:$0xff]
    %v689 = vld [vmem:[#allocation8 + $0xc08] sm:$0xff]
    %v690 = vld [vmem:[#allocation8 + $0xc10] sm:$0xff]
    %v691 = vld [vmem:[#allocation8 + $0xc18] sm:$0xff]
    %v692 = vld [vmem:[#allocation8 + $0xc20] sm:$0xff]
    %v693 = vld [vmem:[#allocation8 + $0xc28] sm:$0xff]
    %v694 = vld [vmem:[#allocation8 + $0xc30] sm:$0xff]
    %v695 = vld [vmem:[#allocation8 + $0xc38] sm:$0xff]
    %v696 = vld [vmem:[#allocation8 + $0xc40] sm:$0xff]
    %v697 = vld [vmem:[#allocation8 + $0xc48] sm:$0xff]
    %v698 = vld [vmem:[#allocation8 + $0xc50] sm:$0xff]
    %v699 = vld [vmem:[#allocation8 + $0xc58] sm:$0xff]
    %v700 = vld [vmem:[#allocation8 + $0xc60] sm:$0xff]
    %v701 = vld [vmem:[#allocation8 + $0xc68] sm:$0xff]
    %v702 = vld [vmem:[#allocation8 + $0xc70] sm:$0xff]
    %v703 = vld [vmem:[#allocation8 + $0xc78] sm:$0xff]
    %v704 = vld [vmem:[#allocation8 + $0xc80] sm:$0xff]
    %v705 = vld [vmem:[#allocation8 + $0xc88] sm:$0xff]
    %v706 = vld [vmem:[#allocation8 + $0xc90] sm:$0xff]
    %v707 = vld [vmem:[#allocation8 + $0xc98] sm:$0xff]
    %v708 = vld [vmem:[#allocation8 + $0xca0] sm:$0xff]
    %v709 = vld [vmem:[#allocation8 + $0xca8] sm:$0xff]
    %v710 = vld [vmem:[#allocation8 + $0xcb0] sm:$0xff]
    %v711 = vld [vmem:[#allocation8 + $0xcb8] sm:$0xff]
    %v712 = vld [vmem:[#allocation8 + $0xcc0] sm:$0xff]
    %v713 = vld [vmem:[#allocation8 + $0xcc8] sm:$0xff]
    %v714 = vld [vmem:[#allocation8 + $0xcd0] sm:$0xff]
    %v715 = vld [vmem:[#allocation8 + $0xcd8] sm:$0xff]
    %v716 = vld [vmem:[#allocation8 + $0xce0] sm:$0xff]
    %v717 = vld [vmem:[#allocation8 + $0xce8] sm:$0xff]
    %v718 = vld [vmem:[#allocation8 + $0xcf0] sm:$0xff]
    %v719 = vld [vmem:[#allocation8 + $0xcf8] sm:$0xff]
    %v720 = vld [vmem:[#allocation8 + $0xd00] sm:$0xff]
    %v721 = vld [vmem:[#allocation8 + $0xd08] sm:$0xff]
    %v722 = vld [vmem:[#allocation8 + $0xd10] sm:$0xff]
    %v723 = vld [vmem:[#allocation8 + $0xd18] sm:$0xff]
    %v724 = vld [vmem:[#allocation8 + $0xd20] sm:$0xff]
    %v725 = vld [vmem:[#allocation8 + $0xd28] sm:$0xff]
    %v726 = vld [vmem:[#allocation8 + $0xd30] sm:$0xff]
    %v727 = vld [vmem:[#allocation8 + $0xd38] sm:$0xff]
    %v728 = vld [vmem:[#allocation8 + $0xd40] sm:$0xff]
    %v729 = vld [vmem:[#allocation8 + $0xd48] sm:$0xff]
    %v730 = vld [vmem:[#allocation8 + $0xd50] sm:$0xff]
    %v731 = vld [vmem:[#allocation8 + $0xd58] sm:$0xff]
    %v732 = vld [vmem:[#allocation8 + $0xd60] sm:$0xff]
    %v733 = vld [vmem:[#allocation8 + $0xd68] sm:$0xff]
    %v734 = vld [vmem:[#allocation8 + $0xd70] sm:$0xff]
    %v735 = vld [vmem:[#allocation8 + $0xd78] sm:$0xff]
    %v736 = vld [vmem:[#allocation8 + $0xd80] sm:$0xff]
    %v737 = vld [vmem:[#allocation8 + $0xd88] sm:$0xff]
    %v738 = vld [vmem:[#allocation8 + $0xd90] sm:$0xff]
    %v739 = vld [vmem:[#allocation8 + $0xd98] sm:$0xff]
    %v740 = vld [vmem:[#allocation8 + $0xda0] sm:$0xff]
    %v741 = vld [vmem:[#allocation8 + $0xda8] sm:$0xff]
    %v742 = vld [vmem:[#allocation8 + $0xdb0] sm:$0xff]
    %v743 = vld [vmem:[#allocation8 + $0xdb8] sm:$0xff]
    %v744 = vld [vmem:[#allocation8 + $0xdc0] sm:$0xff]
    %v745 = vld [vmem:[#allocation8 + $0xdc8] sm:$0xff]
    %v746 = vld [vmem:[#allocation8 + $0xdd0] sm:$0xff]
    %v747 = vld [vmem:[#allocation8 + $0xdd8] sm:$0xff]
    %v748 = vld [vmem:[#allocation8 + $0xde0] sm:$0xff]
    %v749 = vld [vmem:[#allocation8 + $0xde8] sm:$0xff]
    %v750 = vld [vmem:[#allocation8 + $0xdf0] sm:$0xff]
    %v751 = vld [vmem:[#allocation8 + $0xdf8] sm:$0xff]
    %v752 = vld [vmem:[#allocation8 + $0xe00] sm:$0xff]
    %v753 = vld [vmem:[#allocation8 + $0xe08] sm:$0xff]
    %v754 = vld [vmem:[#allocation8 + $0xe10] sm:$0xff]
    %v755 = vld [vmem:[#allocation8 + $0xe18] sm:$0xff]
    %v756 = vld [vmem:[#allocation8 + $0xe20] sm:$0xff]
    %v757 = vld [vmem:[#allocation8 + $0xe28] sm:$0xff]
    %v758 = vld [vmem:[#allocation8 + $0xe30] sm:$0xff]
    %v759 = vld [vmem:[#allocation8 + $0xe38] sm:$0xff]
    %v760 = vld [vmem:[#allocation8 + $0xe40] sm:$0xff]
    %v761 = vld [vmem:[#allocation8 + $0xe48] sm:$0xff]
    %v762 = vld [vmem:[#allocation8 + $0xe50] sm:$0xff]
    %v763 = vld [vmem:[#allocation8 + $0xe58] sm:$0xff]
    %v764 = vld [vmem:[#allocation8 + $0xe60] sm:$0xff]
    %v765 = vld [vmem:[#allocation8 + $0xe68] sm:$0xff]
    %v766 = vld [vmem:[#allocation8 + $0xe70] sm:$0xff]
    %v767 = vld [vmem:[#allocation8 + $0xe78] sm:$0xff]
    %v768 = vld [vmem:[#allocation8 + $0xe80] sm:$0xff]
    %v769 = vld [vmem:[#allocation8 + $0xe88] sm:$0xff]
    %v770 = vld [vmem:[#allocation8 + $0xe90] sm:$0xff]
    %v771 = vld [vmem:[#allocation8 + $0xe98] sm:$0xff]
    %v772 = vld [vmem:[#allocation8 + $0xea0] sm:$0xff]
    %v773 = vld [vmem:[#allocation8 + $0xea8] sm:$0xff]
    %v774 = vld [vmem:[#allocation8 + $0xeb0] sm:$0xff]
    %v775 = vld [vmem:[#allocation8 + $0xeb8] sm:$0xff]
    %v776 = vld [vmem:[#allocation8 + $0xec0] sm:$0xff]
    %v777 = vld [vmem:[#allocation8 + $0xec8] sm:$0xff]
    %v778 = vld [vmem:[#allocation8 + $0xed0] sm:$0xff]
    %v779 = vld [vmem:[#allocation8 + $0xed8] sm:$0xff]
    %v780 = vld [vmem:[#allocation8 + $0xee0] sm:$0xff]
    %v781 = vld [vmem:[#allocation8 + $0xee8] sm:$0xff]
    %v782 = vld [vmem:[#allocation8 + $0xef0] sm:$0xff]
    %v783 = vld [vmem:[#allocation8 + $0xef8] sm:$0xff]
    %v784 = vld [vmem:[#allocation8 + $0xf00] sm:$0xff]
    %v785 = vld [vmem:[#allocation8 + $0xf08] sm:$0xff]
    %v786 = vld [vmem:[#allocation8 + $0xf10] sm:$0xff]
    %v787 = vld [vmem:[#allocation8 + $0xf18] sm:$0xff]
    %v788 = vld [vmem:[#allocation8 + $0xf20] sm:$0xff]
    %v789 = vld [vmem:[#allocation8 + $0xf28] sm:$0xff]
    %v790 = vld [vmem:[#allocation8 + $0xf30] sm:$0xff]
    %v791 = vld [vmem:[#allocation8 + $0xf38] sm:$0xff]
    %v792 = vld [vmem:[#allocation8 + $0xf40] sm:$0xff]
    %v793 = vld [vmem:[#allocation8 + $0xf48] sm:$0xff]
    %v794 = vld [vmem:[#allocation8 + $0xf50] sm:$0xff]
    %v795 = vld [vmem:[#allocation8 + $0xf58] sm:$0xff]
    %v796 = vld [vmem:[#allocation8 + $0xf60] sm:$0xff]
    %v797 = vld [vmem:[#allocation8 + $0xf68] sm:$0xff]
    %v798 = vld [vmem:[#allocation8 + $0xf70] sm:$0xff]
    %v799 = vld [vmem:[#allocation8 + $0xf78] sm:$0xff]
    %v800 = vld [vmem:[#allocation8 + $0xf80] sm:$0xff]
    %v801 = vld [vmem:[#allocation8 + $0xf88] sm:$0xff]
    %v802 = vld [vmem:[#allocation8 + $0xf90] sm:$0xff]
    %v803 = vld [vmem:[#allocation8 + $0xf98] sm:$0xff]
    %v804 = vld [vmem:[#allocation8 + $0xfa0] sm:$0xff]
    %v805 = vld [vmem:[#allocation8 + $0xfa8] sm:$0xff]
    %v806 = vld [vmem:[#allocation8 + $0xfb0] sm:$0xff]
    %v807 = vld [vmem:[#allocation8 + $0xfb8] sm:$0xff]
    %v808 = vld [vmem:[#allocation8 + $0xfc0] sm:$0xff]
    %v809 = vld [vmem:[#allocation8 + $0xfc8] sm:$0xff]
    %v810 = vld [vmem:[#allocation8 + $0xfd0] sm:$0xff]
    %v811 = vld [vmem:[#allocation8 + $0xfd8] sm:$0xff]
    %v812 = vld [vmem:[#allocation8 + $0xfe0] sm:$0xff]
    %v813 = vld [vmem:[#allocation8 + $0xfe8] sm:$0xff]
    %v814 = vld [vmem:[#allocation8 + $0xff0] sm:$0xff]
    %v815 = vld [vmem:[#allocation8 + $0xff8] sm:$0xff]
    %v816 = vld [vmem:[#allocation10] sm:$0xf]
    %v818 = vlaneseq
    %v819 = vshrl.u32 %v818, 7
    %v820 = vsub.s32 0, %v819
    %v821 = vrot.slane %v816, %v820
    %v822 = vlaneseq
    %v823 = vshrl.u32 %v822, 7
    %v824 = vsub.s32 1, %v823
    %v825 = vrot.slane %v816, %v824
    %v826 = vlaneseq
    %v827 = vshrl.u32 %v826, 7
    %v828 = vsub.s32 2, %v827
    %v829 = vrot.slane %v816, %v828
    %v830 = vlaneseq
    %v831 = vshrl.u32 %v830, 7
    %v832 = vsub.s32 3, %v831
    %v833 = vrot.slane %v816, %v832
    %v1350 = vunpack.c.l.b16 %v304
    %v1351 = vunpack.c.h.b16 %v304
    %v1352 = vunpack.c.l.b16 %v305
    %v1353 = vunpack.c.h.b16 %v305
    %v1354 = vunpack.c.l.b16 %v306
    %v1355 = vunpack.c.h.b16 %v306
    %v1356 = vunpack.c.l.b16 %v307
    %v1357 = vunpack.c.h.b16 %v307
    %v1358 = vunpack.c.l.b16 %v308
    %v1359 = vunpack.c.h.b16 %v308
    %v1360 = vunpack.c.l.b16 %v309
    %v1361 = vunpack.c.h.b16 %v309
    %v1362 = vunpack.c.l.b16 %v310
    %v1363 = vunpack.c.h.b16 %v310
    %v1364 = vunpack.c.l.b16 %v311
    %v1365 = vunpack.c.h.b16 %v311
    %v1366 = vunpack.c.l.b16 %v312
    %v1367 = vunpack.c.h.b16 %v312
    %v1368 = vunpack.c.l.b16 %v313
    %v1369 = vunpack.c.h.b16 %v313
    %v1370 = vunpack.c.l.b16 %v314
    %v1371 = vunpack.c.h.b16 %v314
    %v1372 = vunpack.c.l.b16 %v315
    %v1373 = vunpack.c.h.b16 %v315
    %v1374 = vunpack.c.l.b16 %v316
    %v1375 = vunpack.c.h.b16 %v316
    %v1376 = vunpack.c.l.b16 %v317
    %v1377 = vunpack.c.h.b16 %v317
    %v1378 = vunpack.c.l.b16 %v318
    %v1379 = vunpack.c.h.b16 %v318
    %v1380 = vunpack.c.l.b16 %v319
    %v1381 = vunpack.c.h.b16 %v319
    %v1382 = vunpack.c.l.b16 %v320
    %v1383 = vunpack.c.h.b16 %v320
    %v1384 = vunpack.c.l.b16 %v321
    %v1385 = vunpack.c.h.b16 %v321
    %v1386 = vunpack.c.l.b16 %v322
    %v1387 = vunpack.c.h.b16 %v322
    %v1388 = vunpack.c.l.b16 %v323
    %v1389 = vunpack.c.h.b16 %v323
    %v1390 = vunpack.c.l.b16 %v324
    %v1391 = vunpack.c.h.b16 %v324
    %v1392 = vunpack.c.l.b16 %v325
    %v1393 = vunpack.c.h.b16 %v325
    %v1394 = vunpack.c.l.b16 %v326
    %v1395 = vunpack.c.h.b16 %v326
    %v1396 = vunpack.c.l.b16 %v327
    %v1397 = vunpack.c.h.b16 %v327
    %v1398 = vunpack.c.l.b16 %v328
    %v1399 = vunpack.c.h.b16 %v328
    %v1400 = vunpack.c.l.b16 %v329
    %v1401 = vunpack.c.h.b16 %v329
    %v1402 = vunpack.c.l.b16 %v330
    %v1403 = vunpack.c.h.b16 %v330
    %v1404 = vunpack.c.l.b16 %v331
    %v1405 = vunpack.c.h.b16 %v331
    %v1406 = vunpack.c.l.b16 %v332
    %v1407 = vunpack.c.h.b16 %v332
    %v1408 = vunpack.c.l.b16 %v333
    %v1409 = vunpack.c.h.b16 %v333
    %v1410 = vunpack.c.l.b16 %v334
    %v1411 = vunpack.c.h.b16 %v334
    %v1412 = vunpack.c.l.b16 %v335
    %v1413 = vunpack.c.h.b16 %v335
    %v1414 = vunpack.c.l.b16 %v336
    %v1415 = vunpack.c.h.b16 %v336
    %v1416 = vunpack.c.l.b16 %v337
    %v1417 = vunpack.c.h.b16 %v337
    %v1418 = vunpack.c.l.b16 %v338
    %v1419 = vunpack.c.h.b16 %v338
    %v1420 = vunpack.c.l.b16 %v339
    %v1421 = vunpack.c.h.b16 %v339
    %v1422 = vunpack.c.l.b16 %v340
    %v1423 = vunpack.c.h.b16 %v340
    %v1424 = vunpack.c.l.b16 %v341
    %v1425 = vunpack.c.h.b16 %v341
    %v1426 = vunpack.c.l.b16 %v342
    %v1427 = vunpack.c.h.b16 %v342
    %v1428 = vunpack.c.l.b16 %v343
    %v1429 = vunpack.c.h.b16 %v343
    %v1430 = vunpack.c.l.b16 %v344
    %v1431 = vunpack.c.h.b16 %v344
    %v1432 = vunpack.c.l.b16 %v345
    %v1433 = vunpack.c.h.b16 %v345
    %v1434 = vunpack.c.l.b16 %v346
    %v1435 = vunpack.c.h.b16 %v346
    %v1436 = vunpack.c.l.b16 %v347
    %v1437 = vunpack.c.h.b16 %v347
    %v1438 = vunpack.c.l.b16 %v348
    %v1439 = vunpack.c.h.b16 %v348
    %v1440 = vunpack.c.l.b16 %v349
    %v1441 = vunpack.c.h.b16 %v349
    %v1442 = vunpack.c.l.b16 %v350
    %v1443 = vunpack.c.h.b16 %v350
    %v1444 = vunpack.c.l.b16 %v351
    %v1445 = vunpack.c.h.b16 %v351
    %v1446 = vunpack.c.l.b16 %v352
    %v1447 = vunpack.c.h.b16 %v352
    %v1448 = vunpack.c.l.b16 %v353
    %v1449 = vunpack.c.h.b16 %v353
    %v1450 = vunpack.c.l.b16 %v354
    %v1451 = vunpack.c.h.b16 %v354
    %v1452 = vunpack.c.l.b16 %v355
    %v1453 = vunpack.c.h.b16 %v355
    %v1454 = vunpack.c.l.b16 %v356
    %v1455 = vunpack.c.h.b16 %v356
    %v1456 = vunpack.c.l.b16 %v357
    %v1457 = vunpack.c.h.b16 %v357
    %v1458 = vunpack.c.l.b16 %v358
    %v1459 = vunpack.c.h.b16 %v358
    %v1460 = vunpack.c.l.b16 %v359
    %v1461 = vunpack.c.h.b16 %v359
    %v1462 = vunpack.c.l.b16 %v360
    %v1463 = vunpack.c.h.b16 %v360
    %v1464 = vunpack.c.l.b16 %v361
    %v1465 = vunpack.c.h.b16 %v361
    %v1466 = vunpack.c.l.b16 %v362
    %v1467 = vunpack.c.h.b16 %v362
    %v1468 = vunpack.c.l.b16 %v363
    %v1469 = vunpack.c.h.b16 %v363
    %v1470 = vunpack.c.l.b16 %v364
    %v1471 = vunpack.c.h.b16 %v364
    %v1472 = vunpack.c.l.b16 %v365
    %v1473 = vunpack.c.h.b16 %v365
    %v1474 = vunpack.c.l.b16 %v366
    %v1475 = vunpack.c.h.b16 %v366
    %v1476 = vunpack.c.l.b16 %v367
    %v1477 = vunpack.c.h.b16 %v367
    %v1478 = vunpack.c.l.b16 %v368
    %v1479 = vunpack.c.h.b16 %v368
    %v1480 = vunpack.c.l.b16 %v369
    %v1481 = vunpack.c.h.b16 %v369
    %v1482 = vunpack.c.l.b16 %v370
    %v1483 = vunpack.c.h.b16 %v370
    %v1484 = vunpack.c.l.b16 %v371
    %v1485 = vunpack.c.h.b16 %v371
    %v1486 = vunpack.c.l.b16 %v372
    %v1487 = vunpack.c.h.b16 %v372
    %v1488 = vunpack.c.l.b16 %v373
    %v1489 = vunpack.c.h.b16 %v373
    %v1490 = vunpack.c.l.b16 %v374
    %v1491 = vunpack.c.h.b16 %v374
    %v1492 = vunpack.c.l.b16 %v375
    %v1493 = vunpack.c.h.b16 %v375
    %v1494 = vunpack.c.l.b16 %v376
    %v1495 = vunpack.c.h.b16 %v376
    %v1496 = vunpack.c.l.b16 %v377
    %v1497 = vunpack.c.h.b16 %v377
    %v1498 = vunpack.c.l.b16 %v378
    %v1499 = vunpack.c.h.b16 %v378
    %v1500 = vunpack.c.l.b16 %v379
    %v1501 = vunpack.c.h.b16 %v379
    %v1502 = vunpack.c.l.b16 %v380
    %v1503 = vunpack.c.h.b16 %v380
    %v1504 = vunpack.c.l.b16 %v381
    %v1505 = vunpack.c.h.b16 %v381
    %v1506 = vunpack.c.l.b16 %v382
    %v1507 = vunpack.c.h.b16 %v382
    %v1508 = vunpack.c.l.b16 %v383
    %v1509 = vunpack.c.h.b16 %v383
    %v1510 = vunpack.c.l.b16 %v384
    %v1511 = vunpack.c.h.b16 %v384
    %v1512 = vunpack.c.l.b16 %v385
    %v1513 = vunpack.c.h.b16 %v385
    %v1514 = vunpack.c.l.b16 %v386
    %v1515 = vunpack.c.h.b16 %v386
    %v1516 = vunpack.c.l.b16 %v387
    %v1517 = vunpack.c.h.b16 %v387
    %v1518 = vunpack.c.l.b16 %v388
    %v1519 = vunpack.c.h.b16 %v388
    %v1520 = vunpack.c.l.b16 %v389
    %v1521 = vunpack.c.h.b16 %v389
    %v1522 = vunpack.c.l.b16 %v390
    %v1523 = vunpack.c.h.b16 %v390
    %v1524 = vunpack.c.l.b16 %v391
    %v1525 = vunpack.c.h.b16 %v391
    %v1526 = vunpack.c.l.b16 %v392
    %v1527 = vunpack.c.h.b16 %v392
    %v1528 = vunpack.c.l.b16 %v393
    %v1529 = vunpack.c.h.b16 %v393
    %v1530 = vunpack.c.l.b16 %v394
    %v1531 = vunpack.c.h.b16 %v394
    %v1532 = vunpack.c.l.b16 %v395
    %v1533 = vunpack.c.h.b16 %v395
    %v1534 = vunpack.c.l.b16 %v396
    %v1535 = vunpack.c.h.b16 %v396
    %v1536 = vunpack.c.l.b16 %v397
    %v1537 = vunpack.c.h.b16 %v397
    %v1538 = vunpack.c.l.b16 %v398
    %v1539 = vunpack.c.h.b16 %v398
    %v1540 = vunpack.c.l.b16 %v399
    %v1541 = vunpack.c.h.b16 %v399
    %v1542 = vunpack.c.l.b16 %v400
    %v1543 = vunpack.c.h.b16 %v400
    %v1544 = vunpack.c.l.b16 %v401
    %v1545 = vunpack.c.h.b16 %v401
    %v1546 = vunpack.c.l.b16 %v402
    %v1547 = vunpack.c.h.b16 %v402
    %v1548 = vunpack.c.l.b16 %v403
    %v1549 = vunpack.c.h.b16 %v403
    %v1550 = vunpack.c.l.b16 %v404
    %v1551 = vunpack.c.h.b16 %v404
    %v1552 = vunpack.c.l.b16 %v405
    %v1553 = vunpack.c.h.b16 %v405
    %v1554 = vunpack.c.l.b16 %v406
    %v1555 = vunpack.c.h.b16 %v406
    %v1556 = vunpack.c.l.b16 %v407
    %v1557 = vunpack.c.h.b16 %v407
    %v1558 = vunpack.c.l.b16 %v408
    %v1559 = vunpack.c.h.b16 %v408
    %v1560 = vunpack.c.l.b16 %v409
    %v1561 = vunpack.c.h.b16 %v409
    %v1562 = vunpack.c.l.b16 %v410
    %v1563 = vunpack.c.h.b16 %v410
    %v1564 = vunpack.c.l.b16 %v411
    %v1565 = vunpack.c.h.b16 %v411
    %v1566 = vunpack.c.l.b16 %v412
    %v1567 = vunpack.c.h.b16 %v412
    %v1568 = vunpack.c.l.b16 %v413
    %v1569 = vunpack.c.h.b16 %v413
    %v1570 = vunpack.c.l.b16 %v414
    %v1571 = vunpack.c.h.b16 %v414
    %v1572 = vunpack.c.l.b16 %v415
    %v1573 = vunpack.c.h.b16 %v415
    %v1574 = vunpack.c.l.b16 %v416
    %v1575 = vunpack.c.h.b16 %v416
    %v1576 = vunpack.c.l.b16 %v417
    %v1577 = vunpack.c.h.b16 %v417
    %v1578 = vunpack.c.l.b16 %v418
    %v1579 = vunpack.c.h.b16 %v418
    %v1580 = vunpack.c.l.b16 %v419
    %v1581 = vunpack.c.h.b16 %v419
    %v1582 = vunpack.c.l.b16 %v420
    %v1583 = vunpack.c.h.b16 %v420
    %v1584 = vunpack.c.l.b16 %v421
    %v1585 = vunpack.c.h.b16 %v421
    %v1586 = vunpack.c.l.b16 %v422
    %v1587 = vunpack.c.h.b16 %v422
    %v1588 = vunpack.c.l.b16 %v423
    %v1589 = vunpack.c.h.b16 %v423
    %v1590 = vunpack.c.l.b16 %v424
    %v1591 = vunpack.c.h.b16 %v424
    %v1592 = vunpack.c.l.b16 %v425
    %v1593 = vunpack.c.h.b16 %v425
    %v1594 = vunpack.c.l.b16 %v426
    %v1595 = vunpack.c.h.b16 %v426
    %v1596 = vunpack.c.l.b16 %v427
    %v1597 = vunpack.c.h.b16 %v427
    %v1598 = vunpack.c.l.b16 %v428
    %v1599 = vunpack.c.h.b16 %v428
    %v1600 = vunpack.c.l.b16 %v429
    %v1601 = vunpack.c.h.b16 %v429
    %v1602 = vunpack.c.l.b16 %v430
    %v1603 = vunpack.c.h.b16 %v430
    %v1604 = vunpack.c.l.b16 %v431
    %v1605 = vunpack.c.h.b16 %v431
    %v1606 = vunpack.c.l.b16 %v432
    %v1607 = vunpack.c.h.b16 %v432
    %v1608 = vunpack.c.l.b16 %v433
    %v1609 = vunpack.c.h.b16 %v433
    %v1610 = vunpack.c.l.b16 %v434
    %v1611 = vunpack.c.h.b16 %v434
    %v1612 = vunpack.c.l.b16 %v435
    %v1613 = vunpack.c.h.b16 %v435
    %v1614 = vunpack.c.l.b16 %v436
    %v1615 = vunpack.c.h.b16 %v436
    %v1616 = vunpack.c.l.b16 %v437
    %v1617 = vunpack.c.h.b16 %v437
    %v1618 = vunpack.c.l.b16 %v438
    %v1619 = vunpack.c.h.b16 %v438
    %v1620 = vunpack.c.l.b16 %v439
    %v1621 = vunpack.c.h.b16 %v439
    %v1622 = vunpack.c.l.b16 %v440
    %v1623 = vunpack.c.h.b16 %v440
    %v1624 = vunpack.c.l.b16 %v441
    %v1625 = vunpack.c.h.b16 %v441
    %v1626 = vunpack.c.l.b16 %v442
    %v1627 = vunpack.c.h.b16 %v442
    %v1628 = vunpack.c.l.b16 %v443
    %v1629 = vunpack.c.h.b16 %v443
    %v1630 = vunpack.c.l.b16 %v444
    %v1631 = vunpack.c.h.b16 %v444
    %v1632 = vunpack.c.l.b16 %v445
    %v1633 = vunpack.c.h.b16 %v445
    %v1634 = vunpack.c.l.b16 %v446
    %v1635 = vunpack.c.h.b16 %v446
    %v1636 = vunpack.c.l.b16 %v447
    %v1637 = vunpack.c.h.b16 %v447
    %v1638 = vunpack.c.l.b16 %v448
    %v1639 = vunpack.c.h.b16 %v448
    %v1640 = vunpack.c.l.b16 %v449
    %v1641 = vunpack.c.h.b16 %v449
    %v1642 = vunpack.c.l.b16 %v450
    %v1643 = vunpack.c.h.b16 %v450
    %v1644 = vunpack.c.l.b16 %v451
    %v1645 = vunpack.c.h.b16 %v451
    %v1646 = vunpack.c.l.b16 %v452
    %v1647 = vunpack.c.h.b16 %v452
    %v1648 = vunpack.c.l.b16 %v453
    %v1649 = vunpack.c.h.b16 %v453
    %v1650 = vunpack.c.l.b16 %v454
    %v1651 = vunpack.c.h.b16 %v454
    %v1652 = vunpack.c.l.b16 %v455
    %v1653 = vunpack.c.h.b16 %v455
    %v1654 = vunpack.c.l.b16 %v456
    %v1655 = vunpack.c.h.b16 %v456
    %v1656 = vunpack.c.l.b16 %v457
    %v1657 = vunpack.c.h.b16 %v457
    %v1658 = vunpack.c.l.b16 %v458
    %v1659 = vunpack.c.h.b16 %v458
    %v1660 = vunpack.c.l.b16 %v459
    %v1661 = vunpack.c.h.b16 %v459
    %v1662 = vunpack.c.l.b16 %v460
    %v1663 = vunpack.c.h.b16 %v460
    %v1664 = vunpack.c.l.b16 %v461
    %v1665 = vunpack.c.h.b16 %v461
    %v1666 = vunpack.c.l.b16 %v462
    %v1667 = vunpack.c.h.b16 %v462
    %v1668 = vunpack.c.l.b16 %v463
    %v1669 = vunpack.c.h.b16 %v463
    %v1670 = vunpack.c.l.b16 %v464
    %v1671 = vunpack.c.h.b16 %v464
    %v1672 = vunpack.c.l.b16 %v465
    %v1673 = vunpack.c.h.b16 %v465
    %v1674 = vunpack.c.l.b16 %v466
    %v1675 = vunpack.c.h.b16 %v466
    %v1676 = vunpack.c.l.b16 %v467
    %v1677 = vunpack.c.h.b16 %v467
    %v1678 = vunpack.c.l.b16 %v468
    %v1679 = vunpack.c.h.b16 %v468
    %v1680 = vunpack.c.l.b16 %v469
    %v1681 = vunpack.c.h.b16 %v469
    %v1682 = vunpack.c.l.b16 %v470
    %v1683 = vunpack.c.h.b16 %v470
    %v1684 = vunpack.c.l.b16 %v471
    %v1685 = vunpack.c.h.b16 %v471
    %v1686 = vunpack.c.l.b16 %v472
    %v1687 = vunpack.c.h.b16 %v472
    %v1688 = vunpack.c.l.b16 %v473
    %v1689 = vunpack.c.h.b16 %v473
    %v1690 = vunpack.c.l.b16 %v474
    %v1691 = vunpack.c.h.b16 %v474
    %v1692 = vunpack.c.l.b16 %v475
    %v1693 = vunpack.c.h.b16 %v475
    %v1694 = vunpack.c.l.b16 %v476
    %v1695 = vunpack.c.h.b16 %v476
    %v1696 = vunpack.c.l.b16 %v477
    %v1697 = vunpack.c.h.b16 %v477
    %v1698 = vunpack.c.l.b16 %v478
    %v1699 = vunpack.c.h.b16 %v478
    %v1700 = vunpack.c.l.b16 %v479
    %v1701 = vunpack.c.h.b16 %v479
    %v1702 = vunpack.c.l.b16 %v480
    %v1703 = vunpack.c.h.b16 %v480
    %v1704 = vunpack.c.l.b16 %v481
    %v1705 = vunpack.c.h.b16 %v481
    %v1706 = vunpack.c.l.b16 %v482
    %v1707 = vunpack.c.h.b16 %v482
    %v1708 = vunpack.c.l.b16 %v483
    %v1709 = vunpack.c.h.b16 %v483
    %v1710 = vunpack.c.l.b16 %v484
    %v1711 = vunpack.c.h.b16 %v484
    %v1712 = vunpack.c.l.b16 %v485
    %v1713 = vunpack.c.h.b16 %v485
    %v1714 = vunpack.c.l.b16 %v486
    %v1715 = vunpack.c.h.b16 %v486
    %v1716 = vunpack.c.l.b16 %v487
    %v1717 = vunpack.c.h.b16 %v487
    %v1718 = vunpack.c.l.b16 %v488
    %v1719 = vunpack.c.h.b16 %v488
    %v1720 = vunpack.c.l.b16 %v489
    %v1721 = vunpack.c.h.b16 %v489
    %v1722 = vunpack.c.l.b16 %v490
    %v1723 = vunpack.c.h.b16 %v490
    %v1724 = vunpack.c.l.b16 %v491
    %v1725 = vunpack.c.h.b16 %v491
    %v1726 = vunpack.c.l.b16 %v492
    %v1727 = vunpack.c.h.b16 %v492
    %v1728 = vunpack.c.l.b16 %v493
    %v1729 = vunpack.c.h.b16 %v493
    %v1730 = vunpack.c.l.b16 %v494
    %v1731 = vunpack.c.h.b16 %v494
    %v1732 = vunpack.c.l.b16 %v495
    %v1733 = vunpack.c.h.b16 %v495
    %v1734 = vunpack.c.l.b16 %v496
    %v1735 = vunpack.c.h.b16 %v496
    %v1736 = vunpack.c.l.b16 %v497
    %v1737 = vunpack.c.h.b16 %v497
    %v1738 = vunpack.c.l.b16 %v498
    %v1739 = vunpack.c.h.b16 %v498
    %v1740 = vunpack.c.l.b16 %v499
    %v1741 = vunpack.c.h.b16 %v499
    %v1742 = vunpack.c.l.b16 %v500
    %v1743 = vunpack.c.h.b16 %v500
    %v1744 = vunpack.c.l.b16 %v501
    %v1745 = vunpack.c.h.b16 %v501
    %v1746 = vunpack.c.l.b16 %v502
    %v1747 = vunpack.c.h.b16 %v502
    %v1748 = vunpack.c.l.b16 %v503
    %v1749 = vunpack.c.h.b16 %v503
    %v1750 = vunpack.c.l.b16 %v504
    %v1751 = vunpack.c.h.b16 %v504
    %v1752 = vunpack.c.l.b16 %v505
    %v1753 = vunpack.c.h.b16 %v505
    %v1754 = vunpack.c.l.b16 %v506
    %v1755 = vunpack.c.h.b16 %v506
    %v1756 = vunpack.c.l.b16 %v507
    %v1757 = vunpack.c.h.b16 %v507
    %v1758 = vunpack.c.l.b16 %v508
    %v1759 = vunpack.c.h.b16 %v508
    %v1760 = vunpack.c.l.b16 %v509
    %v1761 = vunpack.c.h.b16 %v509
    %v1762 = vunpack.c.l.b16 %v510
    %v1763 = vunpack.c.h.b16 %v510
    %v1764 = vunpack.c.l.b16 %v511
    %v1765 = vunpack.c.h.b16 %v511
    %v1766 = vunpack.c.l.b16 %v512
    %v1767 = vunpack.c.h.b16 %v512
    %v1768 = vunpack.c.l.b16 %v513
    %v1769 = vunpack.c.h.b16 %v513
    %v1770 = vunpack.c.l.b16 %v514
    %v1771 = vunpack.c.h.b16 %v514
    %v1772 = vunpack.c.l.b16 %v515
    %v1773 = vunpack.c.h.b16 %v515
    %v1774 = vunpack.c.l.b16 %v516
    %v1775 = vunpack.c.h.b16 %v516
    %v1776 = vunpack.c.l.b16 %v517
    %v1777 = vunpack.c.h.b16 %v517
    %v1778 = vunpack.c.l.b16 %v518
    %v1779 = vunpack.c.h.b16 %v518
    %v1780 = vunpack.c.l.b16 %v519
    %v1781 = vunpack.c.h.b16 %v519
    %v1782 = vunpack.c.l.b16 %v520
    %v1783 = vunpack.c.h.b16 %v520
    %v1784 = vunpack.c.l.b16 %v521
    %v1785 = vunpack.c.h.b16 %v521
    %v1786 = vunpack.c.l.b16 %v522
    %v1787 = vunpack.c.h.b16 %v522
    %v1788 = vunpack.c.l.b16 %v523
    %v1789 = vunpack.c.h.b16 %v523
    %v1790 = vunpack.c.l.b16 %v524
    %v1791 = vunpack.c.h.b16 %v524
    %v1792 = vunpack.c.l.b16 %v525
    %v1793 = vunpack.c.h.b16 %v525
    %v1794 = vunpack.c.l.b16 %v526
    %v1795 = vunpack.c.h.b16 %v526
    %v1796 = vunpack.c.l.b16 %v527
    %v1797 = vunpack.c.h.b16 %v527
    %v1798 = vunpack.c.l.b16 %v528
    %v1799 = vunpack.c.h.b16 %v528
    %v1800 = vunpack.c.l.b16 %v529
    %v1801 = vunpack.c.h.b16 %v529
    %v1802 = vunpack.c.l.b16 %v530
    %v1803 = vunpack.c.h.b16 %v530
    %v1804 = vunpack.c.l.b16 %v531
    %v1805 = vunpack.c.h.b16 %v531
    %v1806 = vunpack.c.l.b16 %v532
    %v1807 = vunpack.c.h.b16 %v532
    %v1808 = vunpack.c.l.b16 %v533
    %v1809 = vunpack.c.h.b16 %v533
    %v1810 = vunpack.c.l.b16 %v534
    %v1811 = vunpack.c.h.b16 %v534
    %v1812 = vunpack.c.l.b16 %v535
    %v1813 = vunpack.c.h.b16 %v535
    %v1814 = vunpack.c.l.b16 %v536
    %v1815 = vunpack.c.h.b16 %v536
    %v1816 = vunpack.c.l.b16 %v537
    %v1817 = vunpack.c.h.b16 %v537
    %v1818 = vunpack.c.l.b16 %v538
    %v1819 = vunpack.c.h.b16 %v538
    %v1820 = vunpack.c.l.b16 %v539
    %v1821 = vunpack.c.h.b16 %v539
    %v1822 = vunpack.c.l.b16 %v540
    %v1823 = vunpack.c.h.b16 %v540
    %v1824 = vunpack.c.l.b16 %v541
    %v1825 = vunpack.c.h.b16 %v541
    %v1826 = vunpack.c.l.b16 %v542
    %v1827 = vunpack.c.h.b16 %v542
    %v1828 = vunpack.c.l.b16 %v543
    %v1829 = vunpack.c.h.b16 %v543
    %v1830 = vunpack.c.l.b16 %v544
    %v1831 = vunpack.c.h.b16 %v544
    %v1832 = vunpack.c.l.b16 %v545
    %v1833 = vunpack.c.h.b16 %v545
    %v1834 = vunpack.c.l.b16 %v546
    %v1835 = vunpack.c.h.b16 %v546
    %v1836 = vunpack.c.l.b16 %v547
    %v1837 = vunpack.c.h.b16 %v547
    %v1838 = vunpack.c.l.b16 %v548
    %v1839 = vunpack.c.h.b16 %v548
    %v1840 = vunpack.c.l.b16 %v549
    %v1841 = vunpack.c.h.b16 %v549
    %v1842 = vunpack.c.l.b16 %v550
    %v1843 = vunpack.c.h.b16 %v550
    %v1844 = vunpack.c.l.b16 %v551
    %v1845 = vunpack.c.h.b16 %v551
    %v1846 = vunpack.c.l.b16 %v552
    %v1847 = vunpack.c.h.b16 %v552
    %v1848 = vunpack.c.l.b16 %v553
    %v1849 = vunpack.c.h.b16 %v553
    %v1850 = vunpack.c.l.b16 %v554
    %v1851 = vunpack.c.h.b16 %v554
    %v1852 = vunpack.c.l.b16 %v555
    %v1853 = vunpack.c.h.b16 %v555
    %v1854 = vunpack.c.l.b16 %v556
    %v1855 = vunpack.c.h.b16 %v556
    %v1856 = vunpack.c.l.b16 %v557
    %v1857 = vunpack.c.h.b16 %v557
    %v1858 = vunpack.c.l.b16 %v558
    %v1859 = vunpack.c.h.b16 %v558
    %v1860 = vunpack.c.l.b16 %v559
    %v1861 = vunpack.c.h.b16 %v559
    %v1862 = vunpack.c.l.b16 %v560
    %v1863 = vunpack.c.h.b16 %v560
    %v1864 = vunpack.c.l.b16 %v561
    %v1865 = vunpack.c.h.b16 %v561
    %v1866 = vunpack.c.l.b16 %v562
    %v1867 = vunpack.c.h.b16 %v562
    %v1868 = vunpack.c.l.b16 %v563
    %v1869 = vunpack.c.h.b16 %v563
    %v1870 = vunpack.c.l.b16 %v564
    %v1871 = vunpack.c.h.b16 %v564
    %v1872 = vunpack.c.l.b16 %v565
    %v1873 = vunpack.c.h.b16 %v565
    %v1874 = vunpack.c.l.b16 %v566
    %v1875 = vunpack.c.h.b16 %v566
    %v1876 = vunpack.c.l.b16 %v567
    %v1877 = vunpack.c.h.b16 %v567
    %v1878 = vunpack.c.l.b16 %v568
    %v1879 = vunpack.c.h.b16 %v568
    %v1880 = vunpack.c.l.b16 %v569
    %v1881 = vunpack.c.h.b16 %v569
    %v1882 = vunpack.c.l.b16 %v570
    %v1883 = vunpack.c.h.b16 %v570
    %v1884 = vunpack.c.l.b16 %v571
    %v1885 = vunpack.c.h.b16 %v571
    %v1886 = vunpack.c.l.b16 %v572
    %v1887 = vunpack.c.h.b16 %v572
    %v1888 = vunpack.c.l.b16 %v573
    %v1889 = vunpack.c.h.b16 %v573
    %v1890 = vunpack.c.l.b16 %v574
    %v1891 = vunpack.c.h.b16 %v574
    %v1892 = vunpack.c.l.b16 %v575
    %v1893 = vunpack.c.h.b16 %v575
    %v1894 = vunpack.c.l.b16 %v576
    %v1895 = vunpack.c.h.b16 %v576
    %v1896 = vunpack.c.l.b16 %v577
    %v1897 = vunpack.c.h.b16 %v577
    %v1898 = vunpack.c.l.b16 %v578
    %v1899 = vunpack.c.h.b16 %v578
    %v1900 = vunpack.c.l.b16 %v579
    %v1901 = vunpack.c.h.b16 %v579
    %v1902 = vunpack.c.l.b16 %v580
    %v1903 = vunpack.c.h.b16 %v580
    %v1904 = vunpack.c.l.b16 %v581
    %v1905 = vunpack.c.h.b16 %v581
    %v1906 = vunpack.c.l.b16 %v582
    %v1907 = vunpack.c.h.b16 %v582
    %v1908 = vunpack.c.l.b16 %v583
    %v1909 = vunpack.c.h.b16 %v583
    %v1910 = vunpack.c.l.b16 %v584
    %v1911 = vunpack.c.h.b16 %v584
    %v1912 = vunpack.c.l.b16 %v585
    %v1913 = vunpack.c.h.b16 %v585
    %v1914 = vunpack.c.l.b16 %v586
    %v1915 = vunpack.c.h.b16 %v586
    %v1916 = vunpack.c.l.b16 %v587
    %v1917 = vunpack.c.h.b16 %v587
    %v1918 = vunpack.c.l.b16 %v588
    %v1919 = vunpack.c.h.b16 %v588
    %v1920 = vunpack.c.l.b16 %v589
    %v1921 = vunpack.c.h.b16 %v589
    %v1922 = vunpack.c.l.b16 %v590
    %v1923 = vunpack.c.h.b16 %v590
    %v1924 = vunpack.c.l.b16 %v591
    %v1925 = vunpack.c.h.b16 %v591
    %v1926 = vunpack.c.l.b16 %v592
    %v1927 = vunpack.c.h.b16 %v592
    %v1928 = vunpack.c.l.b16 %v593
    %v1929 = vunpack.c.h.b16 %v593
    %v1930 = vunpack.c.l.b16 %v594
    %v1931 = vunpack.c.h.b16 %v594
    %v1932 = vunpack.c.l.b16 %v595
    %v1933 = vunpack.c.h.b16 %v595
    %v1934 = vunpack.c.l.b16 %v596
    %v1935 = vunpack.c.h.b16 %v596
    %v1936 = vunpack.c.l.b16 %v597
    %v1937 = vunpack.c.h.b16 %v597
    %v1938 = vunpack.c.l.b16 %v598
    %v1939 = vunpack.c.h.b16 %v598
    %v1940 = vunpack.c.l.b16 %v599
    %v1941 = vunpack.c.h.b16 %v599
    %v1942 = vunpack.c.l.b16 %v600
    %v1943 = vunpack.c.h.b16 %v600
    %v1944 = vunpack.c.l.b16 %v601
    %v1945 = vunpack.c.h.b16 %v601
    %v1946 = vunpack.c.l.b16 %v602
    %v1947 = vunpack.c.h.b16 %v602
    %v1948 = vunpack.c.l.b16 %v603
    %v1949 = vunpack.c.h.b16 %v603
    %v1950 = vunpack.c.l.b16 %v604
    %v1951 = vunpack.c.h.b16 %v604
    %v1952 = vunpack.c.l.b16 %v605
    %v1953 = vunpack.c.h.b16 %v605
    %v1954 = vunpack.c.l.b16 %v606
    %v1955 = vunpack.c.h.b16 %v606
    %v1956 = vunpack.c.l.b16 %v607
    %v1957 = vunpack.c.h.b16 %v607
    %v1958 = vunpack.c.l.b16 %v608
    %v1959 = vunpack.c.h.b16 %v608
    %v1960 = vunpack.c.l.b16 %v609
    %v1961 = vunpack.c.h.b16 %v609
    %v1962 = vunpack.c.l.b16 %v610
    %v1963 = vunpack.c.h.b16 %v610
    %v1964 = vunpack.c.l.b16 %v611
    %v1965 = vunpack.c.h.b16 %v611
    %v1966 = vunpack.c.l.b16 %v612
    %v1967 = vunpack.c.h.b16 %v612
    %v1968 = vunpack.c.l.b16 %v613
    %v1969 = vunpack.c.h.b16 %v613
    %v1970 = vunpack.c.l.b16 %v614
    %v1971 = vunpack.c.h.b16 %v614
    %v1972 = vunpack.c.l.b16 %v615
    %v1973 = vunpack.c.h.b16 %v615
    %v1974 = vunpack.c.l.b16 %v616
    %v1975 = vunpack.c.h.b16 %v616
    %v1976 = vunpack.c.l.b16 %v617
    %v1977 = vunpack.c.h.b16 %v617
    %v1978 = vunpack.c.l.b16 %v618
    %v1979 = vunpack.c.h.b16 %v618
    %v1980 = vunpack.c.l.b16 %v619
    %v1981 = vunpack.c.h.b16 %v619
    %v1982 = vunpack.c.l.b16 %v620
    %v1983 = vunpack.c.h.b16 %v620
    %v1984 = vunpack.c.l.b16 %v621
    %v1985 = vunpack.c.h.b16 %v621
    %v1986 = vunpack.c.l.b16 %v622
    %v1987 = vunpack.c.h.b16 %v622
    %v1988 = vunpack.c.l.b16 %v623
    %v1989 = vunpack.c.h.b16 %v623
    %v1990 = vunpack.c.l.b16 %v624
    %v1991 = vunpack.c.h.b16 %v624
    %v1992 = vunpack.c.l.b16 %v625
    %v1993 = vunpack.c.h.b16 %v625
    %v1994 = vunpack.c.l.b16 %v626
    %v1995 = vunpack.c.h.b16 %v626
    %v1996 = vunpack.c.l.b16 %v627
    %v1997 = vunpack.c.h.b16 %v627
    %v1998 = vunpack.c.l.b16 %v628
    %v1999 = vunpack.c.h.b16 %v628
    %v2000 = vunpack.c.l.b16 %v629
    %v2001 = vunpack.c.h.b16 %v629
    %v2002 = vunpack.c.l.b16 %v630
    %v2003 = vunpack.c.h.b16 %v630
    %v2004 = vunpack.c.l.b16 %v631
    %v2005 = vunpack.c.h.b16 %v631
    %v2006 = vunpack.c.l.b16 %v632
    %v2007 = vunpack.c.h.b16 %v632
    %v2008 = vunpack.c.l.b16 %v633
    %v2009 = vunpack.c.h.b16 %v633
    %v2010 = vunpack.c.l.b16 %v634
    %v2011 = vunpack.c.h.b16 %v634
    %v2012 = vunpack.c.l.b16 %v635
    %v2013 = vunpack.c.h.b16 %v635
    %v2014 = vunpack.c.l.b16 %v636
    %v2015 = vunpack.c.h.b16 %v636
    %v2016 = vunpack.c.l.b16 %v637
    %v2017 = vunpack.c.h.b16 %v637
    %v2018 = vunpack.c.l.b16 %v638
    %v2019 = vunpack.c.h.b16 %v638
    %v2020 = vunpack.c.l.b16 %v639
    %v2021 = vunpack.c.h.b16 %v639
    %v2022 = vunpack.c.l.b16 %v640
    %v2023 = vunpack.c.h.b16 %v640
    %v2024 = vunpack.c.l.b16 %v641
    %v2025 = vunpack.c.h.b16 %v641
    %v2026 = vunpack.c.l.b16 %v642
    %v2027 = vunpack.c.h.b16 %v642
    %v2028 = vunpack.c.l.b16 %v643
    %v2029 = vunpack.c.h.b16 %v643
    %v2030 = vunpack.c.l.b16 %v644
    %v2031 = vunpack.c.h.b16 %v644
    %v2032 = vunpack.c.l.b16 %v645
    %v2033 = vunpack.c.h.b16 %v645
    %v2034 = vunpack.c.l.b16 %v646
    %v2035 = vunpack.c.h.b16 %v646
    %v2036 = vunpack.c.l.b16 %v647
    %v2037 = vunpack.c.h.b16 %v647
    %v2038 = vunpack.c.l.b16 %v648
    %v2039 = vunpack.c.h.b16 %v648
    %v2040 = vunpack.c.l.b16 %v649
    %v2041 = vunpack.c.h.b16 %v649
    %v2042 = vunpack.c.l.b16 %v650
    %v2043 = vunpack.c.h.b16 %v650
    %v2044 = vunpack.c.l.b16 %v651
    %v2045 = vunpack.c.h.b16 %v651
    %v2046 = vunpack.c.l.b16 %v652
    %v2047 = vunpack.c.h.b16 %v652
    %v2048 = vunpack.c.l.b16 %v653
    %v2049 = vunpack.c.h.b16 %v653
    %v2050 = vunpack.c.l.b16 %v654
    %v2051 = vunpack.c.h.b16 %v654
    %v2052 = vunpack.c.l.b16 %v655
    %v2053 = vunpack.c.h.b16 %v655
    %v2054 = vunpack.c.l.b16 %v656
    %v2055 = vunpack.c.h.b16 %v656
    %v2056 = vunpack.c.l.b16 %v657
    %v2057 = vunpack.c.h.b16 %v657
    %v2058 = vunpack.c.l.b16 %v658
    %v2059 = vunpack.c.h.b16 %v658
    %v2060 = vunpack.c.l.b16 %v659
    %v2061 = vunpack.c.h.b16 %v659
    %v2062 = vunpack.c.l.b16 %v660
    %v2063 = vunpack.c.h.b16 %v660
    %v2064 = vunpack.c.l.b16 %v661
    %v2065 = vunpack.c.h.b16 %v661
    %v2066 = vunpack.c.l.b16 %v662
    %v2067 = vunpack.c.h.b16 %v662
    %v2068 = vunpack.c.l.b16 %v663
    %v2069 = vunpack.c.h.b16 %v663
    %v2070 = vunpack.c.l.b16 %v664
    %v2071 = vunpack.c.h.b16 %v664
    %v2072 = vunpack.c.l.b16 %v665
    %v2073 = vunpack.c.h.b16 %v665
    %v2074 = vunpack.c.l.b16 %v666
    %v2075 = vunpack.c.h.b16 %v666
    %v2076 = vunpack.c.l.b16 %v667
    %v2077 = vunpack.c.h.b16 %v667
    %v2078 = vunpack.c.l.b16 %v668
    %v2079 = vunpack.c.h.b16 %v668
    %v2080 = vunpack.c.l.b16 %v669
    %v2081 = vunpack.c.h.b16 %v669
    %v2082 = vunpack.c.l.b16 %v670
    %v2083 = vunpack.c.h.b16 %v670
    %v2084 = vunpack.c.l.b16 %v671
    %v2085 = vunpack.c.h.b16 %v671
    %v2086 = vunpack.c.l.b16 %v672
    %v2087 = vunpack.c.h.b16 %v672
    %v2088 = vunpack.c.l.b16 %v673
    %v2089 = vunpack.c.h.b16 %v673
    %v2090 = vunpack.c.l.b16 %v674
    %v2091 = vunpack.c.h.b16 %v674
    %v2092 = vunpack.c.l.b16 %v675
    %v2093 = vunpack.c.h.b16 %v675
    %v2094 = vunpack.c.l.b16 %v676
    %v2095 = vunpack.c.h.b16 %v676
    %v2096 = vunpack.c.l.b16 %v677
    %v2097 = vunpack.c.h.b16 %v677
    %v2098 = vunpack.c.l.b16 %v678
    %v2099 = vunpack.c.h.b16 %v678
    %v2100 = vunpack.c.l.b16 %v679
    %v2101 = vunpack.c.h.b16 %v679
    %v2102 = vunpack.c.l.b16 %v680
    %v2103 = vunpack.c.h.b16 %v680
    %v2104 = vunpack.c.l.b16 %v681
    %v2105 = vunpack.c.h.b16 %v681
    %v2106 = vunpack.c.l.b16 %v682
    %v2107 = vunpack.c.h.b16 %v682
    %v2108 = vunpack.c.l.b16 %v683
    %v2109 = vunpack.c.h.b16 %v683
    %v2110 = vunpack.c.l.b16 %v684
    %v2111 = vunpack.c.h.b16 %v684
    %v2112 = vunpack.c.l.b16 %v685
    %v2113 = vunpack.c.h.b16 %v685
    %v2114 = vunpack.c.l.b16 %v686
    %v2115 = vunpack.c.h.b16 %v686
    %v2116 = vunpack.c.l.b16 %v687
    %v2117 = vunpack.c.h.b16 %v687
    %v2118 = vunpack.c.l.b16 %v688
    %v2119 = vunpack.c.h.b16 %v688
    %v2120 = vunpack.c.l.b16 %v689
    %v2121 = vunpack.c.h.b16 %v689
    %v2122 = vunpack.c.l.b16 %v690
    %v2123 = vunpack.c.h.b16 %v690
    %v2124 = vunpack.c.l.b16 %v691
    %v2125 = vunpack.c.h.b16 %v691
    %v2126 = vunpack.c.l.b16 %v692
    %v2127 = vunpack.c.h.b16 %v692
    %v2128 = vunpack.c.l.b16 %v693
    %v2129 = vunpack.c.h.b16 %v693
    %v2130 = vunpack.c.l.b16 %v694
    %v2131 = vunpack.c.h.b16 %v694
    %v2132 = vunpack.c.l.b16 %v695
    %v2133 = vunpack.c.h.b16 %v695
    %v2134 = vunpack.c.l.b16 %v696
    %v2135 = vunpack.c.h.b16 %v696
    %v2136 = vunpack.c.l.b16 %v697
    %v2137 = vunpack.c.h.b16 %v697
    %v2138 = vunpack.c.l.b16 %v698
    %v2139 = vunpack.c.h.b16 %v698
    %v2140 = vunpack.c.l.b16 %v699
    %v2141 = vunpack.c.h.b16 %v699
    %v2142 = vunpack.c.l.b16 %v700
    %v2143 = vunpack.c.h.b16 %v700
    %v2144 = vunpack.c.l.b16 %v701
    %v2145 = vunpack.c.h.b16 %v701
    %v2146 = vunpack.c.l.b16 %v702
    %v2147 = vunpack.c.h.b16 %v702
    %v2148 = vunpack.c.l.b16 %v703
    %v2149 = vunpack.c.h.b16 %v703
    %v2150 = vunpack.c.l.b16 %v704
    %v2151 = vunpack.c.h.b16 %v704
    %v2152 = vunpack.c.l.b16 %v705
    %v2153 = vunpack.c.h.b16 %v705
    %v2154 = vunpack.c.l.b16 %v706
    %v2155 = vunpack.c.h.b16 %v706
    %v2156 = vunpack.c.l.b16 %v707
    %v2157 = vunpack.c.h.b16 %v707
    %v2158 = vunpack.c.l.b16 %v708
    %v2159 = vunpack.c.h.b16 %v708
    %v2160 = vunpack.c.l.b16 %v709
    %v2161 = vunpack.c.h.b16 %v709
    %v2162 = vunpack.c.l.b16 %v710
    %v2163 = vunpack.c.h.b16 %v710
    %v2164 = vunpack.c.l.b16 %v711
    %v2165 = vunpack.c.h.b16 %v711
    %v2166 = vunpack.c.l.b16 %v712
    %v2167 = vunpack.c.h.b16 %v712
    %v2168 = vunpack.c.l.b16 %v713
    %v2169 = vunpack.c.h.b16 %v713
    %v2170 = vunpack.c.l.b16 %v714
    %v2171 = vunpack.c.h.b16 %v714
    %v2172 = vunpack.c.l.b16 %v715
    %v2173 = vunpack.c.h.b16 %v715
    %v2174 = vunpack.c.l.b16 %v716
    %v2175 = vunpack.c.h.b16 %v716
    %v2176 = vunpack.c.l.b16 %v717
    %v2177 = vunpack.c.h.b16 %v717
    %v2178 = vunpack.c.l.b16 %v718
    %v2179 = vunpack.c.h.b16 %v718
    %v2180 = vunpack.c.l.b16 %v719
    %v2181 = vunpack.c.h.b16 %v719
    %v2182 = vunpack.c.l.b16 %v720
    %v2183 = vunpack.c.h.b16 %v720
    %v2184 = vunpack.c.l.b16 %v721
    %v2185 = vunpack.c.h.b16 %v721
    %v2186 = vunpack.c.l.b16 %v722
    %v2187 = vunpack.c.h.b16 %v722
    %v2188 = vunpack.c.l.b16 %v723
    %v2189 = vunpack.c.h.b16 %v723
    %v2190 = vunpack.c.l.b16 %v724
    %v2191 = vunpack.c.h.b16 %v724
    %v2192 = vunpack.c.l.b16 %v725
    %v2193 = vunpack.c.h.b16 %v725
    %v2194 = vunpack.c.l.b16 %v726
    %v2195 = vunpack.c.h.b16 %v726
    %v2196 = vunpack.c.l.b16 %v727
    %v2197 = vunpack.c.h.b16 %v727
    %v2198 = vunpack.c.l.b16 %v728
    %v2199 = vunpack.c.h.b16 %v728
    %v2200 = vunpack.c.l.b16 %v729
    %v2201 = vunpack.c.h.b16 %v729
    %v2202 = vunpack.c.l.b16 %v730
    %v2203 = vunpack.c.h.b16 %v730
    %v2204 = vunpack.c.l.b16 %v731
    %v2205 = vunpack.c.h.b16 %v731
    %v2206 = vunpack.c.l.b16 %v732
    %v2207 = vunpack.c.h.b16 %v732
    %v2208 = vunpack.c.l.b16 %v733
    %v2209 = vunpack.c.h.b16 %v733
    %v2210 = vunpack.c.l.b16 %v734
    %v2211 = vunpack.c.h.b16 %v734
    %v2212 = vunpack.c.l.b16 %v735
    %v2213 = vunpack.c.h.b16 %v735
    %v2214 = vunpack.c.l.b16 %v736
    %v2215 = vunpack.c.h.b16 %v736
    %v2216 = vunpack.c.l.b16 %v737
    %v2217 = vunpack.c.h.b16 %v737
    %v2218 = vunpack.c.l.b16 %v738
    %v2219 = vunpack.c.h.b16 %v738
    %v2220 = vunpack.c.l.b16 %v739
    %v2221 = vunpack.c.h.b16 %v739
    %v2222 = vunpack.c.l.b16 %v740
    %v2223 = vunpack.c.h.b16 %v740
    %v2224 = vunpack.c.l.b16 %v741
    %v2225 = vunpack.c.h.b16 %v741
    %v2226 = vunpack.c.l.b16 %v742
    %v2227 = vunpack.c.h.b16 %v742
    %v2228 = vunpack.c.l.b16 %v743
    %v2229 = vunpack.c.h.b16 %v743
    %v2230 = vunpack.c.l.b16 %v744
    %v2231 = vunpack.c.h.b16 %v744
    %v2232 = vunpack.c.l.b16 %v745
    %v2233 = vunpack.c.h.b16 %v745
    %v2234 = vunpack.c.l.b16 %v746
    %v2235 = vunpack.c.h.b16 %v746
    %v2236 = vunpack.c.l.b16 %v747
    %v2237 = vunpack.c.h.b16 %v747
    %v2238 = vunpack.c.l.b16 %v748
    %v2239 = vunpack.c.h.b16 %v748
    %v2240 = vunpack.c.l.b16 %v749
    %v2241 = vunpack.c.h.b16 %v749
    %v2242 = vunpack.c.l.b16 %v750
    %v2243 = vunpack.c.h.b16 %v750
    %v2244 = vunpack.c.l.b16 %v751
    %v2245 = vunpack.c.h.b16 %v751
    %v2246 = vunpack.c.l.b16 %v752
    %v2247 = vunpack.c.h.b16 %v752
    %v2248 = vunpack.c.l.b16 %v753
    %v2249 = vunpack.c.h.b16 %v753
    %v2250 = vunpack.c.l.b16 %v754
    %v2251 = vunpack.c.h.b16 %v754
    %v2252 = vunpack.c.l.b16 %v755
    %v2253 = vunpack.c.h.b16 %v755
    %v2254 = vunpack.c.l.b16 %v756
    %v2255 = vunpack.c.h.b16 %v756
    %v2256 = vunpack.c.l.b16 %v757
    %v2257 = vunpack.c.h.b16 %v757
    %v2258 = vunpack.c.l.b16 %v758
    %v2259 = vunpack.c.h.b16 %v758
    %v2260 = vunpack.c.l.b16 %v759
    %v2261 = vunpack.c.h.b16 %v759
    %v2262 = vunpack.c.l.b16 %v760
    %v2263 = vunpack.c.h.b16 %v760
    %v2264 = vunpack.c.l.b16 %v761
    %v2265 = vunpack.c.h.b16 %v761
    %v2266 = vunpack.c.l.b16 %v762
    %v2267 = vunpack.c.h.b16 %v762
    %v2268 = vunpack.c.l.b16 %v763
    %v2269 = vunpack.c.h.b16 %v763
    %v2270 = vunpack.c.l.b16 %v764
    %v2271 = vunpack.c.h.b16 %v764
    %v2272 = vunpack.c.l.b16 %v765
    %v2273 = vunpack.c.h.b16 %v765
    %v2274 = vunpack.c.l.b16 %v766
    %v2275 = vunpack.c.h.b16 %v766
    %v2276 = vunpack.c.l.b16 %v767
    %v2277 = vunpack.c.h.b16 %v767
    %v2278 = vunpack.c.l.b16 %v768
    %v2279 = vunpack.c.h.b16 %v768
    %v2280 = vunpack.c.l.b16 %v769
    %v2281 = vunpack.c.h.b16 %v769
    %v2282 = vunpack.c.l.b16 %v770
    %v2283 = vunpack.c.h.b16 %v770
    %v2284 = vunpack.c.l.b16 %v771
    %v2285 = vunpack.c.h.b16 %v771
    %v2286 = vunpack.c.l.b16 %v772
    %v2287 = vunpack.c.h.b16 %v772
    %v2288 = vunpack.c.l.b16 %v773
    %v2289 = vunpack.c.h.b16 %v773
    %v2290 = vunpack.c.l.b16 %v774
    %v2291 = vunpack.c.h.b16 %v774
    %v2292 = vunpack.c.l.b16 %v775
    %v2293 = vunpack.c.h.b16 %v775
    %v2294 = vunpack.c.l.b16 %v776
    %v2295 = vunpack.c.h.b16 %v776
    %v2296 = vunpack.c.l.b16 %v777
    %v2297 = vunpack.c.h.b16 %v777
    %v2298 = vunpack.c.l.b16 %v778
    %v2299 = vunpack.c.h.b16 %v778
    %v2300 = vunpack.c.l.b16 %v779
    %v2301 = vunpack.c.h.b16 %v779
    %v2302 = vunpack.c.l.b16 %v780
    %v2303 = vunpack.c.h.b16 %v780
    %v2304 = vunpack.c.l.b16 %v781
    %v2305 = vunpack.c.h.b16 %v781
    %v2306 = vunpack.c.l.b16 %v782
    %v2307 = vunpack.c.h.b16 %v782
    %v2308 = vunpack.c.l.b16 %v783
    %v2309 = vunpack.c.h.b16 %v783
    %v2310 = vunpack.c.l.b16 %v784
    %v2311 = vunpack.c.h.b16 %v784
    %v2312 = vunpack.c.l.b16 %v785
    %v2313 = vunpack.c.h.b16 %v785
    %v2314 = vunpack.c.l.b16 %v786
    %v2315 = vunpack.c.h.b16 %v786
    %v2316 = vunpack.c.l.b16 %v787
    %v2317 = vunpack.c.h.b16 %v787
    %v2318 = vunpack.c.l.b16 %v788
    %v2319 = vunpack.c.h.b16 %v788
    %v2320 = vunpack.c.l.b16 %v789
    %v2321 = vunpack.c.h.b16 %v789
    %v2322 = vunpack.c.l.b16 %v790
    %v2323 = vunpack.c.h.b16 %v790
    %v2324 = vunpack.c.l.b16 %v791
    %v2325 = vunpack.c.h.b16 %v791
    %v2326 = vunpack.c.l.b16 %v792
    %v2327 = vunpack.c.h.b16 %v792
    %v2328 = vunpack.c.l.b16 %v793
    %v2329 = vunpack.c.h.b16 %v793
    %v2330 = vunpack.c.l.b16 %v794
    %v2331 = vunpack.c.h.b16 %v794
    %v2332 = vunpack.c.l.b16 %v795
    %v2333 = vunpack.c.h.b16 %v795
    %v2334 = vunpack.c.l.b16 %v796
    %v2335 = vunpack.c.h.b16 %v796
    %v2336 = vunpack.c.l.b16 %v797
    %v2337 = vunpack.c.h.b16 %v797
    %v2338 = vunpack.c.l.b16 %v798
    %v2339 = vunpack.c.h.b16 %v798
    %v2340 = vunpack.c.l.b16 %v799
    %v2341 = vunpack.c.h.b16 %v799
    %v2342 = vunpack.c.l.b16 %v800
    %v2343 = vunpack.c.h.b16 %v800
    %v2344 = vunpack.c.l.b16 %v801
    %v2345 = vunpack.c.h.b16 %v801
    %v2346 = vunpack.c.l.b16 %v802
    %v2347 = vunpack.c.h.b16 %v802
    %v2348 = vunpack.c.l.b16 %v803
    %v2349 = vunpack.c.h.b16 %v803
    %v2350 = vunpack.c.l.b16 %v804
    %v2351 = vunpack.c.h.b16 %v804
    %v2352 = vunpack.c.l.b16 %v805
    %v2353 = vunpack.c.h.b16 %v805
    %v2354 = vunpack.c.l.b16 %v806
    %v2355 = vunpack.c.h.b16 %v806
    %v2356 = vunpack.c.l.b16 %v807
    %v2357 = vunpack.c.h.b16 %v807
    %v2358 = vunpack.c.l.b16 %v808
    %v2359 = vunpack.c.h.b16 %v808
    %v2360 = vunpack.c.l.b16 %v809
    %v2361 = vunpack.c.h.b16 %v809
    %v2362 = vunpack.c.l.b16 %v810
    %v2363 = vunpack.c.h.b16 %v810
    %v2364 = vunpack.c.l.b16 %v811
    %v2365 = vunpack.c.h.b16 %v811
    %v2366 = vunpack.c.l.b16 %v812
    %v2367 = vunpack.c.h.b16 %v812
    %v2368 = vunpack.c.l.b16 %v813
    %v2369 = vunpack.c.h.b16 %v813
    %v2370 = vunpack.c.l.b16 %v814
    %v2371 = vunpack.c.h.b16 %v814
    %v2372 = vunpack.c.l.b16 %v815
    %v2373 = vunpack.c.h.b16 %v815
    %v2374 = vpack.c.b16 %v1354, %v1350
    %v2375 = vpack.c.b16 %v1355, %v1351
    %v2376 = vpack.c.b16 %v1356, %v1352
    %v2377 = vpack.c.b16 %v1357, %v1353
    %v2378 = vpack.c.b16 %v1362, %v1358
    %v2379 = vpack.c.b16 %v1363, %v1359
    %v2380 = vpack.c.b16 %v1364, %v1360
    %v2381 = vpack.c.b16 %v1365, %v1361
    %v2382 = vpack.c.b16 %v1370, %v1366
    %v2383 = vpack.c.b16 %v1371, %v1367
    %v2384 = vpack.c.b16 %v1372, %v1368
    %v2385 = vpack.c.b16 %v1373, %v1369
    %v2386 = vpack.c.b16 %v1378, %v1374
    %v2387 = vpack.c.b16 %v1379, %v1375
    %v2388 = vpack.c.b16 %v1380, %v1376
    %v2389 = vpack.c.b16 %v1381, %v1377
    %v2390 = vpack.c.b16 %v1386, %v1382
    %v2391 = vpack.c.b16 %v1387, %v1383
    %v2392 = vpack.c.b16 %v1388, %v1384
    %v2393 = vpack.c.b16 %v1389, %v1385
    %v2394 = vpack.c.b16 %v1394, %v1390
    %v2395 = vpack.c.b16 %v1395, %v1391
    %v2396 = vpack.c.b16 %v1396, %v1392
    %v2397 = vpack.c.b16 %v1397, %v1393
    %v2398 = vpack.c.b16 %v1402, %v1398
    %v2399 = vpack.c.b16 %v1403, %v1399
    %v2400 = vpack.c.b16 %v1404, %v1400
    %v2401 = vpack.c.b16 %v1405, %v1401
    %v2402 = vpack.c.b16 %v1410, %v1406
    %v2403 = vpack.c.b16 %v1411, %v1407
    %v2404 = vpack.c.b16 %v1412, %v1408
    %v2405 = vpack.c.b16 %v1413, %v1409
    %v2406 = vpack.c.b16 %v1418, %v1414
    %v2407 = vpack.c.b16 %v1419, %v1415
    %v2408 = vpack.c.b16 %v1420, %v1416
    %v2409 = vpack.c.b16 %v1421, %v1417
    %v2410 = vpack.c.b16 %v1426, %v1422
    %v2411 = vpack.c.b16 %v1427, %v1423
    %v2412 = vpack.c.b16 %v1428, %v1424
    %v2413 = vpack.c.b16 %v1429, %v1425
    %v2414 = vpack.c.b16 %v1434, %v1430
    %v2415 = vpack.c.b16 %v1435, %v1431
    %v2416 = vpack.c.b16 %v1436, %v1432
    %v2417 = vpack.c.b16 %v1437, %v1433
    %v2418 = vpack.c.b16 %v1442, %v1438
    %v2419 = vpack.c.b16 %v1443, %v1439
    %v2420 = vpack.c.b16 %v1444, %v1440
    %v2421 = vpack.c.b16 %v1445, %v1441
    %v2422 = vpack.c.b16 %v1450, %v1446
    %v2423 = vpack.c.b16 %v1451, %v1447
    %v2424 = vpack.c.b16 %v1452, %v1448
    %v2425 = vpack.c.b16 %v1453, %v1449
    %v2426 = vpack.c.b16 %v1458, %v1454
    %v2427 = vpack.c.b16 %v1459, %v1455
    %v2428 = vpack.c.b16 %v1460, %v1456
    %v2429 = vpack.c.b16 %v1461, %v1457
    %v2430 = vpack.c.b16 %v1466, %v1462
    %v2431 = vpack.c.b16 %v1467, %v1463
    %v2432 = vpack.c.b16 %v1468, %v1464
    %v2433 = vpack.c.b16 %v1469, %v1465
    %v2434 = vpack.c.b16 %v1474, %v1470
    %v2435 = vpack.c.b16 %v1475, %v1471
    %v2436 = vpack.c.b16 %v1476, %v1472
    %v2437 = vpack.c.b16 %v1477, %v1473
    %v2438 = vpack.c.b16 %v1482, %v1478
    %v2439 = vpack.c.b16 %v1483, %v1479
    %v2440 = vpack.c.b16 %v1484, %v1480
    %v2441 = vpack.c.b16 %v1485, %v1481
    %v2442 = vpack.c.b16 %v1490, %v1486
    %v2443 = vpack.c.b16 %v1491, %v1487
    %v2444 = vpack.c.b16 %v1492, %v1488
    %v2445 = vpack.c.b16 %v1493, %v1489
    %v2446 = vpack.c.b16 %v1498, %v1494
    %v2447 = vpack.c.b16 %v1499, %v1495
    %v2448 = vpack.c.b16 %v1500, %v1496
    %v2449 = vpack.c.b16 %v1501, %v1497
    %v2450 = vpack.c.b16 %v1506, %v1502
    %v2451 = vpack.c.b16 %v1507, %v1503
    %v2452 = vpack.c.b16 %v1508, %v1504
    %v2453 = vpack.c.b16 %v1509, %v1505
    %v2454 = vpack.c.b16 %v1514, %v1510
    %v2455 = vpack.c.b16 %v1515, %v1511
    %v2456 = vpack.c.b16 %v1516, %v1512
    %v2457 = vpack.c.b16 %v1517, %v1513
    %v2458 = vpack.c.b16 %v1522, %v1518
    %v2459 = vpack.c.b16 %v1523, %v1519
    %v2460 = vpack.c.b16 %v1524, %v1520
    %v2461 = vpack.c.b16 %v1525, %v1521
    %v2462 = vpack.c.b16 %v1530, %v1526
    %v2463 = vpack.c.b16 %v1531, %v1527
    %v2464 = vpack.c.b16 %v1532, %v1528
    %v2465 = vpack.c.b16 %v1533, %v1529
    %v2466 = vpack.c.b16 %v1538, %v1534
    %v2467 = vpack.c.b16 %v1539, %v1535
    %v2468 = vpack.c.b16 %v1540, %v1536
    %v2469 = vpack.c.b16 %v1541, %v1537
    %v2470 = vpack.c.b16 %v1546, %v1542
    %v2471 = vpack.c.b16 %v1547, %v1543
    %v2472 = vpack.c.b16 %v1548, %v1544
    %v2473 = vpack.c.b16 %v1549, %v1545
    %v2474 = vpack.c.b16 %v1554, %v1550
    %v2475 = vpack.c.b16 %v1555, %v1551
    %v2476 = vpack.c.b16 %v1556, %v1552
    %v2477 = vpack.c.b16 %v1557, %v1553
    %v2478 = vpack.c.b16 %v1562, %v1558
    %v2479 = vpack.c.b16 %v1563, %v1559
    %v2480 = vpack.c.b16 %v1564, %v1560
    %v2481 = vpack.c.b16 %v1565, %v1561
    %v2482 = vpack.c.b16 %v1570, %v1566
    %v2483 = vpack.c.b16 %v1571, %v1567
    %v2484 = vpack.c.b16 %v1572, %v1568
    %v2485 = vpack.c.b16 %v1573, %v1569
    %v2486 = vpack.c.b16 %v1578, %v1574
    %v2487 = vpack.c.b16 %v1579, %v1575
    %v2488 = vpack.c.b16 %v1580, %v1576
    %v2489 = vpack.c.b16 %v1581, %v1577
    %v2490 = vpack.c.b16 %v1586, %v1582
    %v2491 = vpack.c.b16 %v1587, %v1583
    %v2492 = vpack.c.b16 %v1588, %v1584
    %v2493 = vpack.c.b16 %v1589, %v1585
    %v2494 = vpack.c.b16 %v1594, %v1590
    %v2495 = vpack.c.b16 %v1595, %v1591
    %v2496 = vpack.c.b16 %v1596, %v1592
    %v2497 = vpack.c.b16 %v1597, %v1593
    %v2498 = vpack.c.b16 %v1602, %v1598
    %v2499 = vpack.c.b16 %v1603, %v1599
    %v2500 = vpack.c.b16 %v1604, %v1600
    %v2501 = vpack.c.b16 %v1605, %v1601
    %v2502 = vpack.c.b16 %v1610, %v1606
    %v2503 = vpack.c.b16 %v1611, %v1607
    %v2504 = vpack.c.b16 %v1612, %v1608
    %v2505 = vpack.c.b16 %v1613, %v1609
    %v2506 = vpack.c.b16 %v1618, %v1614
    %v2507 = vpack.c.b16 %v1619, %v1615
    %v2508 = vpack.c.b16 %v1620, %v1616
    %v2509 = vpack.c.b16 %v1621, %v1617
    %v2510 = vpack.c.b16 %v1626, %v1622
    %v2511 = vpack.c.b16 %v1627, %v1623
    %v2512 = vpack.c.b16 %v1628, %v1624
    %v2513 = vpack.c.b16 %v1629, %v1625
    %v2514 = vpack.c.b16 %v1634, %v1630
    %v2515 = vpack.c.b16 %v1635, %v1631
    %v2516 = vpack.c.b16 %v1636, %v1632
    %v2517 = vpack.c.b16 %v1637, %v1633
    %v2518 = vpack.c.b16 %v1642, %v1638
    %v2519 = vpack.c.b16 %v1643, %v1639
    %v2520 = vpack.c.b16 %v1644, %v1640
    %v2521 = vpack.c.b16 %v1645, %v1641
    %v2522 = vpack.c.b16 %v1650, %v1646
    %v2523 = vpack.c.b16 %v1651, %v1647
    %v2524 = vpack.c.b16 %v1652, %v1648
    %v2525 = vpack.c.b16 %v1653, %v1649
    %v2526 = vpack.c.b16 %v1658, %v1654
    %v2527 = vpack.c.b16 %v1659, %v1655
    %v2528 = vpack.c.b16 %v1660, %v1656
    %v2529 = vpack.c.b16 %v1661, %v1657
    %v2530 = vpack.c.b16 %v1666, %v1662
    %v2531 = vpack.c.b16 %v1667, %v1663
    %v2532 = vpack.c.b16 %v1668, %v1664
    %v2533 = vpack.c.b16 %v1669, %v1665
    %v2534 = vpack.c.b16 %v1674, %v1670
    %v2535 = vpack.c.b16 %v1675, %v1671
    %v2536 = vpack.c.b16 %v1676, %v1672
    %v2537 = vpack.c.b16 %v1677, %v1673
    %v2538 = vpack.c.b16 %v1682, %v1678
    %v2539 = vpack.c.b16 %v1683, %v1679
    %v2540 = vpack.c.b16 %v1684, %v1680
    %v2541 = vpack.c.b16 %v1685, %v1681
    %v2542 = vpack.c.b16 %v1690, %v1686
    %v2543 = vpack.c.b16 %v1691, %v1687
    %v2544 = vpack.c.b16 %v1692, %v1688
    %v2545 = vpack.c.b16 %v1693, %v1689
    %v2546 = vpack.c.b16 %v1698, %v1694
    %v2547 = vpack.c.b16 %v1699, %v1695
    %v2548 = vpack.c.b16 %v1700, %v1696
    %v2549 = vpack.c.b16 %v1701, %v1697
    %v2550 = vpack.c.b16 %v1706, %v1702
    %v2551 = vpack.c.b16 %v1707, %v1703
    %v2552 = vpack.c.b16 %v1708, %v1704
    %v2553 = vpack.c.b16 %v1709, %v1705
    %v2554 = vpack.c.b16 %v1714, %v1710
    %v2555 = vpack.c.b16 %v1715, %v1711
    %v2556 = vpack.c.b16 %v1716, %v1712
    %v2557 = vpack.c.b16 %v1717, %v1713
    %v2558 = vpack.c.b16 %v1722, %v1718
    %v2559 = vpack.c.b16 %v1723, %v1719
    %v2560 = vpack.c.b16 %v1724, %v1720
    %v2561 = vpack.c.b16 %v1725, %v1721
    %v2562 = vpack.c.b16 %v1730, %v1726
    %v2563 = vpack.c.b16 %v1731, %v1727
    %v2564 = vpack.c.b16 %v1732, %v1728
    %v2565 = vpack.c.b16 %v1733, %v1729
    %v2566 = vpack.c.b16 %v1738, %v1734
    %v2567 = vpack.c.b16 %v1739, %v1735
    %v2568 = vpack.c.b16 %v1740, %v1736
    %v2569 = vpack.c.b16 %v1741, %v1737
    %v2570 = vpack.c.b16 %v1746, %v1742
    %v2571 = vpack.c.b16 %v1747, %v1743
    %v2572 = vpack.c.b16 %v1748, %v1744
    %v2573 = vpack.c.b16 %v1749, %v1745
    %v2574 = vpack.c.b16 %v1754, %v1750
    %v2575 = vpack.c.b16 %v1755, %v1751
    %v2576 = vpack.c.b16 %v1756, %v1752
    %v2577 = vpack.c.b16 %v1757, %v1753
    %v2578 = vpack.c.b16 %v1762, %v1758
    %v2579 = vpack.c.b16 %v1763, %v1759
    %v2580 = vpack.c.b16 %v1764, %v1760
    %v2581 = vpack.c.b16 %v1765, %v1761
    %v2582 = vpack.c.b16 %v1770, %v1766
    %v2583 = vpack.c.b16 %v1771, %v1767
    %v2584 = vpack.c.b16 %v1772, %v1768
    %v2585 = vpack.c.b16 %v1773, %v1769
    %v2586 = vpack.c.b16 %v1778, %v1774
    %v2587 = vpack.c.b16 %v1779, %v1775
    %v2588 = vpack.c.b16 %v1780, %v1776
    %v2589 = vpack.c.b16 %v1781, %v1777
    %v2590 = vpack.c.b16 %v1786, %v1782
    %v2591 = vpack.c.b16 %v1787, %v1783
    %v2592 = vpack.c.b16 %v1788, %v1784
    %v2593 = vpack.c.b16 %v1789, %v1785
    %v2594 = vpack.c.b16 %v1794, %v1790
    %v2595 = vpack.c.b16 %v1795, %v1791
    %v2596 = vpack.c.b16 %v1796, %v1792
    %v2597 = vpack.c.b16 %v1797, %v1793
    %v2598 = vpack.c.b16 %v1802, %v1798
    %v2599 = vpack.c.b16 %v1803, %v1799
    %v2600 = vpack.c.b16 %v1804, %v1800
    %v2601 = vpack.c.b16 %v1805, %v1801
    %v2602 = vpack.c.b16 %v1810, %v1806
    %v2603 = vpack.c.b16 %v1811, %v1807
    %v2604 = vpack.c.b16 %v1812, %v1808
    %v2605 = vpack.c.b16 %v1813, %v1809
    %v2606 = vpack.c.b16 %v1818, %v1814
    %v2607 = vpack.c.b16 %v1819, %v1815
    %v2608 = vpack.c.b16 %v1820, %v1816
    %v2609 = vpack.c.b16 %v1821, %v1817
    %v2610 = vpack.c.b16 %v1826, %v1822
    %v2611 = vpack.c.b16 %v1827, %v1823
    %v2612 = vpack.c.b16 %v1828, %v1824
    %v2613 = vpack.c.b16 %v1829, %v1825
    %v2614 = vpack.c.b16 %v1834, %v1830
    %v2615 = vpack.c.b16 %v1835, %v1831
    %v2616 = vpack.c.b16 %v1836, %v1832
    %v2617 = vpack.c.b16 %v1837, %v1833
    %v2618 = vpack.c.b16 %v1842, %v1838
    %v2619 = vpack.c.b16 %v1843, %v1839
    %v2620 = vpack.c.b16 %v1844, %v1840
    %v2621 = vpack.c.b16 %v1845, %v1841
    %v2622 = vpack.c.b16 %v1850, %v1846
    %v2623 = vpack.c.b16 %v1851, %v1847
    %v2624 = vpack.c.b16 %v1852, %v1848
    %v2625 = vpack.c.b16 %v1853, %v1849
    %v2626 = vpack.c.b16 %v1858, %v1854
    %v2627 = vpack.c.b16 %v1859, %v1855
    %v2628 = vpack.c.b16 %v1860, %v1856
    %v2629 = vpack.c.b16 %v1861, %v1857
    %v2630 = vpack.c.b16 %v1866, %v1862
    %v2631 = vpack.c.b16 %v1867, %v1863
    %v2632 = vpack.c.b16 %v1868, %v1864
    %v2633 = vpack.c.b16 %v1869, %v1865
    %v2634 = vpack.c.b16 %v1874, %v1870
    %v2635 = vpack.c.b16 %v1875, %v1871
    %v2636 = vpack.c.b16 %v1876, %v1872
    %v2637 = vpack.c.b16 %v1877, %v1873
    %v2638 = vpack.c.b16 %v1882, %v1878
    %v2639 = vpack.c.b16 %v1883, %v1879
    %v2640 = vpack.c.b16 %v1884, %v1880
    %v2641 = vpack.c.b16 %v1885, %v1881
    %v2642 = vpack.c.b16 %v1890, %v1886
    %v2643 = vpack.c.b16 %v1891, %v1887
    %v2644 = vpack.c.b16 %v1892, %v1888
    %v2645 = vpack.c.b16 %v1893, %v1889
    %v2646 = vpack.c.b16 %v1898, %v1894
    %v2647 = vpack.c.b16 %v1899, %v1895
    %v2648 = vpack.c.b16 %v1900, %v1896
    %v2649 = vpack.c.b16 %v1901, %v1897
    %v2650 = vpack.c.b16 %v1906, %v1902
    %v2651 = vpack.c.b16 %v1907, %v1903
    %v2652 = vpack.c.b16 %v1908, %v1904
    %v2653 = vpack.c.b16 %v1909, %v1905
    %v2654 = vpack.c.b16 %v1914, %v1910
    %v2655 = vpack.c.b16 %v1915, %v1911
    %v2656 = vpack.c.b16 %v1916, %v1912
    %v2657 = vpack.c.b16 %v1917, %v1913
    %v2658 = vpack.c.b16 %v1922, %v1918
    %v2659 = vpack.c.b16 %v1923, %v1919
    %v2660 = vpack.c.b16 %v1924, %v1920
    %v2661 = vpack.c.b16 %v1925, %v1921
    %v2662 = vpack.c.b16 %v1930, %v1926
    %v2663 = vpack.c.b16 %v1931, %v1927
    %v2664 = vpack.c.b16 %v1932, %v1928
    %v2665 = vpack.c.b16 %v1933, %v1929
    %v2666 = vpack.c.b16 %v1938, %v1934
    %v2667 = vpack.c.b16 %v1939, %v1935
    %v2668 = vpack.c.b16 %v1940, %v1936
    %v2669 = vpack.c.b16 %v1941, %v1937
    %v2670 = vpack.c.b16 %v1946, %v1942
    %v2671 = vpack.c.b16 %v1947, %v1943
    %v2672 = vpack.c.b16 %v1948, %v1944
    %v2673 = vpack.c.b16 %v1949, %v1945
    %v2674 = vpack.c.b16 %v1954, %v1950
    %v2675 = vpack.c.b16 %v1955, %v1951
    %v2676 = vpack.c.b16 %v1956, %v1952
    %v2677 = vpack.c.b16 %v1957, %v1953
    %v2678 = vpack.c.b16 %v1962, %v1958
    %v2679 = vpack.c.b16 %v1963, %v1959
    %v2680 = vpack.c.b16 %v1964, %v1960
    %v2681 = vpack.c.b16 %v1965, %v1961
    %v2682 = vpack.c.b16 %v1970, %v1966
    %v2683 = vpack.c.b16 %v1971, %v1967
    %v2684 = vpack.c.b16 %v1972, %v1968
    %v2685 = vpack.c.b16 %v1973, %v1969
    %v2686 = vpack.c.b16 %v1978, %v1974
    %v2687 = vpack.c.b16 %v1979, %v1975
    %v2688 = vpack.c.b16 %v1980, %v1976
    %v2689 = vpack.c.b16 %v1981, %v1977
    %v2690 = vpack.c.b16 %v1986, %v1982
    %v2691 = vpack.c.b16 %v1987, %v1983
    %v2692 = vpack.c.b16 %v1988, %v1984
    %v2693 = vpack.c.b16 %v1989, %v1985
    %v2694 = vpack.c.b16 %v1994, %v1990
    %v2695 = vpack.c.b16 %v1995, %v1991
    %v2696 = vpack.c.b16 %v1996, %v1992
    %v2697 = vpack.c.b16 %v1997, %v1993
    %v2698 = vpack.c.b16 %v2002, %v1998
    %v2699 = vpack.c.b16 %v2003, %v1999
    %v2700 = vpack.c.b16 %v2004, %v2000
    %v2701 = vpack.c.b16 %v2005, %v2001
    %v2702 = vpack.c.b16 %v2010, %v2006
    %v2703 = vpack.c.b16 %v2011, %v2007
    %v2704 = vpack.c.b16 %v2012, %v2008
    %v2705 = vpack.c.b16 %v2013, %v2009
    %v2706 = vpack.c.b16 %v2018, %v2014
    %v2707 = vpack.c.b16 %v2019, %v2015
    %v2708 = vpack.c.b16 %v2020, %v2016
    %v2709 = vpack.c.b16 %v2021, %v2017
    %v2710 = vpack.c.b16 %v2026, %v2022
    %v2711 = vpack.c.b16 %v2027, %v2023
    %v2712 = vpack.c.b16 %v2028, %v2024
    %v2713 = vpack.c.b16 %v2029, %v2025
    %v2714 = vpack.c.b16 %v2034, %v2030
    %v2715 = vpack.c.b16 %v2035, %v2031
    %v2716 = vpack.c.b16 %v2036, %v2032
    %v2717 = vpack.c.b16 %v2037, %v2033
    %v2718 = vpack.c.b16 %v2042, %v2038
    %v2719 = vpack.c.b16 %v2043, %v2039
    %v2720 = vpack.c.b16 %v2044, %v2040
    %v2721 = vpack.c.b16 %v2045, %v2041
    %v2722 = vpack.c.b16 %v2050, %v2046
    %v2723 = vpack.c.b16 %v2051, %v2047
    %v2724 = vpack.c.b16 %v2052, %v2048
    %v2725 = vpack.c.b16 %v2053, %v2049
    %v2726 = vpack.c.b16 %v2058, %v2054
    %v2727 = vpack.c.b16 %v2059, %v2055
    %v2728 = vpack.c.b16 %v2060, %v2056
    %v2729 = vpack.c.b16 %v2061, %v2057
    %v2730 = vpack.c.b16 %v2066, %v2062
    %v2731 = vpack.c.b16 %v2067, %v2063
    %v2732 = vpack.c.b16 %v2068, %v2064
    %v2733 = vpack.c.b16 %v2069, %v2065
    %v2734 = vpack.c.b16 %v2074, %v2070
    %v2735 = vpack.c.b16 %v2075, %v2071
    %v2736 = vpack.c.b16 %v2076, %v2072
    %v2737 = vpack.c.b16 %v2077, %v2073
    %v2738 = vpack.c.b16 %v2082, %v2078
    %v2739 = vpack.c.b16 %v2083, %v2079
    %v2740 = vpack.c.b16 %v2084, %v2080
    %v2741 = vpack.c.b16 %v2085, %v2081
    %v2742 = vpack.c.b16 %v2090, %v2086
    %v2743 = vpack.c.b16 %v2091, %v2087
    %v2744 = vpack.c.b16 %v2092, %v2088
    %v2745 = vpack.c.b16 %v2093, %v2089
    %v2746 = vpack.c.b16 %v2098, %v2094
    %v2747 = vpack.c.b16 %v2099, %v2095
    %v2748 = vpack.c.b16 %v2100, %v2096
    %v2749 = vpack.c.b16 %v2101, %v2097
    %v2750 = vpack.c.b16 %v2106, %v2102
    %v2751 = vpack.c.b16 %v2107, %v2103
    %v2752 = vpack.c.b16 %v2108, %v2104
    %v2753 = vpack.c.b16 %v2109, %v2105
    %v2754 = vpack.c.b16 %v2114, %v2110
    %v2755 = vpack.c.b16 %v2115, %v2111
    %v2756 = vpack.c.b16 %v2116, %v2112
    %v2757 = vpack.c.b16 %v2117, %v2113
    %v2758 = vpack.c.b16 %v2122, %v2118
    %v2759 = vpack.c.b16 %v2123, %v2119
    %v2760 = vpack.c.b16 %v2124, %v2120
    %v2761 = vpack.c.b16 %v2125, %v2121
    %v2762 = vpack.c.b16 %v2130, %v2126
    %v2763 = vpack.c.b16 %v2131, %v2127
    %v2764 = vpack.c.b16 %v2132, %v2128
    %v2765 = vpack.c.b16 %v2133, %v2129
    %v2766 = vpack.c.b16 %v2138, %v2134
    %v2767 = vpack.c.b16 %v2139, %v2135
    %v2768 = vpack.c.b16 %v2140, %v2136
    %v2769 = vpack.c.b16 %v2141, %v2137
    %v2770 = vpack.c.b16 %v2146, %v2142
    %v2771 = vpack.c.b16 %v2147, %v2143
    %v2772 = vpack.c.b16 %v2148, %v2144
    %v2773 = vpack.c.b16 %v2149, %v2145
    %v2774 = vpack.c.b16 %v2154, %v2150
    %v2775 = vpack.c.b16 %v2155, %v2151
    %v2776 = vpack.c.b16 %v2156, %v2152
    %v2777 = vpack.c.b16 %v2157, %v2153
    %v2778 = vpack.c.b16 %v2162, %v2158
    %v2779 = vpack.c.b16 %v2163, %v2159
    %v2780 = vpack.c.b16 %v2164, %v2160
    %v2781 = vpack.c.b16 %v2165, %v2161
    %v2782 = vpack.c.b16 %v2170, %v2166
    %v2783 = vpack.c.b16 %v2171, %v2167
    %v2784 = vpack.c.b16 %v2172, %v2168
    %v2785 = vpack.c.b16 %v2173, %v2169
    %v2786 = vpack.c.b16 %v2178, %v2174
    %v2787 = vpack.c.b16 %v2179, %v2175
    %v2788 = vpack.c.b16 %v2180, %v2176
    %v2789 = vpack.c.b16 %v2181, %v2177
    %v2790 = vpack.c.b16 %v2186, %v2182
    %v2791 = vpack.c.b16 %v2187, %v2183
    %v2792 = vpack.c.b16 %v2188, %v2184
    %v2793 = vpack.c.b16 %v2189, %v2185
    %v2794 = vpack.c.b16 %v2194, %v2190
    %v2795 = vpack.c.b16 %v2195, %v2191
    %v2796 = vpack.c.b16 %v2196, %v2192
    %v2797 = vpack.c.b16 %v2197, %v2193
    %v2798 = vpack.c.b16 %v2202, %v2198
    %v2799 = vpack.c.b16 %v2203, %v2199
    %v2800 = vpack.c.b16 %v2204, %v2200
    %v2801 = vpack.c.b16 %v2205, %v2201
    %v2802 = vpack.c.b16 %v2210, %v2206
    %v2803 = vpack.c.b16 %v2211, %v2207
    %v2804 = vpack.c.b16 %v2212, %v2208
    %v2805 = vpack.c.b16 %v2213, %v2209
    %v2806 = vpack.c.b16 %v2218, %v2214
    %v2807 = vpack.c.b16 %v2219, %v2215
    %v2808 = vpack.c.b16 %v2220, %v2216
    %v2809 = vpack.c.b16 %v2221, %v2217
    %v2810 = vpack.c.b16 %v2226, %v2222
    %v2811 = vpack.c.b16 %v2227, %v2223
    %v2812 = vpack.c.b16 %v2228, %v2224
    %v2813 = vpack.c.b16 %v2229, %v2225
    %v2814 = vpack.c.b16 %v2234, %v2230
    %v2815 = vpack.c.b16 %v2235, %v2231
    %v2816 = vpack.c.b16 %v2236, %v2232
    %v2817 = vpack.c.b16 %v2237, %v2233
    %v2818 = vpack.c.b16 %v2242, %v2238
    %v2819 = vpack.c.b16 %v2243, %v2239
    %v2820 = vpack.c.b16 %v2244, %v2240
    %v2821 = vpack.c.b16 %v2245, %v2241
    %v2822 = vpack.c.b16 %v2250, %v2246
    %v2823 = vpack.c.b16 %v2251, %v2247
    %v2824 = vpack.c.b16 %v2252, %v2248
    %v2825 = vpack.c.b16 %v2253, %v2249
    %v2826 = vpack.c.b16 %v2258, %v2254
    %v2827 = vpack.c.b16 %v2259, %v2255
    %v2828 = vpack.c.b16 %v2260, %v2256
    %v2829 = vpack.c.b16 %v2261, %v2257
    %v2830 = vpack.c.b16 %v2266, %v2262
    %v2831 = vpack.c.b16 %v2267, %v2263
    %v2832 = vpack.c.b16 %v2268, %v2264
    %v2833 = vpack.c.b16 %v2269, %v2265
    %v2834 = vpack.c.b16 %v2274, %v2270
    %v2835 = vpack.c.b16 %v2275, %v2271
    %v2836 = vpack.c.b16 %v2276, %v2272
    %v2837 = vpack.c.b16 %v2277, %v2273
    %v2838 = vpack.c.b16 %v2282, %v2278
    %v2839 = vpack.c.b16 %v2283, %v2279
    %v2840 = vpack.c.b16 %v2284, %v2280
    %v2841 = vpack.c.b16 %v2285, %v2281
    %v2842 = vpack.c.b16 %v2290, %v2286
    %v2843 = vpack.c.b16 %v2291, %v2287
    %v2844 = vpack.c.b16 %v2292, %v2288
    %v2845 = vpack.c.b16 %v2293, %v2289
    %v2846 = vpack.c.b16 %v2298, %v2294
    %v2847 = vpack.c.b16 %v2299, %v2295
    %v2848 = vpack.c.b16 %v2300, %v2296
    %v2849 = vpack.c.b16 %v2301, %v2297
    %v2850 = vpack.c.b16 %v2306, %v2302
    %v2851 = vpack.c.b16 %v2307, %v2303
    %v2852 = vpack.c.b16 %v2308, %v2304
    %v2853 = vpack.c.b16 %v2309, %v2305
    %v2854 = vpack.c.b16 %v2314, %v2310
    %v2855 = vpack.c.b16 %v2315, %v2311
    %v2856 = vpack.c.b16 %v2316, %v2312
    %v2857 = vpack.c.b16 %v2317, %v2313
    %v2858 = vpack.c.b16 %v2322, %v2318
    %v2859 = vpack.c.b16 %v2323, %v2319
    %v2860 = vpack.c.b16 %v2324, %v2320
    %v2861 = vpack.c.b16 %v2325, %v2321
    %v2862 = vpack.c.b16 %v2330, %v2326
    %v2863 = vpack.c.b16 %v2331, %v2327
    %v2864 = vpack.c.b16 %v2332, %v2328
    %v2865 = vpack.c.b16 %v2333, %v2329
    %v2866 = vpack.c.b16 %v2338, %v2334
    %v2867 = vpack.c.b16 %v2339, %v2335
    %v2868 = vpack.c.b16 %v2340, %v2336
    %v2869 = vpack.c.b16 %v2341, %v2337
    %v2870 = vpack.c.b16 %v2346, %v2342
    %v2871 = vpack.c.b16 %v2347, %v2343
    %v2872 = vpack.c.b16 %v2348, %v2344
    %v2873 = vpack.c.b16 %v2349, %v2345
    %v2874 = vpack.c.b16 %v2354, %v2350
    %v2875 = vpack.c.b16 %v2355, %v2351
    %v2876 = vpack.c.b16 %v2356, %v2352
    %v2877 = vpack.c.b16 %v2357, %v2353
    %v2878 = vpack.c.b16 %v2362, %v2358
    %v2879 = vpack.c.b16 %v2363, %v2359
    %v2880 = vpack.c.b16 %v2364, %v2360
    %v2881 = vpack.c.b16 %v2365, %v2361
    %v2882 = vpack.c.b16 %v2370, %v2366
    %v2883 = vpack.c.b16 %v2371, %v2367
    %v2884 = vpack.c.b16 %v2372, %v2368
    %v2885 = vpack.c.b16 %v2373, %v2369
    %3398 = vmatprep.subr.bf16.mxu0 %v2403
    %3399 = vmatpush1.bf16.msra.mxu0 %v2402
    %3400 = vmatprep.subr.bf16.mxu0 %v2399
    %3401 = vmatpush1.bf16.msra.mxu0 %v2398
    %3402 = vmatprep.subr.bf16.mxu0 %v2395
    %3403 = vmatpush1.bf16.msra.mxu0 %v2394
    %3404 = vmatprep.subr.bf16.mxu0 %v2391
    %3405 = vmatpush1.bf16.msra.mxu0 %v2390
    %3406 = vmatprep.subr.bf16.mxu0 %v2387
    %3407 = vmatpush1.bf16.msra.mxu0 %v2386
    %3408 = vmatprep.subr.bf16.mxu0 %v2383
    %3409 = vmatpush1.bf16.msra.mxu0 %v2382
    %3410 = vmatprep.subr.bf16.mxu0 %v2379
    %3411 = vmatpush1.bf16.msra.mxu0 %v2378
    %3412 = vmatprep.subr.bf16.mxu0 %v2375
    %3413 = vmatpush1.bf16.msra.mxu0 %v2374
    %3414 = vmatprep.subr.bf16.mxu0 %v2435
    %3415 = vmatpush2.bf16.msra.mxu0 %v2434
    %3416 = vmatprep.subr.bf16.mxu0 %v2431
    %3417 = vmatpush2.bf16.msra.mxu0 %v2430
    %3418 = vmatprep.subr.bf16.mxu0 %v2427
    %3419 = vmatpush2.bf16.msra.mxu0 %v2426
    %3420 = vmatprep.subr.bf16.mxu0 %v2423
    %3421 = vmatpush2.bf16.msra.mxu0 %v2422
    %3422 = vmatprep.subr.bf16.mxu0 %v2419
    %3423 = vmatpush2.bf16.msra.mxu0 %v2418
    %3424 = vmatprep.subr.bf16.mxu0 %v2415
    %3425 = vmatpush2.bf16.msra.mxu0 %v2414
    %3426 = vmatprep.subr.bf16.mxu0 %v2411
    %3427 = vmatpush2.bf16.msra.mxu0 %v2410
    %3428 = vmatprep.subr.bf16.mxu0 %v2407
    %3429 = vmatpush2.bf16.msra.mxu0 %v2406
    %3430 = vmatprep.mubr.bf16.mxu0 %v289
    %3431 = vmatmul.mubr.bf16.gmra.mxu0 %v288
    %v3432 = vpop.f32.mrf.mxu0
    %v3433 = vadd.f32 %v821, %v3432
    %v3434 = vpop.f32.mrf.mxu0
    %v3435 = vadd.f32 %v825, %v3434
    %v3436 = vpop.f32.mrf.mxu0
    %v3437 = vpop.f32.mrf.mxu0
    %3438 = vdwg.mxu0
    %3439 = vmatprep.subr.bf16.mxu0 %v2467
    %3440 = vmatpush1.bf16.msra.mxu0 %v2466
    %3441 = vmatprep.subr.bf16.mxu0 %v2463
    %3442 = vmatpush1.bf16.msra.mxu0 %v2462
    %3443 = vmatprep.subr.bf16.mxu0 %v2459
    %3444 = vmatpush1.bf16.msra.mxu0 %v2458
    %3445 = vmatprep.subr.bf16.mxu0 %v2455
    %3446 = vmatpush1.bf16.msra.mxu0 %v2454
    %3447 = vmatprep.subr.bf16.mxu0 %v2451
    %3448 = vmatpush1.bf16.msra.mxu0 %v2450
    %3449 = vmatprep.subr.bf16.mxu0 %v2447
    %3450 = vmatpush1.bf16.msra.mxu0 %v2446
    %3451 = vmatprep.subr.bf16.mxu0 %v2443
    %3452 = vmatpush1.bf16.msra.mxu0 %v2442
    %3453 = vmatprep.subr.bf16.mxu0 %v2439
    %3454 = vmatpush1.bf16.msra.mxu0 %v2438
    %3455 = vmatprep.subr.bf16.mxu0 %v2499
    %3456 = vmatpush2.bf16.msra.mxu0 %v2498
    %3457 = vmatprep.subr.bf16.mxu0 %v2495
    %3458 = vmatpush2.bf16.msra.mxu0 %v2494
    %3459 = vmatprep.subr.bf16.mxu0 %v2491
    %3460 = vmatpush2.bf16.msra.mxu0 %v2490
    %3461 = vmatprep.subr.bf16.mxu0 %v2487
    %3462 = vmatpush2.bf16.msra.mxu0 %v2486
    %3463 = vmatprep.subr.bf16.mxu0 %v2483
    %3464 = vmatpush2.bf16.msra.mxu0 %v2482
    %3465 = vmatprep.subr.bf16.mxu0 %v2479
    %3466 = vmatpush2.bf16.msra.mxu0 %v2478
    %3467 = vmatprep.subr.bf16.mxu0 %v2475
    %3468 = vmatpush2.bf16.msra.mxu0 %v2474
    %3469 = vmatprep.subr.bf16.mxu0 %v2471
    %3470 = vmatpush2.bf16.msra.mxu0 %v2470
    %3471 = vmatprep.mubr.bf16.mxu0 %v291
    %3472 = vmatmul.mubr.bf16.gmra.mxu0 %v290
    %v3473 = vpop.f32.mrf.mxu0
    %v3474 = vadd.f32 %v3433, %v3473
    %v3475 = vpop.f32.mrf.mxu0
    %v3476 = vadd.f32 %v3435, %v3475
    %v3477 = vpop.f32.mrf.mxu0
    %v3478 = vpop.f32.mrf.mxu0
    %3479 = vdwg.mxu0
    %3480 = vmatprep.subr.bf16.mxu0 %v2531
    %3481 = vmatpush1.bf16.msra.mxu0 %v2530
    %3482 = vmatprep.subr.bf16.mxu0 %v2527
    %3483 = vmatpush1.bf16.msra.mxu0 %v2526
    %3484 = vmatprep.subr.bf16.mxu0 %v2523
    %3485 = vmatpush1.bf16.msra.mxu0 %v2522
    %3486 = vmatprep.subr.bf16.mxu0 %v2519
    %3487 = vmatpush1.bf16.msra.mxu0 %v2518
    %3488 = vmatprep.subr.bf16.mxu0 %v2515
    %3489 = vmatpush1.bf16.msra.mxu0 %v2514
    %3490 = vmatprep.subr.bf16.mxu0 %v2511
    %3491 = vmatpush1.bf16.msra.mxu0 %v2510
    %3492 = vmatprep.subr.bf16.mxu0 %v2507
    %3493 = vmatpush1.bf16.msra.mxu0 %v2506
    %3494 = vmatprep.subr.bf16.mxu0 %v2503
    %3495 = vmatpush1.bf16.msra.mxu0 %v2502
    %3496 = vmatprep.subr.bf16.mxu0 %v2563
    %3497 = vmatpush2.bf16.msra.mxu0 %v2562
    %3498 = vmatprep.subr.bf16.mxu0 %v2559
    %3499 = vmatpush2.bf16.msra.mxu0 %v2558
    %3500 = vmatprep.subr.bf16.mxu0 %v2555
    %3501 = vmatpush2.bf16.msra.mxu0 %v2554
    %3502 = vmatprep.subr.bf16.mxu0 %v2551
    %3503 = vmatpush2.bf16.msra.mxu0 %v2550
    %3504 = vmatprep.subr.bf16.mxu0 %v2547
    %3505 = vmatpush2.bf16.msra.mxu0 %v2546
    %3506 = vmatprep.subr.bf16.mxu0 %v2543
    %3507 = vmatpush2.bf16.msra.mxu0 %v2542
    %3508 = vmatprep.subr.bf16.mxu0 %v2539
    %3509 = vmatpush2.bf16.msra.mxu0 %v2538
    %3510 = vmatprep.subr.bf16.mxu0 %v2535
    %3511 = vmatpush2.bf16.msra.mxu0 %v2534
    %3512 = vmatprep.mubr.bf16.mxu0 %v293
    %3513 = vmatmul.mubr.bf16.gmra.mxu0 %v292
    %v3514 = vpop.f32.mrf.mxu0
    %v3515 = vadd.f32 %v3474, %v3514
    %v3516 = vpop.f32.mrf.mxu0
    %v3517 = vadd.f32 %v3476, %v3516
    %v3518 = vpop.f32.mrf.mxu0
    %v3519 = vpop.f32.mrf.mxu0
    %3520 = vdwg.mxu0
    %3521 = vmatprep.subr.bf16.mxu0 %v2595
    %3522 = vmatpush1.bf16.msra.mxu0 %v2594
    %3523 = vmatprep.subr.bf16.mxu0 %v2591
    %3524 = vmatpush1.bf16.msra.mxu0 %v2590
    %3525 = vmatprep.subr.bf16.mxu0 %v2587
    %3526 = vmatpush1.bf16.msra.mxu0 %v2586
    %3527 = vmatprep.subr.bf16.mxu0 %v2583
    %3528 = vmatpush1.bf16.msra.mxu0 %v2582
    %3529 = vmatprep.subr.bf16.mxu0 %v2579
    %3530 = vmatpush1.bf16.msra.mxu0 %v2578
    %3531 = vmatprep.subr.bf16.mxu0 %v2575
    %3532 = vmatpush1.bf16.msra.mxu0 %v2574
    %3533 = vmatprep.subr.bf16.mxu0 %v2571
    %3534 = vmatpush1.bf16.msra.mxu0 %v2570
    %3535 = vmatprep.subr.bf16.mxu0 %v2567
    %3536 = vmatpush1.bf16.msra.mxu0 %v2566
    %3537 = vmatprep.subr.bf16.mxu0 %v2627
    %3538 = vmatpush2.bf16.msra.mxu0 %v2626
    %3539 = vmatprep.subr.bf16.mxu0 %v2623
    %3540 = vmatpush2.bf16.msra.mxu0 %v2622
    %3541 = vmatprep.subr.bf16.mxu0 %v2619
    %3542 = vmatpush2.bf16.msra.mxu0 %v2618
    %3543 = vmatprep.subr.bf16.mxu0 %v2615
    %3544 = vmatpush2.bf16.msra.mxu0 %v2614
    %3545 = vmatprep.subr.bf16.mxu0 %v2611
    %3546 = vmatpush2.bf16.msra.mxu0 %v2610
    %3547 = vmatprep.subr.bf16.mxu0 %v2607
    %3548 = vmatpush2.bf16.msra.mxu0 %v2606
    %3549 = vmatprep.subr.bf16.mxu0 %v2603
    %3550 = vmatpush2.bf16.msra.mxu0 %v2602
    %3551 = vmatprep.subr.bf16.mxu0 %v2599
    %3552 = vmatpush2.bf16.msra.mxu0 %v2598
    %3553 = vmatprep.mubr.bf16.mxu0 %v295
    %3554 = vmatmul.mubr.bf16.gmra.mxu0 %v294
    %v3555 = vpop.f32.mrf.mxu0
    %v3556 = vadd.f32 %v3515, %v3555
    %v3557 = vpop.f32.mrf.mxu0
    %v3558 = vadd.f32 %v3517, %v3557
    %v3559 = vpop.f32.mrf.mxu0
    %v3560 = vpop.f32.mrf.mxu0
    %3561 = vdwg.mxu0
    %3562 = vmatprep.subr.bf16.mxu0 %v2659
    %3563 = vmatpush1.bf16.msra.mxu0 %v2658
    %3564 = vmatprep.subr.bf16.mxu0 %v2655
    %3565 = vmatpush1.bf16.msra.mxu0 %v2654
    %3566 = vmatprep.subr.bf16.mxu0 %v2651
    %3567 = vmatpush1.bf16.msra.mxu0 %v2650
    %3568 = vmatprep.subr.bf16.mxu0 %v2647
    %3569 = vmatpush1.bf16.msra.mxu0 %v2646
    %3570 = vmatprep.subr.bf16.mxu0 %v2643
    %3571 = vmatpush1.bf16.msra.mxu0 %v2642
    %3572 = vmatprep.subr.bf16.mxu0 %v2639
    %3573 = vmatpush1.bf16.msra.mxu0 %v2638
    %3574 = vmatprep.subr.bf16.mxu0 %v2635
    %3575 = vmatpush1.bf16.msra.mxu0 %v2634
    %3576 = vmatprep.subr.bf16.mxu0 %v2631
    %3577 = vmatpush1.bf16.msra.mxu0 %v2630
    %3578 = vmatprep.subr.bf16.mxu0 %v2691
    %3579 = vmatpush2.bf16.msra.mxu0 %v2690
    %3580 = vmatprep.subr.bf16.mxu0 %v2687
    %3581 = vmatpush2.bf16.msra.mxu0 %v2686
    %3582 = vmatprep.subr.bf16.mxu0 %v2683
    %3583 = vmatpush2.bf16.msra.mxu0 %v2682
    %3584 = vmatprep.subr.bf16.mxu0 %v2679
    %3585 = vmatpush2.bf16.msra.mxu0 %v2678
    %3586 = vmatprep.subr.bf16.mxu0 %v2675
    %3587 = vmatpush2.bf16.msra.mxu0 %v2674
    %3588 = vmatprep.subr.bf16.mxu0 %v2671
    %3589 = vmatpush2.bf16.msra.mxu0 %v2670
    %3590 = vmatprep.subr.bf16.mxu0 %v2667
    %3591 = vmatpush2.bf16.msra.mxu0 %v2666
    %3592 = vmatprep.subr.bf16.mxu0 %v2663
    %3593 = vmatpush2.bf16.msra.mxu0 %v2662
    %3594 = vmatprep.mubr.bf16.mxu0 %v297
    %3595 = vmatmul.mubr.bf16.gmra.mxu0 %v296
    %v3596 = vpop.f32.mrf.mxu0
    %v3597 = vadd.f32 %v3556, %v3596
    %v3598 = vpop.f32.mrf.mxu0
    %v3599 = vadd.f32 %v3558, %v3598
    %v3600 = vpop.f32.mrf.mxu0
    %v3601 = vpop.f32.mrf.mxu0
    %3602 = vdwg.mxu0
    %3603 = vmatprep.subr.bf16.mxu0 %v2723
    %3604 = vmatpush1.bf16.msra.mxu0 %v2722
    %3605 = vmatprep.subr.bf16.mxu0 %v2719
    %3606 = vmatpush1.bf16.msra.mxu0 %v2718
    %3607 = vmatprep.subr.bf16.mxu0 %v2715
    %3608 = vmatpush1.bf16.msra.mxu0 %v2714
    %3609 = vmatprep.subr.bf16.mxu0 %v2711
    %3610 = vmatpush1.bf16.msra.mxu0 %v2710
    %3611 = vmatprep.subr.bf16.mxu0 %v2707
    %3612 = vmatpush1.bf16.msra.mxu0 %v2706
    %3613 = vmatprep.subr.bf16.mxu0 %v2703
    %3614 = vmatpush1.bf16.msra.mxu0 %v2702
    %3615 = vmatprep.subr.bf16.mxu0 %v2699
    %3616 = vmatpush1.bf16.msra.mxu0 %v2698
    %3617 = vmatprep.subr.bf16.mxu0 %v2695
    %3618 = vmatpush1.bf16.msra.mxu0 %v2694
    %3619 = vmatprep.subr.bf16.mxu0 %v2755
    %3620 = vmatpush2.bf16.msra.mxu0 %v2754
    %3621 = vmatprep.subr.bf16.mxu0 %v2751
    %3622 = vmatpush2.bf16.msra.mxu0 %v2750
    %3623 = vmatprep.subr.bf16.mxu0 %v2747
    %3624 = vmatpush2.bf16.msra.mxu0 %v2746
    %3625 = vmatprep.subr.bf16.mxu0 %v2743
    %3626 = vmatpush2.bf16.msra.mxu0 %v2742
    %3627 = vmatprep.subr.bf16.mxu0 %v2739
    %3628 = vmatpush2.bf16.msra.mxu0 %v2738
    %3629 = vmatprep.subr.bf16.mxu0 %v2735
    %3630 = vmatpush2.bf16.msra.mxu0 %v2734
    %3631 = vmatprep.subr.bf16.mxu0 %v2731
    %3632 = vmatpush2.bf16.msra.mxu0 %v2730
    %3633 = vmatprep.subr.bf16.mxu0 %v2727
    %3634 = vmatpush2.bf16.msra.mxu0 %v2726
    %3635 = vmatprep.mubr.bf16.mxu0 %v299
    %3636 = vmatmul.mubr.bf16.gmra.mxu0 %v298
    %v3637 = vpop.f32.mrf.mxu0
    %v3638 = vadd.f32 %v3597, %v3637
    %v3639 = vpop.f32.mrf.mxu0
    %v3640 = vadd.f32 %v3599, %v3639
    %v3641 = vpop.f32.mrf.mxu0
    %v3642 = vpop.f32.mrf.mxu0
    %3643 = vdwg.mxu0
    %3644 = vmatprep.subr.bf16.mxu0 %v2787
    %3645 = vmatpush1.bf16.msra.mxu0 %v2786
    %3646 = vmatprep.subr.bf16.mxu0 %v2783
    %3647 = vmatpush1.bf16.msra.mxu0 %v2782
    %3648 = vmatprep.subr.bf16.mxu0 %v2779
    %3649 = vmatpush1.bf16.msra.mxu0 %v2778
    %3650 = vmatprep.subr.bf16.mxu0 %v2775
    %3651 = vmatpush1.bf16.msra.mxu0 %v2774
    %3652 = vmatprep.subr.bf16.mxu0 %v2771
    %3653 = vmatpush1.bf16.msra.mxu0 %v2770
    %3654 = vmatprep.subr.bf16.mxu0 %v2767
    %3655 = vmatpush1.bf16.msra.mxu0 %v2766
    %3656 = vmatprep.subr.bf16.mxu0 %v2763
    %3657 = vmatpush1.bf16.msra.mxu0 %v2762
    %3658 = vmatprep.subr.bf16.mxu0 %v2759
    %3659 = vmatpush1.bf16.msra.mxu0 %v2758
    %3660 = vmatprep.subr.bf16.mxu0 %v2819
    %3661 = vmatpush2.bf16.msra.mxu0 %v2818
    %3662 = vmatprep.subr.bf16.mxu0 %v2815
    %3663 = vmatpush2.bf16.msra.mxu0 %v2814
    %3664 = vmatprep.subr.bf16.mxu0 %v2811
    %3665 = vmatpush2.bf16.msra.mxu0 %v2810
    %3666 = vmatprep.subr.bf16.mxu0 %v2807
    %3667 = vmatpush2.bf16.msra.mxu0 %v2806
    %3668 = vmatprep.subr.bf16.mxu0 %v2803
    %3669 = vmatpush2.bf16.msra.mxu0 %v2802
    %3670 = vmatprep.subr.bf16.mxu0 %v2799
    %3671 = vmatpush2.bf16.msra.mxu0 %v2798
    %3672 = vmatprep.subr.bf16.mxu0 %v2795
    %3673 = vmatpush2.bf16.msra.mxu0 %v2794
    %3674 = vmatprep.subr.bf16.mxu0 %v2791
    %3675 = vmatpush2.bf16.msra.mxu0 %v2790
    %3676 = vmatprep.mubr.bf16.mxu0 %v301
    %3677 = vmatmul.mubr.bf16.gmra.mxu0 %v300
    %v3678 = vpop.f32.mrf.mxu0
    %v3679 = vadd.f32 %v3638, %v3678
    %v3680 = vpop.f32.mrf.mxu0
    %v3681 = vadd.f32 %v3640, %v3680
    %v3682 = vpop.f32.mrf.mxu0
    %v3683 = vpop.f32.mrf.mxu0
    %3684 = vdwg.mxu0
    %3685 = vmatprep.subr.bf16.mxu0 %v2851
    %3686 = vmatpush1.bf16.msra.mxu0 %v2850
    %3687 = vmatprep.subr.bf16.mxu0 %v2847
    %3688 = vmatpush1.bf16.msra.mxu0 %v2846
    %3689 = vmatprep.subr.bf16.mxu0 %v2843
    %3690 = vmatpush1.bf16.msra.mxu0 %v2842
    %3691 = vmatprep.subr.bf16.mxu0 %v2839
    %3692 = vmatpush1.bf16.msra.mxu0 %v2838
    %3693 = vmatprep.subr.bf16.mxu0 %v2835
    %3694 = vmatpush1.bf16.msra.mxu0 %v2834
    %3695 = vmatprep.subr.bf16.mxu0 %v2831
    %3696 = vmatpush1.bf16.msra.mxu0 %v2830
    %3697 = vmatprep.subr.bf16.mxu0 %v2827
    %3698 = vmatpush1.bf16.msra.mxu0 %v2826
    %3699 = vmatprep.subr.bf16.mxu0 %v2823
    %3700 = vmatpush1.bf16.msra.mxu0 %v2822
    %3701 = vmatprep.subr.bf16.mxu0 %v2883
    %3702 = vmatpush2.bf16.msra.mxu0 %v2882
    %3703 = vmatprep.subr.bf16.mxu0 %v2879
    %3704 = vmatpush2.bf16.msra.mxu0 %v2878
    %3705 = vmatprep.subr.bf16.mxu0 %v2875
    %3706 = vmatpush2.bf16.msra.mxu0 %v2874
    %3707 = vmatprep.subr.bf16.mxu0 %v2871
    %3708 = vmatpush2.bf16.msra.mxu0 %v2870
    %3709 = vmatprep.subr.bf16.mxu0 %v2867
    %3710 = vmatpush2.bf16.msra.mxu0 %v2866
    %3711 = vmatprep.subr.bf16.mxu0 %v2863
    %3712 = vmatpush2.bf16.msra.mxu0 %v2862
    %3713 = vmatprep.subr.bf16.mxu0 %v2859
    %3714 = vmatpush2.bf16.msra.mxu0 %v2858
    %3715 = vmatprep.subr.bf16.mxu0 %v2855
    %3716 = vmatpush2.bf16.msra.mxu0 %v2854
    %3717 = vmatprep.mubr.bf16.mxu0 %v303
    %3718 = vmatmul.mubr.bf16.gmra.mxu0 %v302
    %v3719 = vpop.f32.mrf.mxu0
    %v3720 = vadd.f32 %v3679, %v3719
    %v3721 = vpop.f32.mrf.mxu0
    %v3722 = vadd.f32 %v3681, %v3721
    %v3723 = vpop.f32.mrf.mxu0
    %v3724 = vpop.f32.mrf.mxu0
    %3725 = vdwg.mxu0
    %3726 = vmatprep.subr.bf16.mxu0 %v2405
    %3727 = vmatpush1.bf16.msra.mxu0 %v2404
    %3728 = vmatprep.subr.bf16.mxu0 %v2401
    %3729 = vmatpush1.bf16.msra.mxu0 %v2400
    %3730 = vmatprep.subr.bf16.mxu0 %v2397
    %3731 = vmatpush1.bf16.msra.mxu0 %v2396
    %3732 = vmatprep.subr.bf16.mxu0 %v2393
    %3733 = vmatpush1.bf16.msra.mxu0 %v2392
    %3734 = vmatprep.subr.bf16.mxu0 %v2389
    %3735 = vmatpush1.bf16.msra.mxu0 %v2388
    %3736 = vmatprep.subr.bf16.mxu0 %v2385
    %3737 = vmatpush1.bf16.msra.mxu0 %v2384
    %3738 = vmatprep.subr.bf16.mxu0 %v2381
    %3739 = vmatpush1.bf16.msra.mxu0 %v2380
    %3740 = vmatprep.subr.bf16.mxu0 %v2377
    %3741 = vmatpush1.bf16.msra.mxu0 %v2376
    %3742 = vmatprep.subr.bf16.mxu0 %v2437
    %3743 = vmatpush2.bf16.msra.mxu0 %v2436
    %3744 = vmatprep.subr.bf16.mxu0 %v2433
    %3745 = vmatpush2.bf16.msra.mxu0 %v2432
    %3746 = vmatprep.subr.bf16.mxu0 %v2429
    %3747 = vmatpush2.bf16.msra.mxu0 %v2428
    %3748 = vmatprep.subr.bf16.mxu0 %v2425
    %3749 = vmatpush2.bf16.msra.mxu0 %v2424
    %3750 = vmatprep.subr.bf16.mxu0 %v2421
    %3751 = vmatpush2.bf16.msra.mxu0 %v2420
    %3752 = vmatprep.subr.bf16.mxu0 %v2417
    %3753 = vmatpush2.bf16.msra.mxu0 %v2416
    %3754 = vmatprep.subr.bf16.mxu0 %v2413
    %3755 = vmatpush2.bf16.msra.mxu0 %v2412
    %3756 = vmatprep.subr.bf16.mxu0 %v2409
    %3757 = vmatpush2.bf16.msra.mxu0 %v2408
    %3758 = vmatprep.mubr.bf16.mxu0 %v289
    %3759 = vmatmul.mubr.bf16.gmra.mxu0 %v288
    %v3760 = vpop.f32.mrf.mxu0
    %v3761 = vadd.f32 %v829, %v3760
    %v3762 = vpop.f32.mrf.mxu0
    %v3763 = vadd.f32 %v833, %v3762
    %v3764 = vpop.f32.mrf.mxu0
    %v3765 = vpop.f32.mrf.mxu0
    %3766 = vdwg.mxu0
    %3767 = vmatprep.subr.bf16.mxu0 %v2469
    %3768 = vmatpush1.bf16.msra.mxu0 %v2468
    %3769 = vmatprep.subr.bf16.mxu0 %v2465
    %3770 = vmatpush1.bf16.msra.mxu0 %v2464
    %3771 = vmatprep.subr.bf16.mxu0 %v2461
    %3772 = vmatpush1.bf16.msra.mxu0 %v2460
    %3773 = vmatprep.subr.bf16.mxu0 %v2457
    %3774 = vmatpush1.bf16.msra.mxu0 %v2456
    %3775 = vmatprep.subr.bf16.mxu0 %v2453
    %3776 = vmatpush1.bf16.msra.mxu0 %v2452
    %3777 = vmatprep.subr.bf16.mxu0 %v2449
    %3778 = vmatpush1.bf16.msra.mxu0 %v2448
    %3779 = vmatprep.subr.bf16.mxu0 %v2445
    %3780 = vmatpush1.bf16.msra.mxu0 %v2444
    %3781 = vmatprep.subr.bf16.mxu0 %v2441
    %3782 = vmatpush1.bf16.msra.mxu0 %v2440
    %3783 = vmatprep.subr.bf16.mxu0 %v2501
    %3784 = vmatpush2.bf16.msra.mxu0 %v2500
    %3785 = vmatprep.subr.bf16.mxu0 %v2497
    %3786 = vmatpush2.bf16.msra.mxu0 %v2496
    %3787 = vmatprep.subr.bf16.mxu0 %v2493
    %3788 = vmatpush2.bf16.msra.mxu0 %v2492
    %3789 = vmatprep.subr.bf16.mxu0 %v2489
    %3790 = vmatpush2.bf16.msra.mxu0 %v2488
    %3791 = vmatprep.subr.bf16.mxu0 %v2485
    %3792 = vmatpush2.bf16.msra.mxu0 %v2484
    %3793 = vmatprep.subr.bf16.mxu0 %v2481
    %3794 = vmatpush2.bf16.msra.mxu0 %v2480
    %3795 = vmatprep.subr.bf16.mxu0 %v2477
    %3796 = vmatpush2.bf16.msra.mxu0 %v2476
    %3797 = vmatprep.subr.bf16.mxu0 %v2473
    %3798 = vmatpush2.bf16.msra.mxu0 %v2472
    %3799 = vmatprep.mubr.bf16.mxu0 %v291
    %3800 = vmatmul.mubr.bf16.gmra.mxu0 %v290
    %v3801 = vpop.f32.mrf.mxu0
    %v3802 = vadd.f32 %v3761, %v3801
    %v3803 = vpop.f32.mrf.mxu0
    %v3804 = vadd.f32 %v3763, %v3803
    %v3805 = vpop.f32.mrf.mxu0
    %v3806 = vpop.f32.mrf.mxu0
    %3807 = vdwg.mxu0
    %3808 = vmatprep.subr.bf16.mxu0 %v2533
    %3809 = vmatpush1.bf16.msra.mxu0 %v2532
    %3810 = vmatprep.subr.bf16.mxu0 %v2529
    %3811 = vmatpush1.bf16.msra.mxu0 %v2528
    %3812 = vmatprep.subr.bf16.mxu0 %v2525
    %3813 = vmatpush1.bf16.msra.mxu0 %v2524
    %3814 = vmatprep.subr.bf16.mxu0 %v2521
    %3815 = vmatpush1.bf16.msra.mxu0 %v2520
    %3816 = vmatprep.subr.bf16.mxu0 %v2517
    %3817 = vmatpush1.bf16.msra.mxu0 %v2516
    %3818 = vmatprep.subr.bf16.mxu0 %v2513
    %3819 = vmatpush1.bf16.msra.mxu0 %v2512
    %3820 = vmatprep.subr.bf16.mxu0 %v2509
    %3821 = vmatpush1.bf16.msra.mxu0 %v2508
    %3822 = vmatprep.subr.bf16.mxu0 %v2505
    %3823 = vmatpush1.bf16.msra.mxu0 %v2504
    %3824 = vmatprep.subr.bf16.mxu0 %v2565
    %3825 = vmatpush2.bf16.msra.mxu0 %v2564
    %3826 = vmatprep.subr.bf16.mxu0 %v2561
    %3827 = vmatpush2.bf16.msra.mxu0 %v2560
    %3828 = vmatprep.subr.bf16.mxu0 %v2557
    %3829 = vmatpush2.bf16.msra.mxu0 %v2556
    %3830 = vmatprep.subr.bf16.mxu0 %v2553
    %3831 = vmatpush2.bf16.msra.mxu0 %v2552
    %3832 = vmatprep.subr.bf16.mxu0 %v2549
    %3833 = vmatpush2.bf16.msra.mxu0 %v2548
    %3834 = vmatprep.subr.bf16.mxu0 %v2545
    %3835 = vmatpush2.bf16.msra.mxu0 %v2544
    %3836 = vmatprep.subr.bf16.mxu0 %v2541
    %3837 = vmatpush2.bf16.msra.mxu0 %v2540
    %3838 = vmatprep.subr.bf16.mxu0 %v2537
    %3839 = vmatpush2.bf16.msra.mxu0 %v2536
    %3840 = vmatprep.mubr.bf16.mxu0 %v293
    %3841 = vmatmul.mubr.bf16.gmra.mxu0 %v292
    %v3842 = vpop.f32.mrf.mxu0
    %v3843 = vadd.f32 %v3802, %v3842
    %v3844 = vpop.f32.mrf.mxu0
    %v3845 = vadd.f32 %v3804, %v3844
    %v3846 = vpop.f32.mrf.mxu0
    %v3847 = vpop.f32.mrf.mxu0
    %3848 = vdwg.mxu0
    %3849 = vmatprep.subr.bf16.mxu0 %v2597
    %3850 = vmatpush1.bf16.msra.mxu0 %v2596
    %3851 = vmatprep.subr.bf16.mxu0 %v2593
    %3852 = vmatpush1.bf16.msra.mxu0 %v2592
    %3853 = vmatprep.subr.bf16.mxu0 %v2589
    %3854 = vmatpush1.bf16.msra.mxu0 %v2588
    %3855 = vmatprep.subr.bf16.mxu0 %v2585
    %3856 = vmatpush1.bf16.msra.mxu0 %v2584
    %3857 = vmatprep.subr.bf16.mxu0 %v2581
    %3858 = vmatpush1.bf16.msra.mxu0 %v2580
    %3859 = vmatprep.subr.bf16.mxu0 %v2577
    %3860 = vmatpush1.bf16.msra.mxu0 %v2576
    %3861 = vmatprep.subr.bf16.mxu0 %v2573
    %3862 = vmatpush1.bf16.msra.mxu0 %v2572
    %3863 = vmatprep.subr.bf16.mxu0 %v2569
    %3864 = vmatpush1.bf16.msra.mxu0 %v2568
    %3865 = vmatprep.subr.bf16.mxu0 %v2629
    %3866 = vmatpush2.bf16.msra.mxu0 %v2628
    %3867 = vmatprep.subr.bf16.mxu0 %v2625
    %3868 = vmatpush2.bf16.msra.mxu0 %v2624
    %3869 = vmatprep.subr.bf16.mxu0 %v2621
    %3870 = vmatpush2.bf16.msra.mxu0 %v2620
    %3871 = vmatprep.subr.bf16.mxu0 %v2617
    %3872 = vmatpush2.bf16.msra.mxu0 %v2616
    %3873 = vmatprep.subr.bf16.mxu0 %v2613
    %3874 = vmatpush2.bf16.msra.mxu0 %v2612
    %3875 = vmatprep.subr.bf16.mxu0 %v2609
    %3876 = vmatpush2.bf16.msra.mxu0 %v2608
    %3877 = vmatprep.subr.bf16.mxu0 %v2605
    %3878 = vmatpush2.bf16.msra.mxu0 %v2604
    %3879 = vmatprep.subr.bf16.mxu0 %v2601
    %3880 = vmatpush2.bf16.msra.mxu0 %v2600
    %3881 = vmatprep.mubr.bf16.mxu0 %v295
    %3882 = vmatmul.mubr.bf16.gmra.mxu0 %v294
    %v3883 = vpop.f32.mrf.mxu0
    %v3884 = vadd.f32 %v3843, %v3883
    %v3885 = vpop.f32.mrf.mxu0
    %v3886 = vadd.f32 %v3845, %v3885
    %v3887 = vpop.f32.mrf.mxu0
    %v3888 = vpop.f32.mrf.mxu0
    %3889 = vdwg.mxu0
    %3890 = vmatprep.subr.bf16.mxu0 %v2661
    %3891 = vmatpush1.bf16.msra.mxu0 %v2660
    %3892 = vmatprep.subr.bf16.mxu0 %v2657
    %3893 = vmatpush1.bf16.msra.mxu0 %v2656
    %3894 = vmatprep.subr.bf16.mxu0 %v2653
    %3895 = vmatpush1.bf16.msra.mxu0 %v2652
    %3896 = vmatprep.subr.bf16.mxu0 %v2649
    %3897 = vmatpush1.bf16.msra.mxu0 %v2648
    %3898 = vmatprep.subr.bf16.mxu0 %v2645
    %3899 = vmatpush1.bf16.msra.mxu0 %v2644
    %3900 = vmatprep.subr.bf16.mxu0 %v2641
    %3901 = vmatpush1.bf16.msra.mxu0 %v2640
    %3902 = vmatprep.subr.bf16.mxu0 %v2637
    %3903 = vmatpush1.bf16.msra.mxu0 %v2636
    %3904 = vmatprep.subr.bf16.mxu0 %v2633
    %3905 = vmatpush1.bf16.msra.mxu0 %v2632
    %3906 = vmatprep.subr.bf16.mxu0 %v2693
    %3907 = vmatpush2.bf16.msra.mxu0 %v2692
    %3908 = vmatprep.subr.bf16.mxu0 %v2689
    %3909 = vmatpush2.bf16.msra.mxu0 %v2688
    %3910 = vmatprep.subr.bf16.mxu0 %v2685
    %3911 = vmatpush2.bf16.msra.mxu0 %v2684
    %3912 = vmatprep.subr.bf16.mxu0 %v2681
    %3913 = vmatpush2.bf16.msra.mxu0 %v2680
    %3914 = vmatprep.subr.bf16.mxu0 %v2677
    %3915 = vmatpush2.bf16.msra.mxu0 %v2676
    %3916 = vmatprep.subr.bf16.mxu0 %v2673
    %3917 = vmatpush2.bf16.msra.mxu0 %v2672
    %3918 = vmatprep.subr.bf16.mxu0 %v2669
    %3919 = vmatpush2.bf16.msra.mxu0 %v2668
    %3920 = vmatprep.subr.bf16.mxu0 %v2665
    %3921 = vmatpush2.bf16.msra.mxu0 %v2664
    %3922 = vmatprep.mubr.bf16.mxu0 %v297
    %3923 = vmatmul.mubr.bf16.gmra.mxu0 %v296
    %v3924 = vpop.f32.mrf.mxu0
    %v3925 = vadd.f32 %v3884, %v3924
    %v3926 = vpop.f32.mrf.mxu0
    %v3927 = vadd.f32 %v3886, %v3926
    %v3928 = vpop.f32.mrf.mxu0
    %v3929 = vpop.f32.mrf.mxu0
    %3930 = vdwg.mxu0
    %3931 = vmatprep.subr.bf16.mxu0 %v2725
    %3932 = vmatpush1.bf16.msra.mxu0 %v2724
    %3933 = vmatprep.subr.bf16.mxu0 %v2721
    %3934 = vmatpush1.bf16.msra.mxu0 %v2720
    %3935 = vmatprep.subr.bf16.mxu0 %v2717
    %3936 = vmatpush1.bf16.msra.mxu0 %v2716
    %3937 = vmatprep.subr.bf16.mxu0 %v2713
    %3938 = vmatpush1.bf16.msra.mxu0 %v2712
    %3939 = vmatprep.subr.bf16.mxu0 %v2709
    %3940 = vmatpush1.bf16.msra.mxu0 %v2708
    %3941 = vmatprep.subr.bf16.mxu0 %v2705
    %3942 = vmatpush1.bf16.msra.mxu0 %v2704
    %3943 = vmatprep.subr.bf16.mxu0 %v2701
    %3944 = vmatpush1.bf16.msra.mxu0 %v2700
    %3945 = vmatprep.subr.bf16.mxu0 %v2697
    %3946 = vmatpush1.bf16.msra.mxu0 %v2696
    %3947 = vmatprep.subr.bf16.mxu0 %v2757
    %3948 = vmatpush2.bf16.msra.mxu0 %v2756
    %3949 = vmatprep.subr.bf16.mxu0 %v2753
    %3950 = vmatpush2.bf16.msra.mxu0 %v2752
    %3951 = vmatprep.subr.bf16.mxu0 %v2749
    %3952 = vmatpush2.bf16.msra.mxu0 %v2748
    %3953 = vmatprep.subr.bf16.mxu0 %v2745
    %3954 = vmatpush2.bf16.msra.mxu0 %v2744
    %3955 = vmatprep.subr.bf16.mxu0 %v2741
    %3956 = vmatpush2.bf16.msra.mxu0 %v2740
    %3957 = vmatprep.subr.bf16.mxu0 %v2737
    %3958 = vmatpush2.bf16.msra.mxu0 %v2736
    %3959 = vmatprep.subr.bf16.mxu0 %v2733
    %3960 = vmatpush2.bf16.msra.mxu0 %v2732
    %3961 = vmatprep.subr.bf16.mxu0 %v2729
    %3962 = vmatpush2.bf16.msra.mxu0 %v2728
    %3963 = vmatprep.mubr.bf16.mxu0 %v299
    %3964 = vmatmul.mubr.bf16.gmra.mxu0 %v298
    %v3965 = vpop.f32.mrf.mxu0
    %v3966 = vadd.f32 %v3925, %v3965
    %v3967 = vpop.f32.mrf.mxu0
    %v3968 = vadd.f32 %v3927, %v3967
    %v3969 = vpop.f32.mrf.mxu0
    %v3970 = vpop.f32.mrf.mxu0
    %3971 = vdwg.mxu0
    %3972 = vmatprep.subr.bf16.mxu0 %v2789
    %3973 = vmatpush1.bf16.msra.mxu0 %v2788
    %3974 = vmatprep.subr.bf16.mxu0 %v2785
    %3975 = vmatpush1.bf16.msra.mxu0 %v2784
    %3976 = vmatprep.subr.bf16.mxu0 %v2781
    %3977 = vmatpush1.bf16.msra.mxu0 %v2780
    %3978 = vmatprep.subr.bf16.mxu0 %v2777
    %3979 = vmatpush1.bf16.msra.mxu0 %v2776
    %3980 = vmatprep.subr.bf16.mxu0 %v2773
    %3981 = vmatpush1.bf16.msra.mxu0 %v2772
    %3982 = vmatprep.subr.bf16.mxu0 %v2769
    %3983 = vmatpush1.bf16.msra.mxu0 %v2768
    %3984 = vmatprep.subr.bf16.mxu0 %v2765
    %3985 = vmatpush1.bf16.msra.mxu0 %v2764
    %3986 = vmatprep.subr.bf16.mxu0 %v2761
    %3987 = vmatpush1.bf16.msra.mxu0 %v2760
    %3988 = vmatprep.subr.bf16.mxu0 %v2821
    %3989 = vmatpush2.bf16.msra.mxu0 %v2820
    %3990 = vmatprep.subr.bf16.mxu0 %v2817
    %3991 = vmatpush2.bf16.msra.mxu0 %v2816
    %3992 = vmatprep.subr.bf16.mxu0 %v2813
    %3993 = vmatpush2.bf16.msra.mxu0 %v2812
    %3994 = vmatprep.subr.bf16.mxu0 %v2809
    %3995 = vmatpush2.bf16.msra.mxu0 %v2808
    %3996 = vmatprep.subr.bf16.mxu0 %v2805
    %3997 = vmatpush2.bf16.msra.mxu0 %v2804
    %3998 = vmatprep.subr.bf16.mxu0 %v2801
    %3999 = vmatpush2.bf16.msra.mxu0 %v2800
    %4000 = vmatprep.subr.bf16.mxu0 %v2797
    %4001 = vmatpush2.bf16.msra.mxu0 %v2796
    %4002 = vmatprep.subr.bf16.mxu0 %v2793
    %4003 = vmatpush2.bf16.msra.mxu0 %v2792
    %4004 = vmatprep.mubr.bf16.mxu0 %v301
    %4005 = vmatmul.mubr.bf16.gmra.mxu0 %v300
    %v4006 = vpop.f32.mrf.mxu0
    %v4007 = vadd.f32 %v3966, %v4006
    %v4008 = vpop.f32.mrf.mxu0
    %v4009 = vadd.f32 %v3968, %v4008
    %v4010 = vpop.f32.mrf.mxu0
    %v4011 = vpop.f32.mrf.mxu0
    %4012 = vdwg.mxu0
    %4013 = vmatprep.subr.bf16.mxu0 %v2853
    %4014 = vmatpush1.bf16.msra.mxu0 %v2852
    %4015 = vmatprep.subr.bf16.mxu0 %v2849
    %4016 = vmatpush1.bf16.msra.mxu0 %v2848
    %4017 = vmatprep.subr.bf16.mxu0 %v2845
    %4018 = vmatpush1.bf16.msra.mxu0 %v2844
    %4019 = vmatprep.subr.bf16.mxu0 %v2841
    %4020 = vmatpush1.bf16.msra.mxu0 %v2840
    %4021 = vmatprep.subr.bf16.mxu0 %v2837
    %4022 = vmatpush1.bf16.msra.mxu0 %v2836
    %4023 = vmatprep.subr.bf16.mxu0 %v2833
    %4024 = vmatpush1.bf16.msra.mxu0 %v2832
    %4025 = vmatprep.subr.bf16.mxu0 %v2829
    %4026 = vmatpush1.bf16.msra.mxu0 %v2828
    %4027 = vmatprep.subr.bf16.mxu0 %v2825
    %4028 = vmatpush1.bf16.msra.mxu0 %v2824
    %4029 = vmatprep.subr.bf16.mxu0 %v2885
    %4030 = vmatpush2.bf16.msra.mxu0 %v2884
    %4031 = vmatprep.subr.bf16.mxu0 %v2881
    %4032 = vmatpush2.bf16.msra.mxu0 %v2880
    %4033 = vmatprep.subr.bf16.mxu0 %v2877
    %4034 = vmatpush2.bf16.msra.mxu0 %v2876
    %4035 = vmatprep.subr.bf16.mxu0 %v2873
    %4036 = vmatpush2.bf16.msra.mxu0 %v2872
    %4037 = vmatprep.subr.bf16.mxu0 %v2869
    %4038 = vmatpush2.bf16.msra.mxu0 %v2868
    %4039 = vmatprep.subr.bf16.mxu0 %v2865
    %4040 = vmatpush2.bf16.msra.mxu0 %v2864
    %4041 = vmatprep.subr.bf16.mxu0 %v2861
    %4042 = vmatpush2.bf16.msra.mxu0 %v2860
    %4043 = vmatprep.subr.bf16.mxu0 %v2857
    %4044 = vmatpush2.bf16.msra.mxu0 %v2856
    %4045 = vmatprep.mubr.bf16.mxu0 %v303
    %4046 = vmatmul.mubr.bf16.gmra.mxu0 %v302
    %v4047 = vpop.f32.mrf.mxu0
    %v4048 = vadd.f32 %v4007, %v4047
    %v4049 = vpop.f32.mrf.mxu0
    %v4050 = vadd.f32 %v4009, %v4049
    %v4051 = vpop.f32.mrf.mxu0
    %v4052 = vpop.f32.mrf.mxu0
    %4053 = vdwg.mxu0
    %4054 = vst [vmem:[#allocation11] sm:$0xff] %v3720
    %4055 = vst [vmem:[#allocation11 + $0x8] sm:$0xff] %v3722
    %4056 = vst [vmem:[#allocation11 + $0x10] sm:$0xff] %v4048
    %4057 = vst [vmem:[#allocation11 + $0x18] sm:$0xff] %v4050
    // Predicated region
    $region42: #{tpu_custom_call.1} parent=1 // pred_check
      _
    $region43: #{tpu_custom_call.1} parent=1 // pred_check_branch
      %4059 = sbr.rel (0) target = $region45
    $region44: #{tpu_custom_call.1} parent=1 // pred_region
      %s4061 = ssub.s32 512, 512
      %4062 = vsyncadd [#allocation4], %s4061
      %s4064 = sshll.u32 [#allocation11], 4
      %s4065 = int_to_ptr.vmem [resolvable:$true] %s4064
      %4067 = dma.vmem_to_hbm [thread:$0]  %s4065, 512, %s5, [#allocation4]
    $region45: #{tpu_custom_call.1} parent=1 // pred_fallthru
      _
    // Predicated region
    $region46: #{tpu_custom_call.1} parent=1 // pred_check
      _
    $region47: #{tpu_custom_call.1} parent=1 // pred_check_branch
      %4069 = sbr.rel (0) target = $region49
    $region48: #{tpu_custom_call.1} parent=1 // pred_region
      %4070 = dma.done [#allocation4], 512
    $region49: #{tpu_custom_call.1} parent=1 // pred_fallthru
      _
    %4071 = vsyncpa [#allocation3], 1
    %4072 = vsyncpa [#allocation6], 1
    %4073 = vsyncpa [#allocation9], 1
    %4074 = vsyncpa [#allocation4], 1

</llo_original>
